<compile_context>
chip_gen: v6e
topology: v6e:2x2x1
jax: 0.10.0
libtpu: 0.0.40
codegen_flags: <defaults>
</compile_context>

<pallas_src>
import functools

import jax
import jax.numpy as jnp
from jax.experimental import pallas as pl
from jax.experimental.pallas import tpu as pltpu


def _mse_sum_kernel(s_ref, t_ref, o_ref, acc_ref, *,
                    tile_rows, rows_total, steps_per_part, n_blocks, needs_mask):
    p = pl.program_id(0)   # partition (2-TC sharding axis on multi-core chips)
    i = pl.program_id(1)   # streaming / reduction step within the partition

    @pl.when(i == 0)
    def _init():
        acc_ref[...] = jnp.zeros_like(acc_ref)

    d = s_ref[...].astype(jnp.float32) - t_ref[...].astype(jnp.float32)
    sq = d * d
    groups = tile_rows // 8   # sublane-major split -> pure inter-vreg VPU adds

    if needs_mask:
        blk = p * steps_per_part + i
        last = n_blocks - 1

        @pl.when(blk != last)
        def _interior():
            acc_ref[...] += sq.reshape(groups, 8, -1).sum(axis=0)

        @pl.when(blk == last)
        def _edge():
            # Compile-time-constant mask covering only the rows of the single
            # partial tile that fall inside the logical array.  Keep it a
            # select (never a 0/1 multiply) so OOB garbage (possibly NaN/Inf)
            # after squaring is discarded.
            row_ids = last * tile_rows + jax.lax.broadcasted_iota(
                jnp.int32, (tile_rows, 1), 0)
            masked = jnp.where(row_ids < rows_total, sq, 0.0)
            acc_ref[...] += masked.reshape(groups, 8, -1).sum(axis=0)
    else:
        acc_ref[...] += sq.reshape(groups, 8, -1).sum(axis=0)

    @pl.when(i == steps_per_part - 1)
    def _finalize():
        total = jnp.sum(acc_ref[...])    # small (8, c) reduce, once per partition
        o_ref[...] = jnp.broadcast_to(total, o_ref.shape).astype(jnp.float32)


_FAST_PATH_ELEMENTS = 128 * 1024   # below this, a fused XLA reduction wins


def _chip_config():
    """Per-generation streaming-block / VMEM policy (conservative on unknowns)."""
    kind = ""
    try:
        dev = jax.devices()[0]
        if dev.platform == "tpu":
            kind = str(dev.device_kind).lower()
    except Exception:
        pass
    if "v7" in kind or "tpu7" in kind:
        # 64 MiB VMEM per TC, 3.2 TB/s HBM, 2 TensorCores per chip.
        return {"block_bytes": 4 << 20, "vmem_limit": 44 << 20, "two_tc": True}
    if "v6" in kind or "tpu6" in kind:
        # 128 MiB VMEM, ~1.4 TB/s HBM, 1 TensorCore.
        return {"block_bytes": 6 << 20, "vmem_limit": 64 << 20, "two_tc": False}
    # v5e / v5p / v4 / unknown: conservative defaults.
    return {"block_bytes": 2 << 20, "vmem_limit": 32 << 20, "two_tc": False}


def attention_distillation_loss(student, teacher):
    """Sum of squared differences between two identically-shaped tensors."""
    assert student.shape == teacher.shape, "shape mismatch"
    if student.dtype != teacher.dtype:
        common = jnp.promote_types(student.dtype, teacher.dtype)
        student = student.astype(common)
        teacher = teacher.astype(common)
    out_dtype = student.dtype
    n = student.size
    if n == 0:
        return jnp.zeros((), out_dtype)

    # ---- tiny inputs: launch overhead dominates, use a fused XLA reduction ----
    if n < _FAST_PATH_ELEMENTS:
        d = student.astype(jnp.float32) - teacher.astype(jnp.float32)
        return jnp.sum(d * d).astype(out_dtype)

    cfg = _chip_config()
    block_bytes = cfg["block_bytes"]

    # ---- lane-dense reshape (free for contiguous row-major arrays) ----------
    # Prefer the largest c that divides n AND keeps r a multiple of 8.
    c = None
    fallback_c = None
    for cand in (2048, 1024, 512, 256, 128):
        if n % cand != 0:
            continue
        if (n // cand) % 8 == 0:
            c = cand
            break
        if fallback_c is None:
            fallback_c = cand
    if c is None:
        c = fallback_c

    if c is not None:
        r = n // c
        s2 = student.reshape(r, c)
        t2 = teacher.reshape(r, c)
    else:
        # No lane-dense factorization exists: one-time flat zero-pad of both
        # inputs to a multiple of (8 * 512).  Padded elements are identical in
        # student and teacher, so they diff to 0 and need no masking.
        c = 512
        pad = (-n) % (8 * c)
        s2 = jnp.pad(student.reshape(-1), (0, pad)).reshape(-1, c)
        t2 = jnp.pad(teacher.reshape(-1), (0, pad)).reshape(-1, c)
        r = s2.shape[0]

    # ---- tile sizing: biggest row-tile within the per-block byte budget ------
    itemsize = jnp.dtype(s2.dtype).itemsize
    budget_rows = max(8, block_bytes // (c * itemsize))
    if budget_rows >= r:
        # Whole array in one block when sublane-aligned; otherwise multiple-of-8
        # tiles plus a single masked edge tile.
        tr = r if r % 8 == 0 else max(8, (r // 8) * 8)
    else:
        tr = (budget_rows // 8) * 8
        if r % tr != 0 and r % 8 == 0:
            # Try a multiple-of-8 divisor of r close to the budget so no edge
            # mask is ever needed (accept only if >= half the budget tile).
            cand_tr = tr
            while cand_tr >= 8:
                if r % cand_tr == 0:
                    if 2 * cand_tr >= tr:
                        tr = cand_tr
                    break
                cand_tr -= 8
    n_blocks = -(-r // tr)   # cdiv

    # ---- 2-way partition only on 2-TC chips, and only with an even split -----
    two_tc = cfg["two_tc"]
    if two_tc and n_blocks >= 3 and n_blocks % 2 == 1:
        # Nudge the tile size so the block count becomes even: no clamped
        # duplicate-block DMA, no forced per-step mask.
        tr_alt = max(8, ((-(-r // (n_blocks + 1)) + 7) // 8) * 8)
        nb_alt = -(-r // tr_alt)
        if nb_alt % 2 == 0:
            tr, n_blocks = tr_alt, nb_alt
    num_parts = 2 if (two_tc and n_blocks >= 2 and n_blocks % 2 == 0) else 1
    # TODO(synk): on v7x, verify the leading "parallel" axis actually shards
    # across both TensorCores; if not, switch it to pltpu.CORE_PARALLEL.
    spp = n_blocks // num_parts
    needs_mask = (r % tr) != 0

    def in_map(p, i):
        return (p * spp + i, 0)

    kernel = functools.partial(
        _mse_sum_kernel,
        tile_rows=tr, rows_total=r, steps_per_part=spp,
        n_blocks=n_blocks, needs_mask=needs_mask)

    out = pl.pallas_call(
        kernel,
        out_shape=jax.ShapeDtypeStruct((num_parts, 8, 128), jnp.float32),
        grid_spec=pltpu.PrefetchScalarGridSpec(
            num_scalar_prefetch=0,
            grid=(num_parts, spp),
            in_specs=[
                pl.BlockSpec((tr, c), in_map),
                pl.BlockSpec((tr, c), in_map),
            ],
            out_specs=pl.BlockSpec((1, 8, 128), lambda p, i: (p, 0, 0)),
            scratch_shapes=[pltpu.VMEM((8, c), jnp.float32)],
        ),
        compiler_params=pltpu.CompilerParams(
            dimension_semantics=("parallel", "arbitrary"),
            vmem_limit_bytes=cfg["vmem_limit"],
        ),
        cost_estimate=pl.CostEstimate(
            flops=3 * n,
            transcendentals=0,
            bytes_accessed=2 * r * c * itemsize + num_parts * 8 * 128 * 4,
        ),
    )(s2, t2)

    # Accumulation in f32; single cast at the end (PyTorch MSELoss(reduction=
    # 'sum') returns the input dtype).
    return jnp.sum(out[:, 0, 0]).astype(out_dtype)


if __name__ == "__main__":
    key = jax.random.PRNGKey(0)
    k1, k2, k3, k4, k5, k6, k7, k8 = jax.random.split(key, 8)

    # 1) Small attention-shaped inputs: [batch=2, heads=4, S_q=16, S_k=16]
    #    (fast path — tiny maps never pay the pallas_call launch overhead).
    s = jax.random.uniform(k1, (2, 4, 16, 16), dtype=jnp.float32)
    t = jax.random.uniform(k2, (2, 4, 16, 16), dtype=jnp.float32)
    loss = jax.block_until_ready(attention_distillation_loss(s, t))
    ref = jnp.sum((s - t) ** 2)
    assert jnp.allclose(loss, ref, rtol=1e-5, atol=1e-5), (loss, ref)

    # 2) Multi-tile streaming; exercises the masked partial edge tile on
    #    small-block configs.
    s = jax.random.uniform(k3, (2, 5, 250, 512), dtype=jnp.float32)
    t = jax.random.uniform(k4, (2, 5, 250, 512), dtype=jnp.float32)
    loss = jax.block_until_ready(attention_distillation_loss(s, t))
    ref = jnp.sum((s - t) ** 2)
    assert jnp.allclose(loss, ref, rtol=1e-4, atol=1e-2), (loss, ref)

    # 3) Evenly-divisible multi-block path (no mask anywhere).
    s = jax.random.uniform(k5, (4, 8, 128, 256), dtype=jnp.float32)
    t = jax.random.uniform(k6, (4, 8, 128, 256), dtype=jnp.float32)
    loss = jax.block_until_ready(attention_distillation_loss(s, t))
    ref = jnp.sum((s - t) ** 2)
    assert jnp.allclose(loss, ref, rtol=1e-4, atol=1e-2), (loss, ref)

    # 4) bf16 inputs (halved HBM traffic; f32 accumulation inside the kernel).
    s = jax.random.uniform(k7, (2, 8, 128, 160), dtype=jnp.float32).astype(jnp.bfloat16)
    t = jax.random.uniform(k8, (2, 8, 128, 160), dtype=jnp.float32).astype(jnp.bfloat16)
    loss = jax.block_until_ready(attention_distillation_loss(s, t))
    ref = jnp.sum((s.astype(jnp.float32) - t.astype(jnp.float32)) ** 2)
    assert jnp.allclose(loss.astype(jnp.float32), ref, rtol=2e-2, atol=1.0), (loss, ref)

    print("KERNEL_OK")
</pallas_src>

<mosaic_0001>
module attributes {stable_mosaic.version = 11 : i64} {
  func.func @_mse_sum_kernel(%arg0: i32, %arg1: i32, %arg2: memref<2048x256xf32, #tpu.memory_space<vmem>>, %arg3: memref<2048x256xf32, #tpu.memory_space<vmem>>, %arg4: memref<1x8x128xf32, #tpu.memory_space<vmem>>, %arg5: memref<8x256xf32, #tpu.memory_space<vmem>>) attributes {dimension_semantics = [#tpu.dimension_semantics<parallel>, #tpu.dimension_semantics<arbitrary>], iteration_bounds = array<i64: 1, 3>, scalar_prefetch = 0 : i64, scratch_operands = 1 : i64, tpu.core_type = #tpu.core_type<tc>, window_params = [{transform_indices = @transform_0, window_bounds = array<i64: 2048, 256>}, {transform_indices = @transform_1, window_bounds = array<i64: 2048, 256>}, {transform_indices = @transform_2, window_bounds = array<i64: 1, 8, 128>}]} {
    %c0_i32 = arith.constant 0 : i32
    %0 = arith.cmpi eq, %arg1, %c0_i32 : i32
    %1 = arith.extui %0 : i1 to i32
    %c0_i32_0 = arith.constant 0 : i32
    %2 = arith.cmpi ne, %1, %c0_i32_0 : i32
    scf.if %2 {
      %cst = arith.constant 0.000000e+00 : f32
      %18 = vector.broadcast %cst : f32 to vector<8x256xf32>
      %c0_9 = arith.constant 0 : index
      %c0_10 = arith.constant 0 : index
      %19 = vector.load %arg5[%c0_9, %c0_10] : memref<8x256xf32, #tpu.memory_space<vmem>>, vector<8x256xf32>
      tpu.vector_store %arg5[%c0_9, %c0_10], %18 {strides = array<i32>} : memref<8x256xf32, #tpu.memory_space<vmem>>, vector<8x256xf32>,
    } else {
    }
    %c0 = arith.constant 0 : index
    %c0_1 = arith.constant 0 : index
    %3 = vector.load %arg2[%c0, %c0_1] : memref<2048x256xf32, #tpu.memory_space<vmem>>, vector<2048x256xf32>
    %c0_2 = arith.constant 0 : index
    %c0_3 = arith.constant 0 : index
    %4 = vector.load %arg3[%c0_2, %c0_3] : memref<2048x256xf32, #tpu.memory_space<vmem>>, vector<2048x256xf32>
    %5 = arith.subf %3, %4 : vector<2048x256xf32>
    %6 = arith.mulf %5, %5 : vector<2048x256xf32>
    %c3_i32 = arith.constant 3 : i32
    %7 = arith.muli %arg0, %c3_i32 : i32
    %8 = arith.addi %7, %arg1 : i32
    %c2_i32 = arith.constant 2 : i32
    %9 = arith.cmpi ne, %8, %c2_i32 : i32
    %10 = arith.extui %9 : i1 to i32
    %c0_i32_4 = arith.constant 0 : i32
    %11 = arith.cmpi ne, %10, %c0_i32_4 : i32
    scf.if %11 {
      %c0_9 = arith.constant 0 : index
      %c0_10 = arith.constant 0 : index
      %18 = vector.load %arg5[%c0_9, %c0_10] : memref<8x256xf32, #tpu.memory_space<vmem>>, vector<8x256xf32>
      %19 = vector.shape_cast %6 : vector<2048x256xf32> to vector<256x8x256xf32>
      %cst = arith.constant dense<0.000000e+00> : vector<8x256xf32>
      %20 = vector.multi_reduction <add>, %19, %cst [0] : vector<256x8x256xf32> to vector<8x256xf32>
      %21 = arith.addf %18, %20 : vector<8x256xf32>
      %c0_11 = arith.constant 0 : index
      %c0_12 = arith.constant 0 : index
      %22 = vector.load %arg5[%c0_11, %c0_12] : memref<8x256xf32, #tpu.memory_space<vmem>>, vector<8x256xf32>
      tpu.vector_store %arg5[%c0_11, %c0_12], %21 {strides = array<i32>} : memref<8x256xf32, #tpu.memory_space<vmem>>, vector<8x256xf32>,
    } else {
    }
    %c2_i32_5 = arith.constant 2 : i32
    %12 = arith.cmpi eq, %8, %c2_i32_5 : i32
    %13 = arith.extui %12 : i1 to i32
    %c0_i32_6 = arith.constant 0 : i32
    %14 = arith.cmpi ne, %13, %c0_i32_6 : i32
    scf.if %14 {
      %18 = tpu.iota {dimensions = array<i32: 0>} : vector<2048x1xi32>
      %c4096_i32 = arith.constant 4096 : i32
      %19 = vector.broadcast %c4096_i32 : i32 to vector<2048x1xi32>
      %20 = arith.addi %19, %18 : vector<2048x1xi32>
      %c5000_i32 = arith.constant 5000 : i32
      %21 = vector.broadcast %c5000_i32 : i32 to vector<2048x1xi32>
      %22 = arith.cmpi slt, %20, %21 : vector<2048x1xi32>
      %cst = arith.constant 0.000000e+00 : f32
      %23 = vector.shape_cast %22 : vector<2048x1xi1> to vector<2048x1xi1>
      %24 = vector.broadcast %23 : vector<2048x1xi1> to vector<2048x256xi1>
      %25 = vector.broadcast %cst : f32 to vector<2048x256xf32>
      %26 = arith.select %24, %6, %25 : vector<2048x256xi1>, vector<2048x256xf32>
      %c0_9 = arith.constant 0 : index
      %c0_10 = arith.constant 0 : index
      %27 = vector.load %arg5[%c0_9, %c0_10] : memref<8x256xf32, #tpu.memory_space<vmem>>, vector<8x256xf32>
      %28 = vector.shape_cast %26 : vector<2048x256xf32> to vector<256x8x256xf32>
      %cst_11 = arith.constant dense<0.000000e+00> : vector<8x256xf32>
      %29 = vector.multi_reduction <add>, %28, %cst_11 [0] : vector<256x8x256xf32> to vector<8x256xf32>
      %30 = arith.addf %27, %29 : vector<8x256xf32>
      %c0_12 = arith.constant 0 : index
      %c0_13 = arith.constant 0 : index
      %31 = vector.load %arg5[%c0_12, %c0_13] : memref<8x256xf32, #tpu.memory_space<vmem>>, vector<8x256xf32>
      tpu.vector_store %arg5[%c0_12, %c0_13], %30 {strides = array<i32>} : memref<8x256xf32, #tpu.memory_space<vmem>>, vector<8x256xf32>,
    } else {
    }
    %c2_i32_7 = arith.constant 2 : i32
    %15 = arith.cmpi eq, %arg1, %c2_i32_7 : i32
    %16 = arith.extui %15 : i1 to i32
    %c0_i32_8 = arith.constant 0 : i32
    %17 = arith.cmpi ne, %16, %c0_i32_8 : i32
    scf.if %17 {
      %c0_9 = arith.constant 0 : index
      %c0_10 = arith.constant 0 : index
      %18 = vector.load %arg5[%c0_9, %c0_10] : memref<8x256xf32, #tpu.memory_space<vmem>>, vector<8x256xf32>
      %19 = vector.shape_cast %18 : vector<8x256xf32> to vector<1x8x256xf32>
      %cst = arith.constant dense<0.000000e+00> : vector<1xf32>
      %20 = vector.multi_reduction <add>, %19, %cst [1, 2] : vector<1x8x256xf32> to vector<1xf32>
      %21 = vector.shape_cast %20 : vector<1xf32> to vector<1x1x1xf32>
      %22 = vector.extract %21[0, 0, 0] : f32 from vector<1x1x1xf32>
      %23 = vector.broadcast %22 : f32 to vector<1x8x128xf32>
      %c0_11 = arith.constant 0 : index
      %c0_12 = arith.constant 0 : index
      %c0_13 = arith.constant 0 : index
      %24 = vector.load %arg4[%c0_11, %c0_12, %c0_13] : memref<1x8x128xf32, #tpu.memory_space<vmem>>, vector<1x8x128xf32>
      tpu.vector_store %arg4[%c0_11, %c0_12, %c0_13], %23 {strides = array<i32>} : memref<1x8x128xf32, #tpu.memory_space<vmem>>, vector<1x8x128xf32>,
    } else {
    }
    return
  }
  func.func @transform_0(%arg0: i32, %arg1: i32) -> (i32, i32) {
    %c3_i32 = arith.constant 3 : i32
    %0 = arith.muli %arg0, %c3_i32 : i32
    %1 = arith.addi %0, %arg1 : i32
    %c0_i32 = arith.constant 0 : i32
    %c0_i32_0 = arith.constant 0 : i32
    return %1, %c0_i32 : i32, i32
  }
  func.func @transform_1(%arg0: i32, %arg1: i32) -> (i32, i32) {
    %c3_i32 = arith.constant 3 : i32
    %0 = arith.muli %arg0, %c3_i32 : i32
    %1 = arith.addi %0, %arg1 : i32
    %c0_i32 = arith.constant 0 : i32
    %c0_i32_0 = arith.constant 0 : i32
    return %1, %c0_i32 : i32, i32
  }
  func.func @transform_2(%arg0: i32, %arg1: i32) -> (i32, i32, i32) {
    %c0_i32 = arith.constant 0 : i32
    %c0_i32_0 = arith.constant 0 : i32
    %c0_i32_1 = arith.constant 0 : i32
    return %arg0, %c0_i32, %c0_i32_0 : i32, i32, i32
  }
}

</mosaic_0001>

<llo_original>
// kernel: tpu_custom_call.1
$region0: #{tpu_custom_call.1}
  #allocation0 [shape = 'u32[]', space=smem, size = 0x4, offset = 0x4, fixed_abs, tag = 'smem constant byte address 0x4 - core index']
  #allocation1 [shape = 'u32[144,128]{1,0:T(1,128)}', space=vmem, size = 0x12000, scoped, tag = 'internal scratch']
  #allocation2 [shape = 'f32[8,256]{1,0:T(8,128)}', space=vmem, size = 0x2000, scoped, tag = 'scratch operand']
  %s0 = inlined_call_operand.hbm [shape: f32[5000,256], index: 0, kind: input, shape index: {}]
  %s1 = inlined_call_operand.hbm [shape: f32[5000,256], index: 1, kind: input, shape index: {}]
  %s2 = inlined_call_operand.hbm [shape: f32[1,8,128], index: 2, kind: output, shape index: {}]
  %s3 = sld [smem:[#allocation0]]
  $region65: #{tpu_custom_call.1} parent=0
    _
  %s5 = ssub.s32 1, %s3
  %s6 = scalar_select 0, %s5, %s3
  $region1: #{tpu_custom_call.1} parent=0
    #allocation3 [shape = 'u8[4194304]{0}', space=vmem, size = 0x400000, scoped, tag = 'input window, operand 0']
    #allocation4 [shape = 's32[2]{0}', space=sflag, size = 0x8, scoped, tag = 'scoped memory for tpu_custom_call.1']
    #allocation5 [shape = 's32[2]{0}', space=sflag, size = 0x8, scoped, tag = 'scoped memory for tpu_custom_call.1']
    #allocation6 [shape = 'u8[4194304]{0}', space=vmem, size = 0x400000, scoped, tag = 'input window, operand 1']
    #allocation7 [shape = 's32[2]{0}', space=sflag, size = 0x8, scoped, tag = 'scoped memory for tpu_custom_call.1']
    #allocation8 [shape = 'u8[4096]{0}', space=vmem, size = 0x1000, scoped, tag = 'output window, operand 0, single buffered']
    %7 = vsyncpa [#allocation4], 0
    %s8 = scalar_lea.sflag [#allocation4], 1
    %9 = vsyncpa %s8, 0
    %10 = vsyncpa [#allocation7], 0
    %s11 = scalar_lea.sflag [#allocation7], 1
    %12 = vsyncpa %s11, 0
    %13 = vsyncpa [#allocation5], 0
    loop: start=0, step=1, limit=5
    $region2: #{tpu_custom_call.1} parent=1 // loop_pre_header
      _
    $region3: #{tpu_custom_call.1} parent=1 // loop_header
      %s15 = sphi 0, %s19
      %p16 = scmp.ge.s32.totalorder %s15, 5
      %s22 = sphi 0, %s34
      %s23 = sphi 0, %s30
      %s24 = sphi 0, %s22
      %s25 = sphi 0, %s23
      %s26 = sphi 0, %s24
      %s27 = sphi 0, %s25
      %s41 = sphi 0, %s43
      %s44 = sphi 0, %s41
      %s45 = sphi 0, %s44
      %s61 = sphi 0, %s45
      %s71 = sphi 0, %s73
      %s74 = sphi 0, %s71
      %s75 = sphi 0, %s74
      %s91 = sphi 0, %s75
      %s97 = sphi 0, %s99
      %s100 = sphi 0, %s97
      %s101 = sphi 0, %s100
      %s117 = sphi 0, %s101
    $region4: #{tpu_custom_call.1} parent=1 // loop_header_branch
      %18 = sbr.rel (%p16) target = $region8
    $region5: #{tpu_custom_call.1} parent=1 // loop_body
      %s20 = ssub.s32 %s15, 1
      %s21 = ssub.s32 %s15, 2
      %s28 = sadd.s32 1, %s23
      %p29 = scmp.ge.s32.totalorder %s28, 3
      %s30 = scalar_select %p29, 0, %s28
      %s31 = sadd.s32 1, %s22
      %s32 = scalar_select %p29, %s31, %s22
      %p33 = scmp.ge.s32.totalorder %s32, 1
      %s34 = scalar_select %p33, 0, %s32
      %s35 = smul.u32 %s22, 3
      %s36 = sadd.s32 %s35, %s23
      %s37 = smul.u32 %s34, 3
      %s38 = sadd.s32 %s37, %s30
      %s39 = ssub.s32 %s36, %s38
      %p40 = scmp.eq.s32.totalorder %s39, 0
      %s42 = sadd.s32 %s41, 1
      %s43 = scalar_select %p40, %s41, %s42
      %p46 = pneg %p40
      %p47 = scmp.eq.s32.totalorder %s15, 2
      %p48 = por %p46, %p47
      %p49 = scmp.ne.s32.totalorder %s41, %s44
      %p50 = scmp.eq.s32.totalorder %s15, 0
      %p51 = por %p49, %p50
      %p52 = scmp.ne.s32.totalorder %s41, %s44
      %p53 = scmp.eq.s32.totalorder %s20, 2
      %p54 = por %p52, %p53
      %p55 = scmp.ne.s32.totalorder %s44, %s45
      %p56 = scmp.eq.s32.totalorder %s20, 0
      %p57 = por %p55, %p56
      %p58 = scmp.ne.s32.totalorder %s44, %s45
      %p59 = scmp.eq.s32.totalorder %s21, 2
      %p60 = por %p58, %p59
      %p62 = scmp.ne.s32.totalorder %s45, %s61
      %p63 = scmp.eq.s32.totalorder %s21, 0
      %p64 = por %p62, %p63
      %s65 = smul.u32 %s22, 3
      %s66 = sadd.s32 %s65, %s23
      %s67 = smul.u32 %s34, 3
      %s68 = sadd.s32 %s67, %s30
      %s69 = ssub.s32 %s66, %s68
      %p70 = scmp.eq.s32.totalorder %s69, 0
      %s72 = sadd.s32 %s71, 1
      %s73 = scalar_select %p70, %s71, %s72
      %p76 = pneg %p70
      %p77 = scmp.eq.s32.totalorder %s15, 2
      %p78 = por %p76, %p77
      %p79 = scmp.ne.s32.totalorder %s71, %s74
      %p80 = scmp.eq.s32.totalorder %s15, 0
      %p81 = por %p79, %p80
      %p82 = scmp.ne.s32.totalorder %s71, %s74
      %p83 = scmp.eq.s32.totalorder %s20, 2
      %p84 = por %p82, %p83
      %p85 = scmp.ne.s32.totalorder %s74, %s75
      %p86 = scmp.eq.s32.totalorder %s20, 0
      %p87 = por %p85, %p86
      %p88 = scmp.ne.s32.totalorder %s74, %s75
      %p89 = scmp.eq.s32.totalorder %s21, 2
      %p90 = por %p88, %p89
      %p92 = scmp.ne.s32.totalorder %s75, %s91
      %p93 = scmp.eq.s32.totalorder %s21, 0
      %p94 = por %p92, %p93
      %s95 = ssub.s32 %s22, %s34
      %p96 = scmp.eq.s32.totalorder %s95, 0
      %s98 = sadd.s32 %s97, 1
      %s99 = scalar_select %p96, %s97, %s98
      %p102 = pneg %p96
      %p103 = scmp.eq.s32.totalorder %s15, 2
      %p104 = por %p102, %p103
      %p105 = scmp.ne.s32.totalorder %s97, %s100
      %p106 = scmp.eq.s32.totalorder %s15, 0
      %p107 = por %p105, %p106
      %p108 = scmp.ne.s32.totalorder %s97, %s100
      %p109 = scmp.eq.s32.totalorder %s20, 2
      %p110 = por %p108, %p109
      %p111 = scmp.ne.s32.totalorder %s100, %s101
      %p112 = scmp.eq.s32.totalorder %s20, 0
      %p113 = por %p111, %p112
      %p114 = scmp.ne.s32.totalorder %s100, %s101
      %p115 = scmp.eq.s32.totalorder %s21, 2
      %p116 = por %p114, %p115
      %p118 = scmp.ne.s32.totalorder %s101, %s117
      %p119 = scmp.eq.s32.totalorder %s21, 0
      %p120 = por %p118, %p119
      %p121 = scmp.le.s32.totalorder 1, %s15
      %p122 = scmp.lt.s32.totalorder %s15, 4
      %p123 = pnand %p121, %p122
      %p124 = pneg %p123
      // Predicated region
      $region9: #{tpu_custom_call.1} parent=5 // pred_check
        _
      $region10: #{tpu_custom_call.1} parent=5 // pred_check_branch
        %126 = sbr.rel (%p123) target = $region12
      $region11: #{tpu_custom_call.1} parent=5 // pred_region
        %s127 = ssub.s32 %s15, 1
      $region12: #{tpu_custom_call.1} parent=5 // pred_fallthru
        _
      %p128 = scmp.lt.s32.totalorder %s15, 3
      // Predicated region
      $region13: #{tpu_custom_call.1} parent=5 // pred_check
        %p129 = pneg %p128
      $region14: #{tpu_custom_call.1} parent=5 // pred_check_branch
        %131 = sbr.rel (%p129) target = $region16
      $region15: #{tpu_custom_call.1} parent=5 // pred_region
        // Predicated region
        $region17: #{tpu_custom_call.1} parent=15 // pred_check
          %p132 = pneg %p51
        $region18: #{tpu_custom_call.1} parent=15 // pred_check_branch
          %134 = sbr.rel (%p132) target = $region20
        $region19: #{tpu_custom_call.1} parent=15 // pred_region
          %s135 = sand.u32 %s41, 1
          %s136 = scalar_lea.sflag [#allocation4], %s135
          %s137 = sand.u32 %s41, 1
          %s138 = smul.addr %s137, 4096
          %s139 = scalar_lea.vmem [#allocation3], %s138
          %s140 = smul.u32 %s22, 3
          %s141 = sadd.s32 %s140, %s23
          %s142 = smul.u32 256, %s141
          %s143 = ssub.s32 625, %s142
          %p144 = scmp.lt.s32.totalorder %s143, 256
          %s145 = scalar_select %p144, %s143, 256
          %s146 = smul.u32 128, %s145
          %s147 = smul.u32 %s146, 2
          %s149 = ssub.s32 65536, %s147
          %150 = vsyncadd %s136, %s149
          %p151 = scmp.ne.s32.totalorder 0, %s147
          %s152 = smul.addr %s142, 2
          %s153 = smul.addr %s152, 128
          %s154 = scalar_lea.hbm %s0, %s153
          %s155 = smul.u32 16, %s145
          %s156 = sshll.u32 %s139, 4
          %s157 = int_to_ptr.vmem [resolvable:$true] %s156
          %s158 = sshll.u32 %s155, 4
          %162 = dma.hbm_to_vmem [thread:$0]  (%p151), %s154, %s158, %s157, %s136, 256, 256, 16
        $region20: #{tpu_custom_call.1} parent=15 // pred_fallthru
          _
        // Predicated region
        $region21: #{tpu_custom_call.1} parent=15 // pred_check
          %p163 = pneg %p81
        $region22: #{tpu_custom_call.1} parent=15 // pred_check_branch
          %165 = sbr.rel (%p163) target = $region24
        $region23: #{tpu_custom_call.1} parent=15 // pred_region
          %s166 = sand.u32 %s71, 1
          %s167 = scalar_lea.sflag [#allocation7], %s166
          %s168 = sand.u32 %s71, 1
          %s169 = smul.addr %s168, 4096
          %s170 = scalar_lea.vmem [#allocation6], %s169
          %s171 = smul.u32 %s22, 3
          %s172 = sadd.s32 %s171, %s23
          %s173 = smul.u32 256, %s172
          %s174 = ssub.s32 625, %s173
          %p175 = scmp.lt.s32.totalorder %s174, 256
          %s176 = scalar_select %p175, %s174, 256
          %s177 = smul.u32 128, %s176
          %s178 = smul.u32 %s177, 2
          %s180 = ssub.s32 65536, %s178
          %181 = vsyncadd %s167, %s180
          %p182 = scmp.ne.s32.totalorder 0, %s178
          %s183 = smul.addr %s173, 2
          %s184 = smul.addr %s183, 128
          %s185 = scalar_lea.hbm %s1, %s184
          %s186 = smul.u32 16, %s176
          %s187 = sshll.u32 %s170, 4
          %s188 = int_to_ptr.vmem [resolvable:$true] %s187
          %s189 = sshll.u32 %s186, 4
          %193 = dma.hbm_to_vmem [thread:$0]  (%p182), %s185, %s189, %s188, %s167, 256, 256, 16
        $region24: #{tpu_custom_call.1} parent=15 // pred_fallthru
          _
      $region16: #{tpu_custom_call.1} parent=5 // pred_fallthru
        _
      %p194 = scmp.le.s32.totalorder 1, %s15
      %p195 = scmp.lt.s32.totalorder %s15, 4
      %p196 = pnand %p194, %p195
      %p197 = pneg %p196
      // Predicated region
      $region25: #{tpu_custom_call.1} parent=5 // pred_check
        _
      $region26: #{tpu_custom_call.1} parent=5 // pred_check_branch
        %199 = sbr.rel (%p196) target = $region28
      $region27: #{tpu_custom_call.1} parent=5 // pred_region
        %s200 = ssub.s32 %s15, 1
        %s201 = sand.u32 %s44, 1
        %s202 = scalar_lea.sflag [#allocation4], %s201
        %s203 = sand.u32 %s44, 1
        %s204 = smul.addr %s203, 4096
        %s205 = scalar_lea.vmem [#allocation3], %s204
        // Predicated region
        $region29: #{tpu_custom_call.1} parent=27 // pred_check
          %p206 = pneg %p57
        $region30: #{tpu_custom_call.1} parent=27 // pred_check_branch
          %208 = sbr.rel (%p206) target = $region32
        $region31: #{tpu_custom_call.1} parent=27 // pred_region
          %209 = dma.done %s202, 65536
        $region32: #{tpu_custom_call.1} parent=27 // pred_fallthru
          _
        %s210 = sand.u32 %s74, 1
        %s211 = scalar_lea.sflag [#allocation7], %s210
        %s212 = sand.u32 %s74, 1
        %s213 = smul.addr %s212, 4096
        %s214 = scalar_lea.vmem [#allocation6], %s213
        // Predicated region
        $region33: #{tpu_custom_call.1} parent=27 // pred_check
          %p215 = pneg %p87
        $region34: #{tpu_custom_call.1} parent=27 // pred_check_branch
          %217 = sbr.rel (%p215) target = $region36
        $region35: #{tpu_custom_call.1} parent=27 // pred_region
          %218 = dma.done %s211, 65536
        $region36: #{tpu_custom_call.1} parent=27 // pred_fallthru
          _
        %s219 = sand.u32 %s44, 1
        %s220 = scalar_lea.sflag [#allocation4], %s219
        %s221 = sand.u32 %s44, 1
        %s222 = smul.addr %s221, 4096
        %s223 = scalar_lea.vmem [#allocation3], %s222
        %p224 = pneg %p57
        %p225 = pneg %p54
        %s226 = sand.u32 %s74, 1
        %s227 = scalar_lea.sflag [#allocation7], %s226
        %s228 = sand.u32 %s74, 1
        %s229 = smul.addr %s228, 4096
        %s230 = scalar_lea.vmem [#allocation6], %s229
        %p231 = pneg %p87
        %p232 = pneg %p84
        %p233 = pneg %p113
        %p234 = pneg %p110
        %s235 = smul.u32 %s24, 3
        %s236 = sadd.s32 %s235, %s25
        %s237 = smul.u32 256, %s236
        %s238 = ssub.s32 625, %s237
        %p239 = scmp.lt.s32.totalorder %s238, 256
        %s240 = scalar_select %p239, %s238, 256
        %s241 = smul.u32 128, %s240
        %s242 = smul.u32 %s241, 2
        %s243 = smul.u32 %s24, 3
        %s244 = sadd.s32 %s243, %s25
        %s245 = smul.u32 256, %s244
        %s246 = ssub.s32 625, %s245
        %p247 = scmp.lt.s32.totalorder %s246, 256
        %s248 = scalar_select %p247, %s246, 256
        %s249 = smul.u32 128, %s248
        %s250 = smul.u32 %s249, 2
        %p251 = scmp.eq.s32.totalorder %s25, 0
        // Predicated region
        $region37: #{tpu_custom_call.1} parent=27 // pred_check
          %p252 = pneg %p251
        $region38: #{tpu_custom_call.1} parent=27 // pred_check_branch
          %254 = sbr.rel (%p252) target = $region40
        $region39: #{tpu_custom_call.1} parent=27 // pred_region
          %255 = vst [vmem:[#allocation2] sm:$0xff] 0.0
          %256 = vst [vmem:[#allocation2 + $0x8] sm:$0xff] 0.0
        $region40: #{tpu_custom_call.1} parent=27 // pred_fallthru
          _
        %v257 = vld [vmem:[%s205] sm:$0xff]
        %v258 = vld [vmem:[%s205 + $0x8] sm:$0xff]
        %v259 = vld [vmem:[%s205 + $0x10] sm:$0xff]
        %v260 = vld [vmem:[%s205 + $0x18] sm:$0xff]
        %v261 = vld [vmem:[%s205 + $0x20] sm:$0xff]
        %v262 = vld [vmem:[%s205 + $0x28] sm:$0xff]
        %v263 = vld [vmem:[%s205 + $0x30] sm:$0xff]
        %v264 = vld [vmem:[%s205 + $0x38] sm:$0xff]
        %v265 = vld [vmem:[%s205 + $0x40] sm:$0xff]
        %v266 = vld [vmem:[%s205 + $0x48] sm:$0xff]
        %v267 = vld [vmem:[%s205 + $0x50] sm:$0xff]
        %v268 = vld [vmem:[%s205 + $0x58] sm:$0xff]
        %v269 = vld [vmem:[%s205 + $0x60] sm:$0xff]
        %v270 = vld [vmem:[%s205 + $0x68] sm:$0xff]
        %v271 = vld [vmem:[%s205 + $0x70] sm:$0xff]
        %v272 = vld [vmem:[%s205 + $0x78] sm:$0xff]
        %v273 = vld [vmem:[%s205 + $0x80] sm:$0xff]
        %v274 = vld [vmem:[%s205 + $0x88] sm:$0xff]
        %v275 = vld [vmem:[%s205 + $0x90] sm:$0xff]
        %v276 = vld [vmem:[%s205 + $0x98] sm:$0xff]
        %v277 = vld [vmem:[%s205 + $0xa0] sm:$0xff]
        %v278 = vld [vmem:[%s205 + $0xa8] sm:$0xff]
        %v279 = vld [vmem:[%s205 + $0xb0] sm:$0xff]
        %v280 = vld [vmem:[%s205 + $0xb8] sm:$0xff]
        %v281 = vld [vmem:[%s205 + $0xc0] sm:$0xff]
        %v282 = vld [vmem:[%s205 + $0xc8] sm:$0xff]
        %v283 = vld [vmem:[%s205 + $0xd0] sm:$0xff]
        %v284 = vld [vmem:[%s205 + $0xd8] sm:$0xff]
        %v285 = vld [vmem:[%s205 + $0xe0] sm:$0xff]
        %v286 = vld [vmem:[%s205 + $0xe8] sm:$0xff]
        %v287 = vld [vmem:[%s205 + $0xf0] sm:$0xff]
        %v288 = vld [vmem:[%s205 + $0xf8] sm:$0xff]
        %v289 = vld [vmem:[%s205 + $0x100] sm:$0xff]
        %v290 = vld [vmem:[%s205 + $0x108] sm:$0xff]
        %v291 = vld [vmem:[%s205 + $0x110] sm:$0xff]
        %v292 = vld [vmem:[%s205 + $0x118] sm:$0xff]
        %v293 = vld [vmem:[%s205 + $0x120] sm:$0xff]
        %v294 = vld [vmem:[%s205 + $0x128] sm:$0xff]
        %v295 = vld [vmem:[%s205 + $0x130] sm:$0xff]
        %v296 = vld [vmem:[%s205 + $0x138] sm:$0xff]
        %v297 = vld [vmem:[%s205 + $0x140] sm:$0xff]
        %v298 = vld [vmem:[%s205 + $0x148] sm:$0xff]
        %v299 = vld [vmem:[%s205 + $0x150] sm:$0xff]
        %v300 = vld [vmem:[%s205 + $0x158] sm:$0xff]
        %v301 = vld [vmem:[%s205 + $0x160] sm:$0xff]
        %v302 = vld [vmem:[%s205 + $0x168] sm:$0xff]
        %v303 = vld [vmem:[%s205 + $0x170] sm:$0xff]
        %v304 = vld [vmem:[%s205 + $0x178] sm:$0xff]
        %v305 = vld [vmem:[%s205 + $0x180] sm:$0xff]
        %v306 = vld [vmem:[%s205 + $0x188] sm:$0xff]
        %v307 = vld [vmem:[%s205 + $0x190] sm:$0xff]
        %v308 = vld [vmem:[%s205 + $0x198] sm:$0xff]
        %v309 = vld [vmem:[%s205 + $0x1a0] sm:$0xff]
        %v310 = vld [vmem:[%s205 + $0x1a8] sm:$0xff]
        %v311 = vld [vmem:[%s205 + $0x1b0] sm:$0xff]
        %v312 = vld [vmem:[%s205 + $0x1b8] sm:$0xff]
        %v313 = vld [vmem:[%s205 + $0x1c0] sm:$0xff]
        %v314 = vld [vmem:[%s205 + $0x1c8] sm:$0xff]
        %v315 = vld [vmem:[%s205 + $0x1d0] sm:$0xff]
        %v316 = vld [vmem:[%s205 + $0x1d8] sm:$0xff]
        %v317 = vld [vmem:[%s205 + $0x1e0] sm:$0xff]
        %v318 = vld [vmem:[%s205 + $0x1e8] sm:$0xff]
        %v319 = vld [vmem:[%s205 + $0x1f0] sm:$0xff]
        %v320 = vld [vmem:[%s205 + $0x1f8] sm:$0xff]
        %v321 = vld [vmem:[%s205 + $0x200] sm:$0xff]
        %v322 = vld [vmem:[%s205 + $0x208] sm:$0xff]
        %v323 = vld [vmem:[%s205 + $0x210] sm:$0xff]
        %v324 = vld [vmem:[%s205 + $0x218] sm:$0xff]
        %v325 = vld [vmem:[%s205 + $0x220] sm:$0xff]
        %v326 = vld [vmem:[%s205 + $0x228] sm:$0xff]
        %v327 = vld [vmem:[%s205 + $0x230] sm:$0xff]
        %v328 = vld [vmem:[%s205 + $0x238] sm:$0xff]
        %v329 = vld [vmem:[%s205 + $0x240] sm:$0xff]
        %v330 = vld [vmem:[%s205 + $0x248] sm:$0xff]
        %v331 = vld [vmem:[%s205 + $0x250] sm:$0xff]
        %v332 = vld [vmem:[%s205 + $0x258] sm:$0xff]
        %v333 = vld [vmem:[%s205 + $0x260] sm:$0xff]
        %v334 = vld [vmem:[%s205 + $0x268] sm:$0xff]
        %v335 = vld [vmem:[%s205 + $0x270] sm:$0xff]
        %v336 = vld [vmem:[%s205 + $0x278] sm:$0xff]
        %v337 = vld [vmem:[%s205 + $0x280] sm:$0xff]
        %v338 = vld [vmem:[%s205 + $0x288] sm:$0xff]
        %v339 = vld [vmem:[%s205 + $0x290] sm:$0xff]
        %v340 = vld [vmem:[%s205 + $0x298] sm:$0xff]
        %v341 = vld [vmem:[%s205 + $0x2a0] sm:$0xff]
        %v342 = vld [vmem:[%s205 + $0x2a8] sm:$0xff]
        %v343 = vld [vmem:[%s205 + $0x2b0] sm:$0xff]
        %v344 = vld [vmem:[%s205 + $0x2b8] sm:$0xff]
        %v345 = vld [vmem:[%s205 + $0x2c0] sm:$0xff]
        %v346 = vld [vmem:[%s205 + $0x2c8] sm:$0xff]
        %v347 = vld [vmem:[%s205 + $0x2d0] sm:$0xff]
        %v348 = vld [vmem:[%s205 + $0x2d8] sm:$0xff]
        %v349 = vld [vmem:[%s205 + $0x2e0] sm:$0xff]
        %v350 = vld [vmem:[%s205 + $0x2e8] sm:$0xff]
        %v351 = vld [vmem:[%s205 + $0x2f0] sm:$0xff]
        %v352 = vld [vmem:[%s205 + $0x2f8] sm:$0xff]
        %v353 = vld [vmem:[%s205 + $0x300] sm:$0xff]
        %v354 = vld [vmem:[%s205 + $0x308] sm:$0xff]
        %v355 = vld [vmem:[%s205 + $0x310] sm:$0xff]
        %v356 = vld [vmem:[%s205 + $0x318] sm:$0xff]
        %v357 = vld [vmem:[%s205 + $0x320] sm:$0xff]
        %v358 = vld [vmem:[%s205 + $0x328] sm:$0xff]
        %v359 = vld [vmem:[%s205 + $0x330] sm:$0xff]
        %v360 = vld [vmem:[%s205 + $0x338] sm:$0xff]
        %v361 = vld [vmem:[%s205 + $0x340] sm:$0xff]
        %v362 = vld [vmem:[%s205 + $0x348] sm:$0xff]
        %v363 = vld [vmem:[%s205 + $0x350] sm:$0xff]
        %v364 = vld [vmem:[%s205 + $0x358] sm:$0xff]
        %v365 = vld [vmem:[%s205 + $0x360] sm:$0xff]
        %v366 = vld [vmem:[%s205 + $0x368] sm:$0xff]
        %v367 = vld [vmem:[%s205 + $0x370] sm:$0xff]
        %v368 = vld [vmem:[%s205 + $0x378] sm:$0xff]
        %v369 = vld [vmem:[%s205 + $0x380] sm:$0xff]
        %v370 = vld [vmem:[%s205 + $0x388] sm:$0xff]
        %v371 = vld [vmem:[%s205 + $0x390] sm:$0xff]
        %v372 = vld [vmem:[%s205 + $0x398] sm:$0xff]
        %v373 = vld [vmem:[%s205 + $0x3a0] sm:$0xff]
        %v374 = vld [vmem:[%s205 + $0x3a8] sm:$0xff]
        %v375 = vld [vmem:[%s205 + $0x3b0] sm:$0xff]
        %v376 = vld [vmem:[%s205 + $0x3b8] sm:$0xff]
        %v377 = vld [vmem:[%s205 + $0x3c0] sm:$0xff]
        %v378 = vld [vmem:[%s205 + $0x3c8] sm:$0xff]
        %v379 = vld [vmem:[%s205 + $0x3d0] sm:$0xff]
        %v380 = vld [vmem:[%s205 + $0x3d8] sm:$0xff]
        %v381 = vld [vmem:[%s205 + $0x3e0] sm:$0xff]
        %v382 = vld [vmem:[%s205 + $0x3e8] sm:$0xff]
        %v383 = vld [vmem:[%s205 + $0x3f0] sm:$0xff]
        %v384 = vld [vmem:[%s205 + $0x3f8] sm:$0xff]
        %v385 = vld [vmem:[%s205 + $0x400] sm:$0xff]
        %v386 = vld [vmem:[%s205 + $0x408] sm:$0xff]
        %v387 = vld [vmem:[%s205 + $0x410] sm:$0xff]
        %v388 = vld [vmem:[%s205 + $0x418] sm:$0xff]
        %v389 = vld [vmem:[%s205 + $0x420] sm:$0xff]
        %v390 = vld [vmem:[%s205 + $0x428] sm:$0xff]
        %v391 = vld [vmem:[%s205 + $0x430] sm:$0xff]
        %v392 = vld [vmem:[%s205 + $0x438] sm:$0xff]
        %v393 = vld [vmem:[%s205 + $0x440] sm:$0xff]
        %v394 = vld [vmem:[%s205 + $0x448] sm:$0xff]
        %v395 = vld [vmem:[%s205 + $0x450] sm:$0xff]
        %v396 = vld [vmem:[%s205 + $0x458] sm:$0xff]
        %v397 = vld [vmem:[%s205 + $0x460] sm:$0xff]
        %v398 = vld [vmem:[%s205 + $0x468] sm:$0xff]
        %v399 = vld [vmem:[%s205 + $0x470] sm:$0xff]
        %v400 = vld [vmem:[%s205 + $0x478] sm:$0xff]
        %v401 = vld [vmem:[%s205 + $0x480] sm:$0xff]
        %v402 = vld [vmem:[%s205 + $0x488] sm:$0xff]
        %v403 = vld [vmem:[%s205 + $0x490] sm:$0xff]
        %v404 = vld [vmem:[%s205 + $0x498] sm:$0xff]
        %v405 = vld [vmem:[%s205 + $0x4a0] sm:$0xff]
        %v406 = vld [vmem:[%s205 + $0x4a8] sm:$0xff]
        %v407 = vld [vmem:[%s205 + $0x4b0] sm:$0xff]
        %v408 = vld [vmem:[%s205 + $0x4b8] sm:$0xff]
        %v409 = vld [vmem:[%s205 + $0x4c0] sm:$0xff]
        %v410 = vld [vmem:[%s205 + $0x4c8] sm:$0xff]
        %v411 = vld [vmem:[%s205 + $0x4d0] sm:$0xff]
        %v412 = vld [vmem:[%s205 + $0x4d8] sm:$0xff]
        %v413 = vld [vmem:[%s205 + $0x4e0] sm:$0xff]
        %v414 = vld [vmem:[%s205 + $0x4e8] sm:$0xff]
        %v415 = vld [vmem:[%s205 + $0x4f0] sm:$0xff]
        %v416 = vld [vmem:[%s205 + $0x4f8] sm:$0xff]
        %v417 = vld [vmem:[%s205 + $0x500] sm:$0xff]
        %v418 = vld [vmem:[%s205 + $0x508] sm:$0xff]
        %v419 = vld [vmem:[%s205 + $0x510] sm:$0xff]
        %v420 = vld [vmem:[%s205 + $0x518] sm:$0xff]
        %v421 = vld [vmem:[%s205 + $0x520] sm:$0xff]
        %v422 = vld [vmem:[%s205 + $0x528] sm:$0xff]
        %v423 = vld [vmem:[%s205 + $0x530] sm:$0xff]
        %v424 = vld [vmem:[%s205 + $0x538] sm:$0xff]
        %v425 = vld [vmem:[%s205 + $0x540] sm:$0xff]
        %v426 = vld [vmem:[%s205 + $0x548] sm:$0xff]
        %v427 = vld [vmem:[%s205 + $0x550] sm:$0xff]
        %v428 = vld [vmem:[%s205 + $0x558] sm:$0xff]
        %v429 = vld [vmem:[%s205 + $0x560] sm:$0xff]
        %v430 = vld [vmem:[%s205 + $0x568] sm:$0xff]
        %v431 = vld [vmem:[%s205 + $0x570] sm:$0xff]
        %v432 = vld [vmem:[%s205 + $0x578] sm:$0xff]
        %v433 = vld [vmem:[%s205 + $0x580] sm:$0xff]
        %v434 = vld [vmem:[%s205 + $0x588] sm:$0xff]
        %v435 = vld [vmem:[%s205 + $0x590] sm:$0xff]
        %v436 = vld [vmem:[%s205 + $0x598] sm:$0xff]
        %v437 = vld [vmem:[%s205 + $0x5a0] sm:$0xff]
        %v438 = vld [vmem:[%s205 + $0x5a8] sm:$0xff]
        %v439 = vld [vmem:[%s205 + $0x5b0] sm:$0xff]
        %v440 = vld [vmem:[%s205 + $0x5b8] sm:$0xff]
        %v441 = vld [vmem:[%s205 + $0x5c0] sm:$0xff]
        %v442 = vld [vmem:[%s205 + $0x5c8] sm:$0xff]
        %v443 = vld [vmem:[%s205 + $0x5d0] sm:$0xff]
        %v444 = vld [vmem:[%s205 + $0x5d8] sm:$0xff]
        %v445 = vld [vmem:[%s205 + $0x5e0] sm:$0xff]
        %v446 = vld [vmem:[%s205 + $0x5e8] sm:$0xff]
        %v447 = vld [vmem:[%s205 + $0x5f0] sm:$0xff]
        %v448 = vld [vmem:[%s205 + $0x5f8] sm:$0xff]
        %v449 = vld [vmem:[%s205 + $0x600] sm:$0xff]
        %v450 = vld [vmem:[%s205 + $0x608] sm:$0xff]
        %v451 = vld [vmem:[%s205 + $0x610] sm:$0xff]
        %v452 = vld [vmem:[%s205 + $0x618] sm:$0xff]
        %v453 = vld [vmem:[%s205 + $0x620] sm:$0xff]
        %v454 = vld [vmem:[%s205 + $0x628] sm:$0xff]
        %v455 = vld [vmem:[%s205 + $0x630] sm:$0xff]
        %v456 = vld [vmem:[%s205 + $0x638] sm:$0xff]
        %v457 = vld [vmem:[%s205 + $0x640] sm:$0xff]
        %v458 = vld [vmem:[%s205 + $0x648] sm:$0xff]
        %v459 = vld [vmem:[%s205 + $0x650] sm:$0xff]
        %v460 = vld [vmem:[%s205 + $0x658] sm:$0xff]
        %v461 = vld [vmem:[%s205 + $0x660] sm:$0xff]
        %v462 = vld [vmem:[%s205 + $0x668] sm:$0xff]
        %v463 = vld [vmem:[%s205 + $0x670] sm:$0xff]
        %v464 = vld [vmem:[%s205 + $0x678] sm:$0xff]
        %v465 = vld [vmem:[%s205 + $0x680] sm:$0xff]
        %v466 = vld [vmem:[%s205 + $0x688] sm:$0xff]
        %v467 = vld [vmem:[%s205 + $0x690] sm:$0xff]
        %v468 = vld [vmem:[%s205 + $0x698] sm:$0xff]
        %v469 = vld [vmem:[%s205 + $0x6a0] sm:$0xff]
        %v470 = vld [vmem:[%s205 + $0x6a8] sm:$0xff]
        %v471 = vld [vmem:[%s205 + $0x6b0] sm:$0xff]
        %v472 = vld [vmem:[%s205 + $0x6b8] sm:$0xff]
        %v473 = vld [vmem:[%s205 + $0x6c0] sm:$0xff]
        %v474 = vld [vmem:[%s205 + $0x6c8] sm:$0xff]
        %v475 = vld [vmem:[%s205 + $0x6d0] sm:$0xff]
        %v476 = vld [vmem:[%s205 + $0x6d8] sm:$0xff]
        %v477 = vld [vmem:[%s205 + $0x6e0] sm:$0xff]
        %v478 = vld [vmem:[%s205 + $0x6e8] sm:$0xff]
        %v479 = vld [vmem:[%s205 + $0x6f0] sm:$0xff]
        %v480 = vld [vmem:[%s205 + $0x6f8] sm:$0xff]
        %v481 = vld [vmem:[%s205 + $0x700] sm:$0xff]
        %v482 = vld [vmem:[%s205 + $0x708] sm:$0xff]
        %v483 = vld [vmem:[%s205 + $0x710] sm:$0xff]
        %v484 = vld [vmem:[%s205 + $0x718] sm:$0xff]
        %v485 = vld [vmem:[%s205 + $0x720] sm:$0xff]
        %v486 = vld [vmem:[%s205 + $0x728] sm:$0xff]
        %v487 = vld [vmem:[%s205 + $0x730] sm:$0xff]
        %v488 = vld [vmem:[%s205 + $0x738] sm:$0xff]
        %v489 = vld [vmem:[%s205 + $0x740] sm:$0xff]
        %v490 = vld [vmem:[%s205 + $0x748] sm:$0xff]
        %v491 = vld [vmem:[%s205 + $0x750] sm:$0xff]
        %v492 = vld [vmem:[%s205 + $0x758] sm:$0xff]
        %v493 = vld [vmem:[%s205 + $0x760] sm:$0xff]
        %v494 = vld [vmem:[%s205 + $0x768] sm:$0xff]
        %v495 = vld [vmem:[%s205 + $0x770] sm:$0xff]
        %v496 = vld [vmem:[%s205 + $0x778] sm:$0xff]
        %v497 = vld [vmem:[%s205 + $0x780] sm:$0xff]
        %v498 = vld [vmem:[%s205 + $0x788] sm:$0xff]
        %v499 = vld [vmem:[%s205 + $0x790] sm:$0xff]
        %v500 = vld [vmem:[%s205 + $0x798] sm:$0xff]
        %v501 = vld [vmem:[%s205 + $0x7a0] sm:$0xff]
        %v502 = vld [vmem:[%s205 + $0x7a8] sm:$0xff]
        %v503 = vld [vmem:[%s205 + $0x7b0] sm:$0xff]
        %v504 = vld [vmem:[%s205 + $0x7b8] sm:$0xff]
        %v505 = vld [vmem:[%s205 + $0x7c0] sm:$0xff]
        %v506 = vld [vmem:[%s205 + $0x7c8] sm:$0xff]
        %v507 = vld [vmem:[%s205 + $0x7d0] sm:$0xff]
        %v508 = vld [vmem:[%s205 + $0x7d8] sm:$0xff]
        %v509 = vld [vmem:[%s205 + $0x7e0] sm:$0xff]
        %v510 = vld [vmem:[%s205 + $0x7e8] sm:$0xff]
        %v511 = vld [vmem:[%s205 + $0x7f0] sm:$0xff]
        %v512 = vld [vmem:[%s205 + $0x7f8] sm:$0xff]
        %v513 = vld [vmem:[%s205 + $0x800] sm:$0xff]
        %v514 = vld [vmem:[%s205 + $0x808] sm:$0xff]
        %v515 = vld [vmem:[%s205 + $0x810] sm:$0xff]
        %v516 = vld [vmem:[%s205 + $0x818] sm:$0xff]
        %v517 = vld [vmem:[%s205 + $0x820] sm:$0xff]
        %v518 = vld [vmem:[%s205 + $0x828] sm:$0xff]
        %v519 = vld [vmem:[%s205 + $0x830] sm:$0xff]
        %v520 = vld [vmem:[%s205 + $0x838] sm:$0xff]
        %v521 = vld [vmem:[%s205 + $0x840] sm:$0xff]
        %v522 = vld [vmem:[%s205 + $0x848] sm:$0xff]
        %v523 = vld [vmem:[%s205 + $0x850] sm:$0xff]
        %v524 = vld [vmem:[%s205 + $0x858] sm:$0xff]
        %v525 = vld [vmem:[%s205 + $0x860] sm:$0xff]
        %v526 = vld [vmem:[%s205 + $0x868] sm:$0xff]
        %v527 = vld [vmem:[%s205 + $0x870] sm:$0xff]
        %v528 = vld [vmem:[%s205 + $0x878] sm:$0xff]
        %v529 = vld [vmem:[%s205 + $0x880] sm:$0xff]
        %v530 = vld [vmem:[%s205 + $0x888] sm:$0xff]
        %v531 = vld [vmem:[%s205 + $0x890] sm:$0xff]
        %v532 = vld [vmem:[%s205 + $0x898] sm:$0xff]
        %v533 = vld [vmem:[%s205 + $0x8a0] sm:$0xff]
        %v534 = vld [vmem:[%s205 + $0x8a8] sm:$0xff]
        %v535 = vld [vmem:[%s205 + $0x8b0] sm:$0xff]
        %v536 = vld [vmem:[%s205 + $0x8b8] sm:$0xff]
        %v537 = vld [vmem:[%s205 + $0x8c0] sm:$0xff]
        %v538 = vld [vmem:[%s205 + $0x8c8] sm:$0xff]
        %v539 = vld [vmem:[%s205 + $0x8d0] sm:$0xff]
        %v540 = vld [vmem:[%s205 + $0x8d8] sm:$0xff]
        %v541 = vld [vmem:[%s205 + $0x8e0] sm:$0xff]
        %v542 = vld [vmem:[%s205 + $0x8e8] sm:$0xff]
        %v543 = vld [vmem:[%s205 + $0x8f0] sm:$0xff]
        %v544 = vld [vmem:[%s205 + $0x8f8] sm:$0xff]
        %v545 = vld [vmem:[%s205 + $0x900] sm:$0xff]
        %v546 = vld [vmem:[%s205 + $0x908] sm:$0xff]
        %v547 = vld [vmem:[%s205 + $0x910] sm:$0xff]
        %v548 = vld [vmem:[%s205 + $0x918] sm:$0xff]
        %v549 = vld [vmem:[%s205 + $0x920] sm:$0xff]
        %v550 = vld [vmem:[%s205 + $0x928] sm:$0xff]
        %v551 = vld [vmem:[%s205 + $0x930] sm:$0xff]
        %v552 = vld [vmem:[%s205 + $0x938] sm:$0xff]
        %v553 = vld [vmem:[%s205 + $0x940] sm:$0xff]
        %v554 = vld [vmem:[%s205 + $0x948] sm:$0xff]
        %v555 = vld [vmem:[%s205 + $0x950] sm:$0xff]
        %v556 = vld [vmem:[%s205 + $0x958] sm:$0xff]
        %v557 = vld [vmem:[%s205 + $0x960] sm:$0xff]
        %v558 = vld [vmem:[%s205 + $0x968] sm:$0xff]
        %v559 = vld [vmem:[%s205 + $0x970] sm:$0xff]
        %v560 = vld [vmem:[%s205 + $0x978] sm:$0xff]
        %v561 = vld [vmem:[%s205 + $0x980] sm:$0xff]
        %v562 = vld [vmem:[%s205 + $0x988] sm:$0xff]
        %v563 = vld [vmem:[%s205 + $0x990] sm:$0xff]
        %v564 = vld [vmem:[%s205 + $0x998] sm:$0xff]
        %v565 = vld [vmem:[%s205 + $0x9a0] sm:$0xff]
        %v566 = vld [vmem:[%s205 + $0x9a8] sm:$0xff]
        %v567 = vld [vmem:[%s205 + $0x9b0] sm:$0xff]
        %v568 = vld [vmem:[%s205 + $0x9b8] sm:$0xff]
        %v569 = vld [vmem:[%s205 + $0x9c0] sm:$0xff]
        %v570 = vld [vmem:[%s205 + $0x9c8] sm:$0xff]
        %v571 = vld [vmem:[%s205 + $0x9d0] sm:$0xff]
        %v572 = vld [vmem:[%s205 + $0x9d8] sm:$0xff]
        %v573 = vld [vmem:[%s205 + $0x9e0] sm:$0xff]
        %v574 = vld [vmem:[%s205 + $0x9e8] sm:$0xff]
        %v575 = vld [vmem:[%s205 + $0x9f0] sm:$0xff]
        %v576 = vld [vmem:[%s205 + $0x9f8] sm:$0xff]
        %v577 = vld [vmem:[%s205 + $0xa00] sm:$0xff]
        %v578 = vld [vmem:[%s205 + $0xa08] sm:$0xff]
        %v579 = vld [vmem:[%s205 + $0xa10] sm:$0xff]
        %v580 = vld [vmem:[%s205 + $0xa18] sm:$0xff]
        %v581 = vld [vmem:[%s205 + $0xa20] sm:$0xff]
        %v582 = vld [vmem:[%s205 + $0xa28] sm:$0xff]
        %v583 = vld [vmem:[%s205 + $0xa30] sm:$0xff]
        %v584 = vld [vmem:[%s205 + $0xa38] sm:$0xff]
        %v585 = vld [vmem:[%s205 + $0xa40] sm:$0xff]
        %v586 = vld [vmem:[%s205 + $0xa48] sm:$0xff]
        %v587 = vld [vmem:[%s205 + $0xa50] sm:$0xff]
        %v588 = vld [vmem:[%s205 + $0xa58] sm:$0xff]
        %v589 = vld [vmem:[%s205 + $0xa60] sm:$0xff]
        %v590 = vld [vmem:[%s205 + $0xa68] sm:$0xff]
        %v591 = vld [vmem:[%s205 + $0xa70] sm:$0xff]
        %v592 = vld [vmem:[%s205 + $0xa78] sm:$0xff]
        %v593 = vld [vmem:[%s205 + $0xa80] sm:$0xff]
        %v594 = vld [vmem:[%s205 + $0xa88] sm:$0xff]
        %v595 = vld [vmem:[%s205 + $0xa90] sm:$0xff]
        %v596 = vld [vmem:[%s205 + $0xa98] sm:$0xff]
        %v597 = vld [vmem:[%s205 + $0xaa0] sm:$0xff]
        %v598 = vld [vmem:[%s205 + $0xaa8] sm:$0xff]
        %v599 = vld [vmem:[%s205 + $0xab0] sm:$0xff]
        %v600 = vld [vmem:[%s205 + $0xab8] sm:$0xff]
        %v601 = vld [vmem:[%s205 + $0xac0] sm:$0xff]
        %v602 = vld [vmem:[%s205 + $0xac8] sm:$0xff]
        %v603 = vld [vmem:[%s205 + $0xad0] sm:$0xff]
        %v604 = vld [vmem:[%s205 + $0xad8] sm:$0xff]
        %v605 = vld [vmem:[%s205 + $0xae0] sm:$0xff]
        %v606 = vld [vmem:[%s205 + $0xae8] sm:$0xff]
        %v607 = vld [vmem:[%s205 + $0xaf0] sm:$0xff]
        %v608 = vld [vmem:[%s205 + $0xaf8] sm:$0xff]
        %v609 = vld [vmem:[%s205 + $0xb00] sm:$0xff]
        %v610 = vld [vmem:[%s205 + $0xb08] sm:$0xff]
        %v611 = vld [vmem:[%s205 + $0xb10] sm:$0xff]
        %v612 = vld [vmem:[%s205 + $0xb18] sm:$0xff]
        %v613 = vld [vmem:[%s205 + $0xb20] sm:$0xff]
        %v614 = vld [vmem:[%s205 + $0xb28] sm:$0xff]
        %v615 = vld [vmem:[%s205 + $0xb30] sm:$0xff]
        %v616 = vld [vmem:[%s205 + $0xb38] sm:$0xff]
        %v617 = vld [vmem:[%s205 + $0xb40] sm:$0xff]
        %v618 = vld [vmem:[%s205 + $0xb48] sm:$0xff]
        %v619 = vld [vmem:[%s205 + $0xb50] sm:$0xff]
        %v620 = vld [vmem:[%s205 + $0xb58] sm:$0xff]
        %v621 = vld [vmem:[%s205 + $0xb60] sm:$0xff]
        %v622 = vld [vmem:[%s205 + $0xb68] sm:$0xff]
        %v623 = vld [vmem:[%s205 + $0xb70] sm:$0xff]
        %v624 = vld [vmem:[%s205 + $0xb78] sm:$0xff]
        %v625 = vld [vmem:[%s205 + $0xb80] sm:$0xff]
        %v626 = vld [vmem:[%s205 + $0xb88] sm:$0xff]
        %v627 = vld [vmem:[%s205 + $0xb90] sm:$0xff]
        %v628 = vld [vmem:[%s205 + $0xb98] sm:$0xff]
        %v629 = vld [vmem:[%s205 + $0xba0] sm:$0xff]
        %v630 = vld [vmem:[%s205 + $0xba8] sm:$0xff]
        %v631 = vld [vmem:[%s205 + $0xbb0] sm:$0xff]
        %v632 = vld [vmem:[%s205 + $0xbb8] sm:$0xff]
        %v633 = vld [vmem:[%s205 + $0xbc0] sm:$0xff]
        %v634 = vld [vmem:[%s205 + $0xbc8] sm:$0xff]
        %v635 = vld [vmem:[%s205 + $0xbd0] sm:$0xff]
        %v636 = vld [vmem:[%s205 + $0xbd8] sm:$0xff]
        %v637 = vld [vmem:[%s205 + $0xbe0] sm:$0xff]
        %v638 = vld [vmem:[%s205 + $0xbe8] sm:$0xff]
        %v639 = vld [vmem:[%s205 + $0xbf0] sm:$0xff]
        %v640 = vld [vmem:[%s205 + $0xbf8] sm:$0xff]
        %v641 = vld [vmem:[%s205 + $0xc00] sm:$0xff]
        %v642 = vld [vmem:[%s205 + $0xc08] sm:$0xff]
        %v643 = vld [vmem:[%s205 + $0xc10] sm:$0xff]
        %v644 = vld [vmem:[%s205 + $0xc18] sm:$0xff]
        %v645 = vld [vmem:[%s205 + $0xc20] sm:$0xff]
        %v646 = vld [vmem:[%s205 + $0xc28] sm:$0xff]
        %v647 = vld [vmem:[%s205 + $0xc30] sm:$0xff]
        %v648 = vld [vmem:[%s205 + $0xc38] sm:$0xff]
        %v649 = vld [vmem:[%s205 + $0xc40] sm:$0xff]
        %v650 = vld [vmem:[%s205 + $0xc48] sm:$0xff]
        %v651 = vld [vmem:[%s205 + $0xc50] sm:$0xff]
        %v652 = vld [vmem:[%s205 + $0xc58] sm:$0xff]
        %v653 = vld [vmem:[%s205 + $0xc60] sm:$0xff]
        %v654 = vld [vmem:[%s205 + $0xc68] sm:$0xff]
        %v655 = vld [vmem:[%s205 + $0xc70] sm:$0xff]
        %v656 = vld [vmem:[%s205 + $0xc78] sm:$0xff]
        %v657 = vld [vmem:[%s205 + $0xc80] sm:$0xff]
        %v658 = vld [vmem:[%s205 + $0xc88] sm:$0xff]
        %v659 = vld [vmem:[%s205 + $0xc90] sm:$0xff]
        %v660 = vld [vmem:[%s205 + $0xc98] sm:$0xff]
        %v661 = vld [vmem:[%s205 + $0xca0] sm:$0xff]
        %v662 = vld [vmem:[%s205 + $0xca8] sm:$0xff]
        %v663 = vld [vmem:[%s205 + $0xcb0] sm:$0xff]
        %v664 = vld [vmem:[%s205 + $0xcb8] sm:$0xff]
        %v665 = vld [vmem:[%s205 + $0xcc0] sm:$0xff]
        %v666 = vld [vmem:[%s205 + $0xcc8] sm:$0xff]
        %v667 = vld [vmem:[%s205 + $0xcd0] sm:$0xff]
        %v668 = vld [vmem:[%s205 + $0xcd8] sm:$0xff]
        %v669 = vld [vmem:[%s205 + $0xce0] sm:$0xff]
        %v670 = vld [vmem:[%s205 + $0xce8] sm:$0xff]
        %v671 = vld [vmem:[%s205 + $0xcf0] sm:$0xff]
        %v672 = vld [vmem:[%s205 + $0xcf8] sm:$0xff]
        %v673 = vld [vmem:[%s205 + $0xd00] sm:$0xff]
        %v674 = vld [vmem:[%s205 + $0xd08] sm:$0xff]
        %v675 = vld [vmem:[%s205 + $0xd10] sm:$0xff]
        %v676 = vld [vmem:[%s205 + $0xd18] sm:$0xff]
        %v677 = vld [vmem:[%s205 + $0xd20] sm:$0xff]
        %v678 = vld [vmem:[%s205 + $0xd28] sm:$0xff]
        %v679 = vld [vmem:[%s205 + $0xd30] sm:$0xff]
        %v680 = vld [vmem:[%s205 + $0xd38] sm:$0xff]
        %v681 = vld [vmem:[%s205 + $0xd40] sm:$0xff]
        %v682 = vld [vmem:[%s205 + $0xd48] sm:$0xff]
        %v683 = vld [vmem:[%s205 + $0xd50] sm:$0xff]
        %v684 = vld [vmem:[%s205 + $0xd58] sm:$0xff]
        %v685 = vld [vmem:[%s205 + $0xd60] sm:$0xff]
        %v686 = vld [vmem:[%s205 + $0xd68] sm:$0xff]
        %v687 = vld [vmem:[%s205 + $0xd70] sm:$0xff]
        %v688 = vld [vmem:[%s205 + $0xd78] sm:$0xff]
        %v689 = vld [vmem:[%s205 + $0xd80] sm:$0xff]
        %v690 = vld [vmem:[%s205 + $0xd88] sm:$0xff]
        %v691 = vld [vmem:[%s205 + $0xd90] sm:$0xff]
        %v692 = vld [vmem:[%s205 + $0xd98] sm:$0xff]
        %v693 = vld [vmem:[%s205 + $0xda0] sm:$0xff]
        %v694 = vld [vmem:[%s205 + $0xda8] sm:$0xff]
        %v695 = vld [vmem:[%s205 + $0xdb0] sm:$0xff]
        %v696 = vld [vmem:[%s205 + $0xdb8] sm:$0xff]
        %v697 = vld [vmem:[%s205 + $0xdc0] sm:$0xff]
        %v698 = vld [vmem:[%s205 + $0xdc8] sm:$0xff]
        %v699 = vld [vmem:[%s205 + $0xdd0] sm:$0xff]
        %v700 = vld [vmem:[%s205 + $0xdd8] sm:$0xff]
        %v701 = vld [vmem:[%s205 + $0xde0] sm:$0xff]
        %v702 = vld [vmem:[%s205 + $0xde8] sm:$0xff]
        %v703 = vld [vmem:[%s205 + $0xdf0] sm:$0xff]
        %v704 = vld [vmem:[%s205 + $0xdf8] sm:$0xff]
        %v705 = vld [vmem:[%s205 + $0xe00] sm:$0xff]
        %v706 = vld [vmem:[%s205 + $0xe08] sm:$0xff]
        %v707 = vld [vmem:[%s205 + $0xe10] sm:$0xff]
        %v708 = vld [vmem:[%s205 + $0xe18] sm:$0xff]
        %v709 = vld [vmem:[%s205 + $0xe20] sm:$0xff]
        %v710 = vld [vmem:[%s205 + $0xe28] sm:$0xff]
        %v711 = vld [vmem:[%s205 + $0xe30] sm:$0xff]
        %v712 = vld [vmem:[%s205 + $0xe38] sm:$0xff]
        %v713 = vld [vmem:[%s205 + $0xe40] sm:$0xff]
        %v714 = vld [vmem:[%s205 + $0xe48] sm:$0xff]
        %v715 = vld [vmem:[%s205 + $0xe50] sm:$0xff]
        %v716 = vld [vmem:[%s205 + $0xe58] sm:$0xff]
        %v717 = vld [vmem:[%s205 + $0xe60] sm:$0xff]
        %v718 = vld [vmem:[%s205 + $0xe68] sm:$0xff]
        %v719 = vld [vmem:[%s205 + $0xe70] sm:$0xff]
        %v720 = vld [vmem:[%s205 + $0xe78] sm:$0xff]
        %v721 = vld [vmem:[%s205 + $0xe80] sm:$0xff]
        %v722 = vld [vmem:[%s205 + $0xe88] sm:$0xff]
        %v723 = vld [vmem:[%s205 + $0xe90] sm:$0xff]
        %v724 = vld [vmem:[%s205 + $0xe98] sm:$0xff]
        %v725 = vld [vmem:[%s205 + $0xea0] sm:$0xff]
        %v726 = vld [vmem:[%s205 + $0xea8] sm:$0xff]
        %v727 = vld [vmem:[%s205 + $0xeb0] sm:$0xff]
        %v728 = vld [vmem:[%s205 + $0xeb8] sm:$0xff]
        %v729 = vld [vmem:[%s205 + $0xec0] sm:$0xff]
        %v730 = vld [vmem:[%s205 + $0xec8] sm:$0xff]
        %v731 = vld [vmem:[%s205 + $0xed0] sm:$0xff]
        %v732 = vld [vmem:[%s205 + $0xed8] sm:$0xff]
        %v733 = vld [vmem:[%s205 + $0xee0] sm:$0xff]
        %v734 = vld [vmem:[%s205 + $0xee8] sm:$0xff]
        %v735 = vld [vmem:[%s205 + $0xef0] sm:$0xff]
        %v736 = vld [vmem:[%s205 + $0xef8] sm:$0xff]
        %v737 = vld [vmem:[%s205 + $0xf00] sm:$0xff]
        %v738 = vld [vmem:[%s205 + $0xf08] sm:$0xff]
        %v739 = vld [vmem:[%s205 + $0xf10] sm:$0xff]
        %v740 = vld [vmem:[%s205 + $0xf18] sm:$0xff]
        %v741 = vld [vmem:[%s205 + $0xf20] sm:$0xff]
        %v742 = vld [vmem:[%s205 + $0xf28] sm:$0xff]
        %v743 = vld [vmem:[%s205 + $0xf30] sm:$0xff]
        %v744 = vld [vmem:[%s205 + $0xf38] sm:$0xff]
        %v745 = vld [vmem:[%s205 + $0xf40] sm:$0xff]
        %v746 = vld [vmem:[%s205 + $0xf48] sm:$0xff]
        %v747 = vld [vmem:[%s205 + $0xf50] sm:$0xff]
        %v748 = vld [vmem:[%s205 + $0xf58] sm:$0xff]
        %v749 = vld [vmem:[%s205 + $0xf60] sm:$0xff]
        %v750 = vld [vmem:[%s205 + $0xf68] sm:$0xff]
        %v751 = vld [vmem:[%s205 + $0xf70] sm:$0xff]
        %v752 = vld [vmem:[%s205 + $0xf78] sm:$0xff]
        %v753 = vld [vmem:[%s205 + $0xf80] sm:$0xff]
        %v754 = vld [vmem:[%s205 + $0xf88] sm:$0xff]
        %v755 = vld [vmem:[%s205 + $0xf90] sm:$0xff]
        %v756 = vld [vmem:[%s205 + $0xf98] sm:$0xff]
        %v757 = vld [vmem:[%s205 + $0xfa0] sm:$0xff]
        %v758 = vld [vmem:[%s205 + $0xfa8] sm:$0xff]
        %v759 = vld [vmem:[%s205 + $0xfb0] sm:$0xff]
        %v760 = vld [vmem:[%s205 + $0xfb8] sm:$0xff]
        %v761 = vld [vmem:[%s205 + $0xfc0] sm:$0xff]
        %v762 = vld [vmem:[%s205 + $0xfc8] sm:$0xff]
        %v763 = vld [vmem:[%s205 + $0xfd0] sm:$0xff]
        %v764 = vld [vmem:[%s205 + $0xfd8] sm:$0xff]
        %v765 = vld [vmem:[%s205 + $0xfe0] sm:$0xff]
        %v766 = vld [vmem:[%s205 + $0xfe8] sm:$0xff]
        %v767 = vld [vmem:[%s205 + $0xff0] sm:$0xff]
        %v768 = vld [vmem:[%s205 + $0xff8] sm:$0xff]
        %v769 = vld [vmem:[%s214] sm:$0xff]
        %v770 = vld [vmem:[%s214 + $0x8] sm:$0xff]
        %v771 = vld [vmem:[%s214 + $0x10] sm:$0xff]
        %v772 = vld [vmem:[%s214 + $0x18] sm:$0xff]
        %v773 = vld [vmem:[%s214 + $0x20] sm:$0xff]
        %v774 = vld [vmem:[%s214 + $0x28] sm:$0xff]
        %v775 = vld [vmem:[%s214 + $0x30] sm:$0xff]
        %v776 = vld [vmem:[%s214 + $0x38] sm:$0xff]
        %v777 = vld [vmem:[%s214 + $0x40] sm:$0xff]
        %v778 = vld [vmem:[%s214 + $0x48] sm:$0xff]
        %v779 = vld [vmem:[%s214 + $0x50] sm:$0xff]
        %v780 = vld [vmem:[%s214 + $0x58] sm:$0xff]
        %v781 = vld [vmem:[%s214 + $0x60] sm:$0xff]
        %v782 = vld [vmem:[%s214 + $0x68] sm:$0xff]
        %v783 = vld [vmem:[%s214 + $0x70] sm:$0xff]
        %v784 = vld [vmem:[%s214 + $0x78] sm:$0xff]
        %v785 = vld [vmem:[%s214 + $0x80] sm:$0xff]
        %v786 = vld [vmem:[%s214 + $0x88] sm:$0xff]
        %v787 = vld [vmem:[%s214 + $0x90] sm:$0xff]
        %v788 = vld [vmem:[%s214 + $0x98] sm:$0xff]
        %v789 = vld [vmem:[%s214 + $0xa0] sm:$0xff]
        %v790 = vld [vmem:[%s214 + $0xa8] sm:$0xff]
        %v791 = vld [vmem:[%s214 + $0xb0] sm:$0xff]
        %v792 = vld [vmem:[%s214 + $0xb8] sm:$0xff]
        %v793 = vld [vmem:[%s214 + $0xc0] sm:$0xff]
        %v794 = vld [vmem:[%s214 + $0xc8] sm:$0xff]
        %v795 = vld [vmem:[%s214 + $0xd0] sm:$0xff]
        %v796 = vld [vmem:[%s214 + $0xd8] sm:$0xff]
        %v797 = vld [vmem:[%s214 + $0xe0] sm:$0xff]
        %v798 = vld [vmem:[%s214 + $0xe8] sm:$0xff]
        %v799 = vld [vmem:[%s214 + $0xf0] sm:$0xff]
        %v800 = vld [vmem:[%s214 + $0xf8] sm:$0xff]
        %v801 = vld [vmem:[%s214 + $0x100] sm:$0xff]
        %v802 = vld [vmem:[%s214 + $0x108] sm:$0xff]
        %v803 = vld [vmem:[%s214 + $0x110] sm:$0xff]
        %v804 = vld [vmem:[%s214 + $0x118] sm:$0xff]
        %v805 = vld [vmem:[%s214 + $0x120] sm:$0xff]
        %v806 = vld [vmem:[%s214 + $0x128] sm:$0xff]
        %v807 = vld [vmem:[%s214 + $0x130] sm:$0xff]
        %v808 = vld [vmem:[%s214 + $0x138] sm:$0xff]
        %v809 = vld [vmem:[%s214 + $0x140] sm:$0xff]
        %v810 = vld [vmem:[%s214 + $0x148] sm:$0xff]
        %v811 = vld [vmem:[%s214 + $0x150] sm:$0xff]
        %v812 = vld [vmem:[%s214 + $0x158] sm:$0xff]
        %v813 = vld [vmem:[%s214 + $0x160] sm:$0xff]
        %v814 = vld [vmem:[%s214 + $0x168] sm:$0xff]
        %v815 = vld [vmem:[%s214 + $0x170] sm:$0xff]
        %v816 = vld [vmem:[%s214 + $0x178] sm:$0xff]
        %v817 = vld [vmem:[%s214 + $0x180] sm:$0xff]
        %v818 = vld [vmem:[%s214 + $0x188] sm:$0xff]
        %v819 = vld [vmem:[%s214 + $0x190] sm:$0xff]
        %v820 = vld [vmem:[%s214 + $0x198] sm:$0xff]
        %v821 = vld [vmem:[%s214 + $0x1a0] sm:$0xff]
        %v822 = vld [vmem:[%s214 + $0x1a8] sm:$0xff]
        %v823 = vld [vmem:[%s214 + $0x1b0] sm:$0xff]
        %v824 = vld [vmem:[%s214 + $0x1b8] sm:$0xff]
        %v825 = vld [vmem:[%s214 + $0x1c0] sm:$0xff]
        %v826 = vld [vmem:[%s214 + $0x1c8] sm:$0xff]
        %v827 = vld [vmem:[%s214 + $0x1d0] sm:$0xff]
        %v828 = vld [vmem:[%s214 + $0x1d8] sm:$0xff]
        %v829 = vld [vmem:[%s214 + $0x1e0] sm:$0xff]
        %v830 = vld [vmem:[%s214 + $0x1e8] sm:$0xff]
        %v831 = vld [vmem:[%s214 + $0x1f0] sm:$0xff]
        %v832 = vld [vmem:[%s214 + $0x1f8] sm:$0xff]
        %v833 = vld [vmem:[%s214 + $0x200] sm:$0xff]
        %v834 = vld [vmem:[%s214 + $0x208] sm:$0xff]
        %v835 = vld [vmem:[%s214 + $0x210] sm:$0xff]
        %v836 = vld [vmem:[%s214 + $0x218] sm:$0xff]
        %v837 = vld [vmem:[%s214 + $0x220] sm:$0xff]
        %v838 = vld [vmem:[%s214 + $0x228] sm:$0xff]
        %v839 = vld [vmem:[%s214 + $0x230] sm:$0xff]
        %v840 = vld [vmem:[%s214 + $0x238] sm:$0xff]
        %v841 = vld [vmem:[%s214 + $0x240] sm:$0xff]
        %v842 = vld [vmem:[%s214 + $0x248] sm:$0xff]
        %v843 = vld [vmem:[%s214 + $0x250] sm:$0xff]
        %v844 = vld [vmem:[%s214 + $0x258] sm:$0xff]
        %v845 = vld [vmem:[%s214 + $0x260] sm:$0xff]
        %v846 = vld [vmem:[%s214 + $0x268] sm:$0xff]
        %v847 = vld [vmem:[%s214 + $0x270] sm:$0xff]
        %v848 = vld [vmem:[%s214 + $0x278] sm:$0xff]
        %v849 = vld [vmem:[%s214 + $0x280] sm:$0xff]
        %v850 = vld [vmem:[%s214 + $0x288] sm:$0xff]
        %v851 = vld [vmem:[%s214 + $0x290] sm:$0xff]
        %v852 = vld [vmem:[%s214 + $0x298] sm:$0xff]
        %v853 = vld [vmem:[%s214 + $0x2a0] sm:$0xff]
        %v854 = vld [vmem:[%s214 + $0x2a8] sm:$0xff]
        %v855 = vld [vmem:[%s214 + $0x2b0] sm:$0xff]
        %v856 = vld [vmem:[%s214 + $0x2b8] sm:$0xff]
        %v857 = vld [vmem:[%s214 + $0x2c0] sm:$0xff]
        %v858 = vld [vmem:[%s214 + $0x2c8] sm:$0xff]
        %v859 = vld [vmem:[%s214 + $0x2d0] sm:$0xff]
        %v860 = vld [vmem:[%s214 + $0x2d8] sm:$0xff]
        %v861 = vld [vmem:[%s214 + $0x2e0] sm:$0xff]
        %v862 = vld [vmem:[%s214 + $0x2e8] sm:$0xff]
        %v863 = vld [vmem:[%s214 + $0x2f0] sm:$0xff]
        %v864 = vld [vmem:[%s214 + $0x2f8] sm:$0xff]
        %v865 = vld [vmem:[%s214 + $0x300] sm:$0xff]
        %v866 = vld [vmem:[%s214 + $0x308] sm:$0xff]
        %v867 = vld [vmem:[%s214 + $0x310] sm:$0xff]
        %v868 = vld [vmem:[%s214 + $0x318] sm:$0xff]
        %v869 = vld [vmem:[%s214 + $0x320] sm:$0xff]
        %v870 = vld [vmem:[%s214 + $0x328] sm:$0xff]
        %v871 = vld [vmem:[%s214 + $0x330] sm:$0xff]
        %v872 = vld [vmem:[%s214 + $0x338] sm:$0xff]
        %v873 = vld [vmem:[%s214 + $0x340] sm:$0xff]
        %v874 = vld [vmem:[%s214 + $0x348] sm:$0xff]
        %v875 = vld [vmem:[%s214 + $0x350] sm:$0xff]
        %v876 = vld [vmem:[%s214 + $0x358] sm:$0xff]
        %v877 = vld [vmem:[%s214 + $0x360] sm:$0xff]
        %v878 = vld [vmem:[%s214 + $0x368] sm:$0xff]
        %v879 = vld [vmem:[%s214 + $0x370] sm:$0xff]
        %v880 = vld [vmem:[%s214 + $0x378] sm:$0xff]
        %v881 = vld [vmem:[%s214 + $0x380] sm:$0xff]
        %v882 = vld [vmem:[%s214 + $0x388] sm:$0xff]
        %v883 = vld [vmem:[%s214 + $0x390] sm:$0xff]
        %v884 = vld [vmem:[%s214 + $0x398] sm:$0xff]
        %v885 = vld [vmem:[%s214 + $0x3a0] sm:$0xff]
        %v886 = vld [vmem:[%s214 + $0x3a8] sm:$0xff]
        %v887 = vld [vmem:[%s214 + $0x3b0] sm:$0xff]
        %v888 = vld [vmem:[%s214 + $0x3b8] sm:$0xff]
        %v889 = vld [vmem:[%s214 + $0x3c0] sm:$0xff]
        %v890 = vld [vmem:[%s214 + $0x3c8] sm:$0xff]
        %v891 = vld [vmem:[%s214 + $0x3d0] sm:$0xff]
        %v892 = vld [vmem:[%s214 + $0x3d8] sm:$0xff]
        %v893 = vld [vmem:[%s214 + $0x3e0] sm:$0xff]
        %v894 = vld [vmem:[%s214 + $0x3e8] sm:$0xff]
        %v895 = vld [vmem:[%s214 + $0x3f0] sm:$0xff]
        %v896 = vld [vmem:[%s214 + $0x3f8] sm:$0xff]
        %v897 = vld [vmem:[%s214 + $0x400] sm:$0xff]
        %v898 = vld [vmem:[%s214 + $0x408] sm:$0xff]
        %v899 = vld [vmem:[%s214 + $0x410] sm:$0xff]
        %v900 = vld [vmem:[%s214 + $0x418] sm:$0xff]
        %v901 = vld [vmem:[%s214 + $0x420] sm:$0xff]
        %v902 = vld [vmem:[%s214 + $0x428] sm:$0xff]
        %v903 = vld [vmem:[%s214 + $0x430] sm:$0xff]
        %v904 = vld [vmem:[%s214 + $0x438] sm:$0xff]
        %v905 = vld [vmem:[%s214 + $0x440] sm:$0xff]
        %v906 = vld [vmem:[%s214 + $0x448] sm:$0xff]
        %v907 = vld [vmem:[%s214 + $0x450] sm:$0xff]
        %v908 = vld [vmem:[%s214 + $0x458] sm:$0xff]
        %v909 = vld [vmem:[%s214 + $0x460] sm:$0xff]
        %v910 = vld [vmem:[%s214 + $0x468] sm:$0xff]
        %v911 = vld [vmem:[%s214 + $0x470] sm:$0xff]
        %v912 = vld [vmem:[%s214 + $0x478] sm:$0xff]
        %v913 = vld [vmem:[%s214 + $0x480] sm:$0xff]
        %v914 = vld [vmem:[%s214 + $0x488] sm:$0xff]
        %v915 = vld [vmem:[%s214 + $0x490] sm:$0xff]
        %v916 = vld [vmem:[%s214 + $0x498] sm:$0xff]
        %v917 = vld [vmem:[%s214 + $0x4a0] sm:$0xff]
        %v918 = vld [vmem:[%s214 + $0x4a8] sm:$0xff]
        %v919 = vld [vmem:[%s214 + $0x4b0] sm:$0xff]
        %v920 = vld [vmem:[%s214 + $0x4b8] sm:$0xff]
        %v921 = vld [vmem:[%s214 + $0x4c0] sm:$0xff]
        %v922 = vld [vmem:[%s214 + $0x4c8] sm:$0xff]
        %v923 = vld [vmem:[%s214 + $0x4d0] sm:$0xff]
        %v924 = vld [vmem:[%s214 + $0x4d8] sm:$0xff]
        %v925 = vld [vmem:[%s214 + $0x4e0] sm:$0xff]
        %v926 = vld [vmem:[%s214 + $0x4e8] sm:$0xff]
        %v927 = vld [vmem:[%s214 + $0x4f0] sm:$0xff]
        %v928 = vld [vmem:[%s214 + $0x4f8] sm:$0xff]
        %v929 = vld [vmem:[%s214 + $0x500] sm:$0xff]
        %v930 = vld [vmem:[%s214 + $0x508] sm:$0xff]
        %v931 = vld [vmem:[%s214 + $0x510] sm:$0xff]
        %v932 = vld [vmem:[%s214 + $0x518] sm:$0xff]
        %v933 = vld [vmem:[%s214 + $0x520] sm:$0xff]
        %v934 = vld [vmem:[%s214 + $0x528] sm:$0xff]
        %v935 = vld [vmem:[%s214 + $0x530] sm:$0xff]
        %v936 = vld [vmem:[%s214 + $0x538] sm:$0xff]
        %v937 = vld [vmem:[%s214 + $0x540] sm:$0xff]
        %v938 = vld [vmem:[%s214 + $0x548] sm:$0xff]
        %v939 = vld [vmem:[%s214 + $0x550] sm:$0xff]
        %v940 = vld [vmem:[%s214 + $0x558] sm:$0xff]
        %v941 = vld [vmem:[%s214 + $0x560] sm:$0xff]
        %v942 = vld [vmem:[%s214 + $0x568] sm:$0xff]
        %v943 = vld [vmem:[%s214 + $0x570] sm:$0xff]
        %v944 = vld [vmem:[%s214 + $0x578] sm:$0xff]
        %v945 = vld [vmem:[%s214 + $0x580] sm:$0xff]
        %v946 = vld [vmem:[%s214 + $0x588] sm:$0xff]
        %v947 = vld [vmem:[%s214 + $0x590] sm:$0xff]
        %v948 = vld [vmem:[%s214 + $0x598] sm:$0xff]
        %v949 = vld [vmem:[%s214 + $0x5a0] sm:$0xff]
        %v950 = vld [vmem:[%s214 + $0x5a8] sm:$0xff]
        %v951 = vld [vmem:[%s214 + $0x5b0] sm:$0xff]
        %v952 = vld [vmem:[%s214 + $0x5b8] sm:$0xff]
        %v953 = vld [vmem:[%s214 + $0x5c0] sm:$0xff]
        %v954 = vld [vmem:[%s214 + $0x5c8] sm:$0xff]
        %v955 = vld [vmem:[%s214 + $0x5d0] sm:$0xff]
        %v956 = vld [vmem:[%s214 + $0x5d8] sm:$0xff]
        %v957 = vld [vmem:[%s214 + $0x5e0] sm:$0xff]
        %v958 = vld [vmem:[%s214 + $0x5e8] sm:$0xff]
        %v959 = vld [vmem:[%s214 + $0x5f0] sm:$0xff]
        %v960 = vld [vmem:[%s214 + $0x5f8] sm:$0xff]
        %v961 = vld [vmem:[%s214 + $0x600] sm:$0xff]
        %v962 = vld [vmem:[%s214 + $0x608] sm:$0xff]
        %v963 = vld [vmem:[%s214 + $0x610] sm:$0xff]
        %v964 = vld [vmem:[%s214 + $0x618] sm:$0xff]
        %v965 = vld [vmem:[%s214 + $0x620] sm:$0xff]
        %v966 = vld [vmem:[%s214 + $0x628] sm:$0xff]
        %v967 = vld [vmem:[%s214 + $0x630] sm:$0xff]
        %v968 = vld [vmem:[%s214 + $0x638] sm:$0xff]
        %v969 = vld [vmem:[%s214 + $0x640] sm:$0xff]
        %v970 = vld [vmem:[%s214 + $0x648] sm:$0xff]
        %v971 = vld [vmem:[%s214 + $0x650] sm:$0xff]
        %v972 = vld [vmem:[%s214 + $0x658] sm:$0xff]
        %v973 = vld [vmem:[%s214 + $0x660] sm:$0xff]
        %v974 = vld [vmem:[%s214 + $0x668] sm:$0xff]
        %v975 = vld [vmem:[%s214 + $0x670] sm:$0xff]
        %v976 = vld [vmem:[%s214 + $0x678] sm:$0xff]
        %v977 = vld [vmem:[%s214 + $0x680] sm:$0xff]
        %v978 = vld [vmem:[%s214 + $0x688] sm:$0xff]
        %v979 = vld [vmem:[%s214 + $0x690] sm:$0xff]
        %v980 = vld [vmem:[%s214 + $0x698] sm:$0xff]
        %v981 = vld [vmem:[%s214 + $0x6a0] sm:$0xff]
        %v982 = vld [vmem:[%s214 + $0x6a8] sm:$0xff]
        %v983 = vld [vmem:[%s214 + $0x6b0] sm:$0xff]
        %v984 = vld [vmem:[%s214 + $0x6b8] sm:$0xff]
        %v985 = vld [vmem:[%s214 + $0x6c0] sm:$0xff]
        %v986 = vld [vmem:[%s214 + $0x6c8] sm:$0xff]
        %v987 = vld [vmem:[%s214 + $0x6d0] sm:$0xff]
        %v988 = vld [vmem:[%s214 + $0x6d8] sm:$0xff]
        %v989 = vld [vmem:[%s214 + $0x6e0] sm:$0xff]
        %v990 = vld [vmem:[%s214 + $0x6e8] sm:$0xff]
        %v991 = vld [vmem:[%s214 + $0x6f0] sm:$0xff]
        %v992 = vld [vmem:[%s214 + $0x6f8] sm:$0xff]
        %v993 = vld [vmem:[%s214 + $0x700] sm:$0xff]
        %v994 = vld [vmem:[%s214 + $0x708] sm:$0xff]
        %v995 = vld [vmem:[%s214 + $0x710] sm:$0xff]
        %v996 = vld [vmem:[%s214 + $0x718] sm:$0xff]
        %v997 = vld [vmem:[%s214 + $0x720] sm:$0xff]
        %v998 = vld [vmem:[%s214 + $0x728] sm:$0xff]
        %v999 = vld [vmem:[%s214 + $0x730] sm:$0xff]
        %v1000 = vld [vmem:[%s214 + $0x738] sm:$0xff]
        %v1001 = vld [vmem:[%s214 + $0x740] sm:$0xff]
        %v1002 = vld [vmem:[%s214 + $0x748] sm:$0xff]
        %v1003 = vld [vmem:[%s214 + $0x750] sm:$0xff]
        %v1004 = vld [vmem:[%s214 + $0x758] sm:$0xff]
        %v1005 = vld [vmem:[%s214 + $0x760] sm:$0xff]
        %v1006 = vld [vmem:[%s214 + $0x768] sm:$0xff]
        %v1007 = vld [vmem:[%s214 + $0x770] sm:$0xff]
        %v1008 = vld [vmem:[%s214 + $0x778] sm:$0xff]
        %v1009 = vld [vmem:[%s214 + $0x780] sm:$0xff]
        %v1010 = vld [vmem:[%s214 + $0x788] sm:$0xff]
        %v1011 = vld [vmem:[%s214 + $0x790] sm:$0xff]
        %v1012 = vld [vmem:[%s214 + $0x798] sm:$0xff]
        %v1013 = vld [vmem:[%s214 + $0x7a0] sm:$0xff]
        %v1014 = vld [vmem:[%s214 + $0x7a8] sm:$0xff]
        %v1015 = vld [vmem:[%s214 + $0x7b0] sm:$0xff]
        %v1016 = vld [vmem:[%s214 + $0x7b8] sm:$0xff]
        %v1017 = vld [vmem:[%s214 + $0x7c0] sm:$0xff]
        %v1018 = vld [vmem:[%s214 + $0x7c8] sm:$0xff]
        %v1019 = vld [vmem:[%s214 + $0x7d0] sm:$0xff]
        %v1020 = vld [vmem:[%s214 + $0x7d8] sm:$0xff]
        %v1021 = vld [vmem:[%s214 + $0x7e0] sm:$0xff]
        %v1022 = vld [vmem:[%s214 + $0x7e8] sm:$0xff]
        %v1023 = vld [vmem:[%s214 + $0x7f0] sm:$0xff]
        %v1024 = vld [vmem:[%s214 + $0x7f8] sm:$0xff]
        %v1025 = vld [vmem:[%s214 + $0x800] sm:$0xff]
        %v1026 = vld [vmem:[%s214 + $0x808] sm:$0xff]
        %v1027 = vld [vmem:[%s214 + $0x810] sm:$0xff]
        %v1028 = vld [vmem:[%s214 + $0x818] sm:$0xff]
        %v1029 = vld [vmem:[%s214 + $0x820] sm:$0xff]
        %v1030 = vld [vmem:[%s214 + $0x828] sm:$0xff]
        %v1031 = vld [vmem:[%s214 + $0x830] sm:$0xff]
        %v1032 = vld [vmem:[%s214 + $0x838] sm:$0xff]
        %v1033 = vld [vmem:[%s214 + $0x840] sm:$0xff]
        %v1034 = vld [vmem:[%s214 + $0x848] sm:$0xff]
        %v1035 = vld [vmem:[%s214 + $0x850] sm:$0xff]
        %v1036 = vld [vmem:[%s214 + $0x858] sm:$0xff]
        %v1037 = vld [vmem:[%s214 + $0x860] sm:$0xff]
        %v1038 = vld [vmem:[%s214 + $0x868] sm:$0xff]
        %v1039 = vld [vmem:[%s214 + $0x870] sm:$0xff]
        %v1040 = vld [vmem:[%s214 + $0x878] sm:$0xff]
        %v1041 = vld [vmem:[%s214 + $0x880] sm:$0xff]
        %v1042 = vld [vmem:[%s214 + $0x888] sm:$0xff]
        %v1043 = vld [vmem:[%s214 + $0x890] sm:$0xff]
        %v1044 = vld [vmem:[%s214 + $0x898] sm:$0xff]
        %v1045 = vld [vmem:[%s214 + $0x8a0] sm:$0xff]
        %v1046 = vld [vmem:[%s214 + $0x8a8] sm:$0xff]
        %v1047 = vld [vmem:[%s214 + $0x8b0] sm:$0xff]
        %v1048 = vld [vmem:[%s214 + $0x8b8] sm:$0xff]
        %v1049 = vld [vmem:[%s214 + $0x8c0] sm:$0xff]
        %v1050 = vld [vmem:[%s214 + $0x8c8] sm:$0xff]
        %v1051 = vld [vmem:[%s214 + $0x8d0] sm:$0xff]
        %v1052 = vld [vmem:[%s214 + $0x8d8] sm:$0xff]
        %v1053 = vld [vmem:[%s214 + $0x8e0] sm:$0xff]
        %v1054 = vld [vmem:[%s214 + $0x8e8] sm:$0xff]
        %v1055 = vld [vmem:[%s214 + $0x8f0] sm:$0xff]
        %v1056 = vld [vmem:[%s214 + $0x8f8] sm:$0xff]
        %v1057 = vld [vmem:[%s214 + $0x900] sm:$0xff]
        %v1058 = vld [vmem:[%s214 + $0x908] sm:$0xff]
        %v1059 = vld [vmem:[%s214 + $0x910] sm:$0xff]
        %v1060 = vld [vmem:[%s214 + $0x918] sm:$0xff]
        %v1061 = vld [vmem:[%s214 + $0x920] sm:$0xff]
        %v1062 = vld [vmem:[%s214 + $0x928] sm:$0xff]
        %v1063 = vld [vmem:[%s214 + $0x930] sm:$0xff]
        %v1064 = vld [vmem:[%s214 + $0x938] sm:$0xff]
        %v1065 = vld [vmem:[%s214 + $0x940] sm:$0xff]
        %v1066 = vld [vmem:[%s214 + $0x948] sm:$0xff]
        %v1067 = vld [vmem:[%s214 + $0x950] sm:$0xff]
        %v1068 = vld [vmem:[%s214 + $0x958] sm:$0xff]
        %v1069 = vld [vmem:[%s214 + $0x960] sm:$0xff]
        %v1070 = vld [vmem:[%s214 + $0x968] sm:$0xff]
        %v1071 = vld [vmem:[%s214 + $0x970] sm:$0xff]
        %v1072 = vld [vmem:[%s214 + $0x978] sm:$0xff]
        %v1073 = vld [vmem:[%s214 + $0x980] sm:$0xff]
        %v1074 = vld [vmem:[%s214 + $0x988] sm:$0xff]
        %v1075 = vld [vmem:[%s214 + $0x990] sm:$0xff]
        %v1076 = vld [vmem:[%s214 + $0x998] sm:$0xff]
        %v1077 = vld [vmem:[%s214 + $0x9a0] sm:$0xff]
        %v1078 = vld [vmem:[%s214 + $0x9a8] sm:$0xff]
        %v1079 = vld [vmem:[%s214 + $0x9b0] sm:$0xff]
        %v1080 = vld [vmem:[%s214 + $0x9b8] sm:$0xff]
        %v1081 = vld [vmem:[%s214 + $0x9c0] sm:$0xff]
        %v1082 = vld [vmem:[%s214 + $0x9c8] sm:$0xff]
        %v1083 = vld [vmem:[%s214 + $0x9d0] sm:$0xff]
        %v1084 = vld [vmem:[%s214 + $0x9d8] sm:$0xff]
        %v1085 = vld [vmem:[%s214 + $0x9e0] sm:$0xff]
        %v1086 = vld [vmem:[%s214 + $0x9e8] sm:$0xff]
        %v1087 = vld [vmem:[%s214 + $0x9f0] sm:$0xff]
        %v1088 = vld [vmem:[%s214 + $0x9f8] sm:$0xff]
        %v1089 = vld [vmem:[%s214 + $0xa00] sm:$0xff]
        %v1090 = vld [vmem:[%s214 + $0xa08] sm:$0xff]
        %v1091 = vld [vmem:[%s214 + $0xa10] sm:$0xff]
        %v1092 = vld [vmem:[%s214 + $0xa18] sm:$0xff]
        %v1093 = vld [vmem:[%s214 + $0xa20] sm:$0xff]
        %v1094 = vld [vmem:[%s214 + $0xa28] sm:$0xff]
        %v1095 = vld [vmem:[%s214 + $0xa30] sm:$0xff]
        %v1096 = vld [vmem:[%s214 + $0xa38] sm:$0xff]
        %v1097 = vld [vmem:[%s214 + $0xa40] sm:$0xff]
        %v1098 = vld [vmem:[%s214 + $0xa48] sm:$0xff]
        %v1099 = vld [vmem:[%s214 + $0xa50] sm:$0xff]
        %v1100 = vld [vmem:[%s214 + $0xa58] sm:$0xff]
        %v1101 = vld [vmem:[%s214 + $0xa60] sm:$0xff]
        %v1102 = vld [vmem:[%s214 + $0xa68] sm:$0xff]
        %v1103 = vld [vmem:[%s214 + $0xa70] sm:$0xff]
        %v1104 = vld [vmem:[%s214 + $0xa78] sm:$0xff]
        %v1105 = vld [vmem:[%s214 + $0xa80] sm:$0xff]
        %v1106 = vld [vmem:[%s214 + $0xa88] sm:$0xff]
        %v1107 = vld [vmem:[%s214 + $0xa90] sm:$0xff]
        %v1108 = vld [vmem:[%s214 + $0xa98] sm:$0xff]
        %v1109 = vld [vmem:[%s214 + $0xaa0] sm:$0xff]
        %v1110 = vld [vmem:[%s214 + $0xaa8] sm:$0xff]
        %v1111 = vld [vmem:[%s214 + $0xab0] sm:$0xff]
        %v1112 = vld [vmem:[%s214 + $0xab8] sm:$0xff]
        %v1113 = vld [vmem:[%s214 + $0xac0] sm:$0xff]
        %v1114 = vld [vmem:[%s214 + $0xac8] sm:$0xff]
        %v1115 = vld [vmem:[%s214 + $0xad0] sm:$0xff]
        %v1116 = vld [vmem:[%s214 + $0xad8] sm:$0xff]
        %v1117 = vld [vmem:[%s214 + $0xae0] sm:$0xff]
        %v1118 = vld [vmem:[%s214 + $0xae8] sm:$0xff]
        %v1119 = vld [vmem:[%s214 + $0xaf0] sm:$0xff]
        %v1120 = vld [vmem:[%s214 + $0xaf8] sm:$0xff]
        %v1121 = vld [vmem:[%s214 + $0xb00] sm:$0xff]
        %v1122 = vld [vmem:[%s214 + $0xb08] sm:$0xff]
        %v1123 = vld [vmem:[%s214 + $0xb10] sm:$0xff]
        %v1124 = vld [vmem:[%s214 + $0xb18] sm:$0xff]
        %v1125 = vld [vmem:[%s214 + $0xb20] sm:$0xff]
        %v1126 = vld [vmem:[%s214 + $0xb28] sm:$0xff]
        %v1127 = vld [vmem:[%s214 + $0xb30] sm:$0xff]
        %v1128 = vld [vmem:[%s214 + $0xb38] sm:$0xff]
        %v1129 = vld [vmem:[%s214 + $0xb40] sm:$0xff]
        %v1130 = vld [vmem:[%s214 + $0xb48] sm:$0xff]
        %v1131 = vld [vmem:[%s214 + $0xb50] sm:$0xff]
        %v1132 = vld [vmem:[%s214 + $0xb58] sm:$0xff]
        %v1133 = vld [vmem:[%s214 + $0xb60] sm:$0xff]
        %v1134 = vld [vmem:[%s214 + $0xb68] sm:$0xff]
        %v1135 = vld [vmem:[%s214 + $0xb70] sm:$0xff]
        %v1136 = vld [vmem:[%s214 + $0xb78] sm:$0xff]
        %v1137 = vld [vmem:[%s214 + $0xb80] sm:$0xff]
        %v1138 = vld [vmem:[%s214 + $0xb88] sm:$0xff]
        %v1139 = vld [vmem:[%s214 + $0xb90] sm:$0xff]
        %v1140 = vld [vmem:[%s214 + $0xb98] sm:$0xff]
        %v1141 = vld [vmem:[%s214 + $0xba0] sm:$0xff]
        %v1142 = vld [vmem:[%s214 + $0xba8] sm:$0xff]
        %v1143 = vld [vmem:[%s214 + $0xbb0] sm:$0xff]
        %v1144 = vld [vmem:[%s214 + $0xbb8] sm:$0xff]
        %v1145 = vld [vmem:[%s214 + $0xbc0] sm:$0xff]
        %v1146 = vld [vmem:[%s214 + $0xbc8] sm:$0xff]
        %v1147 = vld [vmem:[%s214 + $0xbd0] sm:$0xff]
        %v1148 = vld [vmem:[%s214 + $0xbd8] sm:$0xff]
        %v1149 = vld [vmem:[%s214 + $0xbe0] sm:$0xff]
        %v1150 = vld [vmem:[%s214 + $0xbe8] sm:$0xff]
        %v1151 = vld [vmem:[%s214 + $0xbf0] sm:$0xff]
        %v1152 = vld [vmem:[%s214 + $0xbf8] sm:$0xff]
        %v1153 = vld [vmem:[%s214 + $0xc00] sm:$0xff]
        %v1154 = vld [vmem:[%s214 + $0xc08] sm:$0xff]
        %v1155 = vld [vmem:[%s214 + $0xc10] sm:$0xff]
        %v1156 = vld [vmem:[%s214 + $0xc18] sm:$0xff]
        %v1157 = vld [vmem:[%s214 + $0xc20] sm:$0xff]
        %v1158 = vld [vmem:[%s214 + $0xc28] sm:$0xff]
        %v1159 = vld [vmem:[%s214 + $0xc30] sm:$0xff]
        %v1160 = vld [vmem:[%s214 + $0xc38] sm:$0xff]
        %v1161 = vld [vmem:[%s214 + $0xc40] sm:$0xff]
        %v1162 = vld [vmem:[%s214 + $0xc48] sm:$0xff]
        %v1163 = vld [vmem:[%s214 + $0xc50] sm:$0xff]
        %v1164 = vld [vmem:[%s214 + $0xc58] sm:$0xff]
        %v1165 = vld [vmem:[%s214 + $0xc60] sm:$0xff]
        %v1166 = vld [vmem:[%s214 + $0xc68] sm:$0xff]
        %v1167 = vld [vmem:[%s214 + $0xc70] sm:$0xff]
        %v1168 = vld [vmem:[%s214 + $0xc78] sm:$0xff]
        %v1169 = vld [vmem:[%s214 + $0xc80] sm:$0xff]
        %v1170 = vld [vmem:[%s214 + $0xc88] sm:$0xff]
        %v1171 = vld [vmem:[%s214 + $0xc90] sm:$0xff]
        %v1172 = vld [vmem:[%s214 + $0xc98] sm:$0xff]
        %v1173 = vld [vmem:[%s214 + $0xca0] sm:$0xff]
        %v1174 = vld [vmem:[%s214 + $0xca8] sm:$0xff]
        %v1175 = vld [vmem:[%s214 + $0xcb0] sm:$0xff]
        %v1176 = vld [vmem:[%s214 + $0xcb8] sm:$0xff]
        %v1177 = vld [vmem:[%s214 + $0xcc0] sm:$0xff]
        %v1178 = vld [vmem:[%s214 + $0xcc8] sm:$0xff]
        %v1179 = vld [vmem:[%s214 + $0xcd0] sm:$0xff]
        %v1180 = vld [vmem:[%s214 + $0xcd8] sm:$0xff]
        %v1181 = vld [vmem:[%s214 + $0xce0] sm:$0xff]
        %v1182 = vld [vmem:[%s214 + $0xce8] sm:$0xff]
        %v1183 = vld [vmem:[%s214 + $0xcf0] sm:$0xff]
        %v1184 = vld [vmem:[%s214 + $0xcf8] sm:$0xff]
        %v1185 = vld [vmem:[%s214 + $0xd00] sm:$0xff]
        %v1186 = vld [vmem:[%s214 + $0xd08] sm:$0xff]
        %v1187 = vld [vmem:[%s214 + $0xd10] sm:$0xff]
        %v1188 = vld [vmem:[%s214 + $0xd18] sm:$0xff]
        %v1189 = vld [vmem:[%s214 + $0xd20] sm:$0xff]
        %v1190 = vld [vmem:[%s214 + $0xd28] sm:$0xff]
        %v1191 = vld [vmem:[%s214 + $0xd30] sm:$0xff]
        %v1192 = vld [vmem:[%s214 + $0xd38] sm:$0xff]
        %v1193 = vld [vmem:[%s214 + $0xd40] sm:$0xff]
        %v1194 = vld [vmem:[%s214 + $0xd48] sm:$0xff]
        %v1195 = vld [vmem:[%s214 + $0xd50] sm:$0xff]
        %v1196 = vld [vmem:[%s214 + $0xd58] sm:$0xff]
        %v1197 = vld [vmem:[%s214 + $0xd60] sm:$0xff]
        %v1198 = vld [vmem:[%s214 + $0xd68] sm:$0xff]
        %v1199 = vld [vmem:[%s214 + $0xd70] sm:$0xff]
        %v1200 = vld [vmem:[%s214 + $0xd78] sm:$0xff]
        %v1201 = vld [vmem:[%s214 + $0xd80] sm:$0xff]
        %v1202 = vld [vmem:[%s214 + $0xd88] sm:$0xff]
        %v1203 = vld [vmem:[%s214 + $0xd90] sm:$0xff]
        %v1204 = vld [vmem:[%s214 + $0xd98] sm:$0xff]
        %v1205 = vld [vmem:[%s214 + $0xda0] sm:$0xff]
        %v1206 = vld [vmem:[%s214 + $0xda8] sm:$0xff]
        %v1207 = vld [vmem:[%s214 + $0xdb0] sm:$0xff]
        %v1208 = vld [vmem:[%s214 + $0xdb8] sm:$0xff]
        %v1209 = vld [vmem:[%s214 + $0xdc0] sm:$0xff]
        %v1210 = vld [vmem:[%s214 + $0xdc8] sm:$0xff]
        %v1211 = vld [vmem:[%s214 + $0xdd0] sm:$0xff]
        %v1212 = vld [vmem:[%s214 + $0xdd8] sm:$0xff]
        %v1213 = vld [vmem:[%s214 + $0xde0] sm:$0xff]
        %v1214 = vld [vmem:[%s214 + $0xde8] sm:$0xff]
        %v1215 = vld [vmem:[%s214 + $0xdf0] sm:$0xff]
        %v1216 = vld [vmem:[%s214 + $0xdf8] sm:$0xff]
        %v1217 = vld [vmem:[%s214 + $0xe00] sm:$0xff]
        %v1218 = vld [vmem:[%s214 + $0xe08] sm:$0xff]
        %v1219 = vld [vmem:[%s214 + $0xe10] sm:$0xff]
        %v1220 = vld [vmem:[%s214 + $0xe18] sm:$0xff]
        %v1221 = vld [vmem:[%s214 + $0xe20] sm:$0xff]
        %v1222 = vld [vmem:[%s214 + $0xe28] sm:$0xff]
        %v1223 = vld [vmem:[%s214 + $0xe30] sm:$0xff]
        %v1224 = vld [vmem:[%s214 + $0xe38] sm:$0xff]
        %v1225 = vld [vmem:[%s214 + $0xe40] sm:$0xff]
        %v1226 = vld [vmem:[%s214 + $0xe48] sm:$0xff]
        %v1227 = vld [vmem:[%s214 + $0xe50] sm:$0xff]
        %v1228 = vld [vmem:[%s214 + $0xe58] sm:$0xff]
        %v1229 = vld [vmem:[%s214 + $0xe60] sm:$0xff]
        %v1230 = vld [vmem:[%s214 + $0xe68] sm:$0xff]
        %v1231 = vld [vmem:[%s214 + $0xe70] sm:$0xff]
        %v1232 = vld [vmem:[%s214 + $0xe78] sm:$0xff]
        %v1233 = vld [vmem:[%s214 + $0xe80] sm:$0xff]
        %v1234 = vld [vmem:[%s214 + $0xe88] sm:$0xff]
        %v1235 = vld [vmem:[%s214 + $0xe90] sm:$0xff]
        %v1236 = vld [vmem:[%s214 + $0xe98] sm:$0xff]
        %v1237 = vld [vmem:[%s214 + $0xea0] sm:$0xff]
        %v1238 = vld [vmem:[%s214 + $0xea8] sm:$0xff]
        %v1239 = vld [vmem:[%s214 + $0xeb0] sm:$0xff]
        %v1240 = vld [vmem:[%s214 + $0xeb8] sm:$0xff]
        %v1241 = vld [vmem:[%s214 + $0xec0] sm:$0xff]
        %v1242 = vld [vmem:[%s214 + $0xec8] sm:$0xff]
        %v1243 = vld [vmem:[%s214 + $0xed0] sm:$0xff]
        %v1244 = vld [vmem:[%s214 + $0xed8] sm:$0xff]
        %v1245 = vld [vmem:[%s214 + $0xee0] sm:$0xff]
        %v1246 = vld [vmem:[%s214 + $0xee8] sm:$0xff]
        %v1247 = vld [vmem:[%s214 + $0xef0] sm:$0xff]
        %v1248 = vld [vmem:[%s214 + $0xef8] sm:$0xff]
        %v1249 = vld [vmem:[%s214 + $0xf00] sm:$0xff]
        %v1250 = vld [vmem:[%s214 + $0xf08] sm:$0xff]
        %v1251 = vld [vmem:[%s214 + $0xf10] sm:$0xff]
        %v1252 = vld [vmem:[%s214 + $0xf18] sm:$0xff]
        %v1253 = vld [vmem:[%s214 + $0xf20] sm:$0xff]
        %v1254 = vld [vmem:[%s214 + $0xf28] sm:$0xff]
        %v1255 = vld [vmem:[%s214 + $0xf30] sm:$0xff]
        %v1256 = vld [vmem:[%s214 + $0xf38] sm:$0xff]
        %v1257 = vld [vmem:[%s214 + $0xf40] sm:$0xff]
        %v1258 = vld [vmem:[%s214 + $0xf48] sm:$0xff]
        %v1259 = vld [vmem:[%s214 + $0xf50] sm:$0xff]
        %v1260 = vld [vmem:[%s214 + $0xf58] sm:$0xff]
        %v1261 = vld [vmem:[%s214 + $0xf60] sm:$0xff]
        %v1262 = vld [vmem:[%s214 + $0xf68] sm:$0xff]
        %v1263 = vld [vmem:[%s214 + $0xf70] sm:$0xff]
        %v1264 = vld [vmem:[%s214 + $0xf78] sm:$0xff]
        %v1265 = vld [vmem:[%s214 + $0xf80] sm:$0xff]
        %v1266 = vld [vmem:[%s214 + $0xf88] sm:$0xff]
        %v1267 = vld [vmem:[%s214 + $0xf90] sm:$0xff]
        %v1268 = vld [vmem:[%s214 + $0xf98] sm:$0xff]
        %v1269 = vld [vmem:[%s214 + $0xfa0] sm:$0xff]
        %v1270 = vld [vmem:[%s214 + $0xfa8] sm:$0xff]
        %v1271 = vld [vmem:[%s214 + $0xfb0] sm:$0xff]
        %v1272 = vld [vmem:[%s214 + $0xfb8] sm:$0xff]
        %v1273 = vld [vmem:[%s214 + $0xfc0] sm:$0xff]
        %v1274 = vld [vmem:[%s214 + $0xfc8] sm:$0xff]
        %v1275 = vld [vmem:[%s214 + $0xfd0] sm:$0xff]
        %v1276 = vld [vmem:[%s214 + $0xfd8] sm:$0xff]
        %v1277 = vld [vmem:[%s214 + $0xfe0] sm:$0xff]
        %v1278 = vld [vmem:[%s214 + $0xfe8] sm:$0xff]
        %v1279 = vld [vmem:[%s214 + $0xff0] sm:$0xff]
        %v1280 = vld [vmem:[%s214 + $0xff8] sm:$0xff]
        %v1281 = vsub.f32 %v257, %v769
        %v1282 = vsub.f32 %v258, %v770
        %v1283 = vsub.f32 %v259, %v771
        %v1284 = vsub.f32 %v260, %v772
        %v1285 = vsub.f32 %v261, %v773
        %v1286 = vsub.f32 %v262, %v774
        %v1287 = vsub.f32 %v263, %v775
        %v1288 = vsub.f32 %v264, %v776
        %v1289 = vsub.f32 %v265, %v777
        %v1290 = vsub.f32 %v266, %v778
        %v1291 = vsub.f32 %v267, %v779
        %v1292 = vsub.f32 %v268, %v780
        %v1293 = vsub.f32 %v269, %v781
        %v1294 = vsub.f32 %v270, %v782
        %v1295 = vsub.f32 %v271, %v783
        %v1296 = vsub.f32 %v272, %v784
        %v1297 = vsub.f32 %v273, %v785
        %v1298 = vsub.f32 %v274, %v786
        %v1299 = vsub.f32 %v275, %v787
        %v1300 = vsub.f32 %v276, %v788
        %v1301 = vsub.f32 %v277, %v789
        %v1302 = vsub.f32 %v278, %v790
        %v1303 = vsub.f32 %v279, %v791
        %v1304 = vsub.f32 %v280, %v792
        %v1305 = vsub.f32 %v281, %v793
        %v1306 = vsub.f32 %v282, %v794
        %v1307 = vsub.f32 %v283, %v795
        %v1308 = vsub.f32 %v284, %v796
        %v1309 = vsub.f32 %v285, %v797
        %v1310 = vsub.f32 %v286, %v798
        %v1311 = vsub.f32 %v287, %v799
        %v1312 = vsub.f32 %v288, %v800
        %v1313 = vsub.f32 %v289, %v801
        %v1314 = vsub.f32 %v290, %v802
        %v1315 = vsub.f32 %v291, %v803
        %v1316 = vsub.f32 %v292, %v804
        %v1317 = vsub.f32 %v293, %v805
        %v1318 = vsub.f32 %v294, %v806
        %v1319 = vsub.f32 %v295, %v807
        %v1320 = vsub.f32 %v296, %v808
        %v1321 = vsub.f32 %v297, %v809
        %v1322 = vsub.f32 %v298, %v810
        %v1323 = vsub.f32 %v299, %v811
        %v1324 = vsub.f32 %v300, %v812
        %v1325 = vsub.f32 %v301, %v813
        %v1326 = vsub.f32 %v302, %v814
        %v1327 = vsub.f32 %v303, %v815
        %v1328 = vsub.f32 %v304, %v816
        %v1329 = vsub.f32 %v305, %v817
        %v1330 = vsub.f32 %v306, %v818
        %v1331 = vsub.f32 %v307, %v819
        %v1332 = vsub.f32 %v308, %v820
        %v1333 = vsub.f32 %v309, %v821
        %v1334 = vsub.f32 %v310, %v822
        %v1335 = vsub.f32 %v311, %v823
        %v1336 = vsub.f32 %v312, %v824
        %v1337 = vsub.f32 %v313, %v825
        %v1338 = vsub.f32 %v314, %v826
        %v1339 = vsub.f32 %v315, %v827
        %v1340 = vsub.f32 %v316, %v828
        %v1341 = vsub.f32 %v317, %v829
        %v1342 = vsub.f32 %v318, %v830
        %v1343 = vsub.f32 %v319, %v831
        %v1344 = vsub.f32 %v320, %v832
        %v1345 = vsub.f32 %v321, %v833
        %v1346 = vsub.f32 %v322, %v834
        %v1347 = vsub.f32 %v323, %v835
        %v1348 = vsub.f32 %v324, %v836
        %v1349 = vsub.f32 %v325, %v837
        %v1350 = vsub.f32 %v326, %v838
        %v1351 = vsub.f32 %v327, %v839
        %v1352 = vsub.f32 %v328, %v840
        %v1353 = vsub.f32 %v329, %v841
        %v1354 = vsub.f32 %v330, %v842
        %v1355 = vsub.f32 %v331, %v843
        %v1356 = vsub.f32 %v332, %v844
        %v1357 = vsub.f32 %v333, %v845
        %v1358 = vsub.f32 %v334, %v846
        %v1359 = vsub.f32 %v335, %v847
        %v1360 = vsub.f32 %v336, %v848
        %v1361 = vsub.f32 %v337, %v849
        %v1362 = vsub.f32 %v338, %v850
        %v1363 = vsub.f32 %v339, %v851
        %v1364 = vsub.f32 %v340, %v852
        %v1365 = vsub.f32 %v341, %v853
        %v1366 = vsub.f32 %v342, %v854
        %v1367 = vsub.f32 %v343, %v855
        %v1368 = vsub.f32 %v344, %v856
        %v1369 = vsub.f32 %v345, %v857
        %v1370 = vsub.f32 %v346, %v858
        %v1371 = vsub.f32 %v347, %v859
        %v1372 = vsub.f32 %v348, %v860
        %v1373 = vsub.f32 %v349, %v861
        %v1374 = vsub.f32 %v350, %v862
        %v1375 = vsub.f32 %v351, %v863
        %v1376 = vsub.f32 %v352, %v864
        %v1377 = vsub.f32 %v353, %v865
        %v1378 = vsub.f32 %v354, %v866
        %v1379 = vsub.f32 %v355, %v867
        %v1380 = vsub.f32 %v356, %v868
        %v1381 = vsub.f32 %v357, %v869
        %v1382 = vsub.f32 %v358, %v870
        %v1383 = vsub.f32 %v359, %v871
        %v1384 = vsub.f32 %v360, %v872
        %v1385 = vsub.f32 %v361, %v873
        %v1386 = vsub.f32 %v362, %v874
        %v1387 = vsub.f32 %v363, %v875
        %v1388 = vsub.f32 %v364, %v876
        %v1389 = vsub.f32 %v365, %v877
        %v1390 = vsub.f32 %v366, %v878
        %v1391 = vsub.f32 %v367, %v879
        %v1392 = vsub.f32 %v368, %v880
        %v1393 = vsub.f32 %v369, %v881
        %v1394 = vsub.f32 %v370, %v882
        %v1395 = vsub.f32 %v371, %v883
        %v1396 = vsub.f32 %v372, %v884
        %v1397 = vsub.f32 %v373, %v885
        %v1398 = vsub.f32 %v374, %v886
        %v1399 = vsub.f32 %v375, %v887
        %v1400 = vsub.f32 %v376, %v888
        %v1401 = vsub.f32 %v377, %v889
        %v1402 = vsub.f32 %v378, %v890
        %v1403 = vsub.f32 %v379, %v891
        %v1404 = vsub.f32 %v380, %v892
        %v1405 = vsub.f32 %v381, %v893
        %v1406 = vsub.f32 %v382, %v894
        %v1407 = vsub.f32 %v383, %v895
        %v1408 = vsub.f32 %v384, %v896
        %v1409 = vsub.f32 %v385, %v897
        %v1410 = vsub.f32 %v386, %v898
        %v1411 = vsub.f32 %v387, %v899
        %v1412 = vsub.f32 %v388, %v900
        %v1413 = vsub.f32 %v389, %v901
        %v1414 = vsub.f32 %v390, %v902
        %v1415 = vsub.f32 %v391, %v903
        %v1416 = vsub.f32 %v392, %v904
        %v1417 = vsub.f32 %v393, %v905
        %v1418 = vsub.f32 %v394, %v906
        %v1419 = vsub.f32 %v395, %v907
        %v1420 = vsub.f32 %v396, %v908
        %v1421 = vsub.f32 %v397, %v909
        %v1422 = vsub.f32 %v398, %v910
        %v1423 = vsub.f32 %v399, %v911
        %v1424 = vsub.f32 %v400, %v912
        %v1425 = vsub.f32 %v401, %v913
        %v1426 = vsub.f32 %v402, %v914
        %v1427 = vsub.f32 %v403, %v915
        %v1428 = vsub.f32 %v404, %v916
        %v1429 = vsub.f32 %v405, %v917
        %v1430 = vsub.f32 %v406, %v918
        %v1431 = vsub.f32 %v407, %v919
        %v1432 = vsub.f32 %v408, %v920
        %v1433 = vsub.f32 %v409, %v921
        %v1434 = vsub.f32 %v410, %v922
        %v1435 = vsub.f32 %v411, %v923
        %v1436 = vsub.f32 %v412, %v924
        %v1437 = vsub.f32 %v413, %v925
        %v1438 = vsub.f32 %v414, %v926
        %v1439 = vsub.f32 %v415, %v927
        %v1440 = vsub.f32 %v416, %v928
        %v1441 = vsub.f32 %v417, %v929
        %v1442 = vsub.f32 %v418, %v930
        %v1443 = vsub.f32 %v419, %v931
        %v1444 = vsub.f32 %v420, %v932
        %v1445 = vsub.f32 %v421, %v933
        %v1446 = vsub.f32 %v422, %v934
        %v1447 = vsub.f32 %v423, %v935
        %v1448 = vsub.f32 %v424, %v936
        %v1449 = vsub.f32 %v425, %v937
        %v1450 = vsub.f32 %v426, %v938
        %v1451 = vsub.f32 %v427, %v939
        %v1452 = vsub.f32 %v428, %v940
        %v1453 = vsub.f32 %v429, %v941
        %v1454 = vsub.f32 %v430, %v942
        %v1455 = vsub.f32 %v431, %v943
        %v1456 = vsub.f32 %v432, %v944
        %v1457 = vsub.f32 %v433, %v945
        %v1458 = vsub.f32 %v434, %v946
        %v1459 = vsub.f32 %v435, %v947
        %v1460 = vsub.f32 %v436, %v948
        %v1461 = vsub.f32 %v437, %v949
        %v1462 = vsub.f32 %v438, %v950
        %v1463 = vsub.f32 %v439, %v951
        %v1464 = vsub.f32 %v440, %v952
        %v1465 = vsub.f32 %v441, %v953
        %v1466 = vsub.f32 %v442, %v954
        %v1467 = vsub.f32 %v443, %v955
        %v1468 = vsub.f32 %v444, %v956
        %v1469 = vsub.f32 %v445, %v957
        %v1470 = vsub.f32 %v446, %v958
        %v1471 = vsub.f32 %v447, %v959
        %v1472 = vsub.f32 %v448, %v960
        %v1473 = vsub.f32 %v449, %v961
        %v1474 = vsub.f32 %v450, %v962
        %v1475 = vsub.f32 %v451, %v963
        %v1476 = vsub.f32 %v452, %v964
        %v1477 = vsub.f32 %v453, %v965
        %v1478 = vsub.f32 %v454, %v966
        %v1479 = vsub.f32 %v455, %v967
        %v1480 = vsub.f32 %v456, %v968
        %v1481 = vsub.f32 %v457, %v969
        %v1482 = vsub.f32 %v458, %v970
        %v1483 = vsub.f32 %v459, %v971
        %v1484 = vsub.f32 %v460, %v972
        %v1485 = vsub.f32 %v461, %v973
        %v1486 = vsub.f32 %v462, %v974
        %v1487 = vsub.f32 %v463, %v975
        %v1488 = vsub.f32 %v464, %v976
        %v1489 = vsub.f32 %v465, %v977
        %v1490 = vsub.f32 %v466, %v978
        %v1491 = vsub.f32 %v467, %v979
        %v1492 = vsub.f32 %v468, %v980
        %v1493 = vsub.f32 %v469, %v981
        %v1494 = vsub.f32 %v470, %v982
        %v1495 = vsub.f32 %v471, %v983
        %v1496 = vsub.f32 %v472, %v984
        %v1497 = vsub.f32 %v473, %v985
        %v1498 = vsub.f32 %v474, %v986
        %v1499 = vsub.f32 %v475, %v987
        %v1500 = vsub.f32 %v476, %v988
        %v1501 = vsub.f32 %v477, %v989
        %v1502 = vsub.f32 %v478, %v990
        %v1503 = vsub.f32 %v479, %v991
        %v1504 = vsub.f32 %v480, %v992
        %v1505 = vsub.f32 %v481, %v993
        %v1506 = vsub.f32 %v482, %v994
        %v1507 = vsub.f32 %v483, %v995
        %v1508 = vsub.f32 %v484, %v996
        %v1509 = vsub.f32 %v485, %v997
        %v1510 = vsub.f32 %v486, %v998
        %v1511 = vsub.f32 %v487, %v999
        %v1512 = vsub.f32 %v488, %v1000
        %v1513 = vsub.f32 %v489, %v1001
        %v1514 = vsub.f32 %v490, %v1002
        %v1515 = vsub.f32 %v491, %v1003
        %v1516 = vsub.f32 %v492, %v1004
        %v1517 = vsub.f32 %v493, %v1005
        %v1518 = vsub.f32 %v494, %v1006
        %v1519 = vsub.f32 %v495, %v1007
        %v1520 = vsub.f32 %v496, %v1008
        %v1521 = vsub.f32 %v497, %v1009
        %v1522 = vsub.f32 %v498, %v1010
        %v1523 = vsub.f32 %v499, %v1011
        %v1524 = vsub.f32 %v500, %v1012
        %v1525 = vsub.f32 %v501, %v1013
        %v1526 = vsub.f32 %v502, %v1014
        %v1527 = vsub.f32 %v503, %v1015
        %v1528 = vsub.f32 %v504, %v1016
        %v1529 = vsub.f32 %v505, %v1017
        %v1530 = vsub.f32 %v506, %v1018
        %v1531 = vsub.f32 %v507, %v1019
        %v1532 = vsub.f32 %v508, %v1020
        %v1533 = vsub.f32 %v509, %v1021
        %v1534 = vsub.f32 %v510, %v1022
        %v1535 = vsub.f32 %v511, %v1023
        %v1536 = vsub.f32 %v512, %v1024
        %v1537 = vsub.f32 %v513, %v1025
        %v1538 = vsub.f32 %v514, %v1026
        %v1539 = vsub.f32 %v515, %v1027
        %v1540 = vsub.f32 %v516, %v1028
        %v1541 = vsub.f32 %v517, %v1029
        %v1542 = vsub.f32 %v518, %v1030
        %v1543 = vsub.f32 %v519, %v1031
        %v1544 = vsub.f32 %v520, %v1032
        %v1545 = vsub.f32 %v521, %v1033
        %v1546 = vsub.f32 %v522, %v1034
        %v1547 = vsub.f32 %v523, %v1035
        %v1548 = vsub.f32 %v524, %v1036
        %v1549 = vsub.f32 %v525, %v1037
        %v1550 = vsub.f32 %v526, %v1038
        %v1551 = vsub.f32 %v527, %v1039
        %v1552 = vsub.f32 %v528, %v1040
        %v1553 = vsub.f32 %v529, %v1041
        %v1554 = vsub.f32 %v530, %v1042
        %v1555 = vsub.f32 %v531, %v1043
        %v1556 = vsub.f32 %v532, %v1044
        %v1557 = vsub.f32 %v533, %v1045
        %v1558 = vsub.f32 %v534, %v1046
        %v1559 = vsub.f32 %v535, %v1047
        %v1560 = vsub.f32 %v536, %v1048
        %v1561 = vsub.f32 %v537, %v1049
        %v1562 = vsub.f32 %v538, %v1050
        %v1563 = vsub.f32 %v539, %v1051
        %v1564 = vsub.f32 %v540, %v1052
        %v1565 = vsub.f32 %v541, %v1053
        %v1566 = vsub.f32 %v542, %v1054
        %v1567 = vsub.f32 %v543, %v1055
        %v1568 = vsub.f32 %v544, %v1056
        %v1569 = vsub.f32 %v545, %v1057
        %v1570 = vsub.f32 %v546, %v1058
        %v1571 = vsub.f32 %v547, %v1059
        %v1572 = vsub.f32 %v548, %v1060
        %v1573 = vsub.f32 %v549, %v1061
        %v1574 = vsub.f32 %v550, %v1062
        %v1575 = vsub.f32 %v551, %v1063
        %v1576 = vsub.f32 %v552, %v1064
        %v1577 = vsub.f32 %v553, %v1065
        %v1578 = vsub.f32 %v554, %v1066
        %v1579 = vsub.f32 %v555, %v1067
        %v1580 = vsub.f32 %v556, %v1068
        %v1581 = vsub.f32 %v557, %v1069
        %v1582 = vsub.f32 %v558, %v1070
        %v1583 = vsub.f32 %v559, %v1071
        %v1584 = vsub.f32 %v560, %v1072
        %v1585 = vsub.f32 %v561, %v1073
        %v1586 = vsub.f32 %v562, %v1074
        %v1587 = vsub.f32 %v563, %v1075
        %v1588 = vsub.f32 %v564, %v1076
        %v1589 = vsub.f32 %v565, %v1077
        %v1590 = vsub.f32 %v566, %v1078
        %v1591 = vsub.f32 %v567, %v1079
        %v1592 = vsub.f32 %v568, %v1080
        %v1593 = vsub.f32 %v569, %v1081
        %v1594 = vsub.f32 %v570, %v1082
        %v1595 = vsub.f32 %v571, %v1083
        %v1596 = vsub.f32 %v572, %v1084
        %v1597 = vsub.f32 %v573, %v1085
        %v1598 = vsub.f32 %v574, %v1086
        %v1599 = vsub.f32 %v575, %v1087
        %v1600 = vsub.f32 %v576, %v1088
        %v1601 = vsub.f32 %v577, %v1089
        %v1602 = vsub.f32 %v578, %v1090
        %v1603 = vsub.f32 %v579, %v1091
        %v1604 = vsub.f32 %v580, %v1092
        %v1605 = vsub.f32 %v581, %v1093
        %v1606 = vsub.f32 %v582, %v1094
        %v1607 = vsub.f32 %v583, %v1095
        %v1608 = vsub.f32 %v584, %v1096
        %v1609 = vsub.f32 %v585, %v1097
        %v1610 = vsub.f32 %v586, %v1098
        %v1611 = vsub.f32 %v587, %v1099
        %v1612 = vsub.f32 %v588, %v1100
        %v1613 = vsub.f32 %v589, %v1101
        %v1614 = vsub.f32 %v590, %v1102
        %v1615 = vsub.f32 %v591, %v1103
        %v1616 = vsub.f32 %v592, %v1104
        %v1617 = vsub.f32 %v593, %v1105
        %v1618 = vsub.f32 %v594, %v1106
        %v1619 = vsub.f32 %v595, %v1107
        %v1620 = vsub.f32 %v596, %v1108
        %v1621 = vsub.f32 %v597, %v1109
        %v1622 = vsub.f32 %v598, %v1110
        %v1623 = vsub.f32 %v599, %v1111
        %v1624 = vsub.f32 %v600, %v1112
        %v1625 = vsub.f32 %v601, %v1113
        %v1626 = vsub.f32 %v602, %v1114
        %v1627 = vsub.f32 %v603, %v1115
        %v1628 = vsub.f32 %v604, %v1116
        %v1629 = vsub.f32 %v605, %v1117
        %v1630 = vsub.f32 %v606, %v1118
        %v1631 = vsub.f32 %v607, %v1119
        %v1632 = vsub.f32 %v608, %v1120
        %v1633 = vsub.f32 %v609, %v1121
        %v1634 = vsub.f32 %v610, %v1122
        %v1635 = vsub.f32 %v611, %v1123
        %v1636 = vsub.f32 %v612, %v1124
        %v1637 = vsub.f32 %v613, %v1125
        %v1638 = vsub.f32 %v614, %v1126
        %v1639 = vsub.f32 %v615, %v1127
        %v1640 = vsub.f32 %v616, %v1128
        %v1641 = vsub.f32 %v617, %v1129
        %v1642 = vsub.f32 %v618, %v1130
        %v1643 = vsub.f32 %v619, %v1131
        %v1644 = vsub.f32 %v620, %v1132
        %v1645 = vsub.f32 %v621, %v1133
        %v1646 = vsub.f32 %v622, %v1134
        %v1647 = vsub.f32 %v623, %v1135
        %v1648 = vsub.f32 %v624, %v1136
        %v1649 = vsub.f32 %v625, %v1137
        %v1650 = vsub.f32 %v626, %v1138
        %v1651 = vsub.f32 %v627, %v1139
        %v1652 = vsub.f32 %v628, %v1140
        %v1653 = vsub.f32 %v629, %v1141
        %v1654 = vsub.f32 %v630, %v1142
        %v1655 = vsub.f32 %v631, %v1143
        %v1656 = vsub.f32 %v632, %v1144
        %v1657 = vsub.f32 %v633, %v1145
        %v1658 = vsub.f32 %v634, %v1146
        %v1659 = vsub.f32 %v635, %v1147
        %v1660 = vsub.f32 %v636, %v1148
        %v1661 = vsub.f32 %v637, %v1149
        %v1662 = vsub.f32 %v638, %v1150
        %v1663 = vsub.f32 %v639, %v1151
        %v1664 = vsub.f32 %v640, %v1152
        %v1665 = vsub.f32 %v641, %v1153
        %v1666 = vsub.f32 %v642, %v1154
        %v1667 = vsub.f32 %v643, %v1155
        %v1668 = vsub.f32 %v644, %v1156
        %v1669 = vsub.f32 %v645, %v1157
        %v1670 = vsub.f32 %v646, %v1158
        %v1671 = vsub.f32 %v647, %v1159
        %v1672 = vsub.f32 %v648, %v1160
        %v1673 = vsub.f32 %v649, %v1161
        %v1674 = vsub.f32 %v650, %v1162
        %v1675 = vsub.f32 %v651, %v1163
        %v1676 = vsub.f32 %v652, %v1164
        %v1677 = vsub.f32 %v653, %v1165
        %v1678 = vsub.f32 %v654, %v1166
        %v1679 = vsub.f32 %v655, %v1167
        %v1680 = vsub.f32 %v656, %v1168
        %v1681 = vsub.f32 %v657, %v1169
        %v1682 = vsub.f32 %v658, %v1170
        %v1683 = vsub.f32 %v659, %v1171
        %v1684 = vsub.f32 %v660, %v1172
        %v1685 = vsub.f32 %v661, %v1173
        %v1686 = vsub.f32 %v662, %v1174
        %v1687 = vsub.f32 %v663, %v1175
        %v1688 = vsub.f32 %v664, %v1176
        %v1689 = vsub.f32 %v665, %v1177
        %v1690 = vsub.f32 %v666, %v1178
        %v1691 = vsub.f32 %v667, %v1179
        %v1692 = vsub.f32 %v668, %v1180
        %v1693 = vsub.f32 %v669, %v1181
        %v1694 = vsub.f32 %v670, %v1182
        %v1695 = vsub.f32 %v671, %v1183
        %v1696 = vsub.f32 %v672, %v1184
        %v1697 = vsub.f32 %v673, %v1185
        %v1698 = vsub.f32 %v674, %v1186
        %v1699 = vsub.f32 %v675, %v1187
        %v1700 = vsub.f32 %v676, %v1188
        %v1701 = vsub.f32 %v677, %v1189
        %v1702 = vsub.f32 %v678, %v1190
        %v1703 = vsub.f32 %v679, %v1191
        %v1704 = vsub.f32 %v680, %v1192
        %v1705 = vsub.f32 %v681, %v1193
        %v1706 = vsub.f32 %v682, %v1194
        %v1707 = vsub.f32 %v683, %v1195
        %v1708 = vsub.f32 %v684, %v1196
        %v1709 = vsub.f32 %v685, %v1197
        %v1710 = vsub.f32 %v686, %v1198
        %v1711 = vsub.f32 %v687, %v1199
        %v1712 = vsub.f32 %v688, %v1200
        %v1713 = vsub.f32 %v689, %v1201
        %v1714 = vsub.f32 %v690, %v1202
        %v1715 = vsub.f32 %v691, %v1203
        %v1716 = vsub.f32 %v692, %v1204
        %v1717 = vsub.f32 %v693, %v1205
        %v1718 = vsub.f32 %v694, %v1206
        %v1719 = vsub.f32 %v695, %v1207
        %v1720 = vsub.f32 %v696, %v1208
        %v1721 = vsub.f32 %v697, %v1209
        %v1722 = vsub.f32 %v698, %v1210
        %v1723 = vsub.f32 %v699, %v1211
        %v1724 = vsub.f32 %v700, %v1212
        %v1725 = vsub.f32 %v701, %v1213
        %v1726 = vsub.f32 %v702, %v1214
        %v1727 = vsub.f32 %v703, %v1215
        %v1728 = vsub.f32 %v704, %v1216
        %v1729 = vsub.f32 %v705, %v1217
        %v1730 = vsub.f32 %v706, %v1218
        %v1731 = vsub.f32 %v707, %v1219
        %v1732 = vsub.f32 %v708, %v1220
        %v1733 = vsub.f32 %v709, %v1221
        %v1734 = vsub.f32 %v710, %v1222
        %v1735 = vsub.f32 %v711, %v1223
        %v1736 = vsub.f32 %v712, %v1224
        %v1737 = vsub.f32 %v713, %v1225
        %v1738 = vsub.f32 %v714, %v1226
        %v1739 = vsub.f32 %v715, %v1227
        %v1740 = vsub.f32 %v716, %v1228
        %v1741 = vsub.f32 %v717, %v1229
        %v1742 = vsub.f32 %v718, %v1230
        %v1743 = vsub.f32 %v719, %v1231
        %v1744 = vsub.f32 %v720, %v1232
        %v1745 = vsub.f32 %v721, %v1233
        %v1746 = vsub.f32 %v722, %v1234
        %v1747 = vsub.f32 %v723, %v1235
        %v1748 = vsub.f32 %v724, %v1236
        %v1749 = vsub.f32 %v725, %v1237
        %v1750 = vsub.f32 %v726, %v1238
        %v1751 = vsub.f32 %v727, %v1239
        %v1752 = vsub.f32 %v728, %v1240
        %v1753 = vsub.f32 %v729, %v1241
        %v1754 = vsub.f32 %v730, %v1242
        %v1755 = vsub.f32 %v731, %v1243
        %v1756 = vsub.f32 %v732, %v1244
        %v1757 = vsub.f32 %v733, %v1245
        %v1758 = vsub.f32 %v734, %v1246
        %v1759 = vsub.f32 %v735, %v1247
        %v1760 = vsub.f32 %v736, %v1248
        %v1761 = vsub.f32 %v737, %v1249
        %v1762 = vsub.f32 %v738, %v1250
        %v1763 = vsub.f32 %v739, %v1251
        %v1764 = vsub.f32 %v740, %v1252
        %v1765 = vsub.f32 %v741, %v1253
        %v1766 = vsub.f32 %v742, %v1254
        %v1767 = vsub.f32 %v743, %v1255
        %v1768 = vsub.f32 %v744, %v1256
        %v1769 = vsub.f32 %v745, %v1257
        %v1770 = vsub.f32 %v746, %v1258
        %v1771 = vsub.f32 %v747, %v1259
        %v1772 = vsub.f32 %v748, %v1260
        %v1773 = vsub.f32 %v749, %v1261
        %v1774 = vsub.f32 %v750, %v1262
        %v1775 = vsub.f32 %v751, %v1263
        %v1776 = vsub.f32 %v752, %v1264
        %v1777 = vsub.f32 %v753, %v1265
        %v1778 = vsub.f32 %v754, %v1266
        %v1779 = vsub.f32 %v755, %v1267
        %v1780 = vsub.f32 %v756, %v1268
        %v1781 = vsub.f32 %v757, %v1269
        %v1782 = vsub.f32 %v758, %v1270
        %v1783 = vsub.f32 %v759, %v1271
        %v1784 = vsub.f32 %v760, %v1272
        %v1785 = vsub.f32 %v761, %v1273
        %v1786 = vsub.f32 %v762, %v1274
        %v1787 = vsub.f32 %v763, %v1275
        %v1788 = vsub.f32 %v764, %v1276
        %v1789 = vsub.f32 %v765, %v1277
        %v1790 = vsub.f32 %v766, %v1278
        %v1791 = vsub.f32 %v767, %v1279
        %v1792 = vsub.f32 %v768, %v1280
        %v1793 = vmul.f32 %v1281, %v1281
        %v1794 = vmul.f32 %v1282, %v1282
        %v1795 = vmul.f32 %v1283, %v1283
        %v1796 = vmul.f32 %v1284, %v1284
        %v1797 = vmul.f32 %v1285, %v1285
        %v1798 = vmul.f32 %v1286, %v1286
        %v1799 = vmul.f32 %v1287, %v1287
        %v1800 = vmul.f32 %v1288, %v1288
        %v1801 = vmul.f32 %v1289, %v1289
        %v1802 = vmul.f32 %v1290, %v1290
        %v1803 = vmul.f32 %v1291, %v1291
        %v1804 = vmul.f32 %v1292, %v1292
        %v1805 = vmul.f32 %v1293, %v1293
        %v1806 = vmul.f32 %v1294, %v1294
        %v1807 = vmul.f32 %v1295, %v1295
        %v1808 = vmul.f32 %v1296, %v1296
        %v1809 = vmul.f32 %v1297, %v1297
        %v1810 = vmul.f32 %v1298, %v1298
        %v1811 = vmul.f32 %v1299, %v1299
        %v1812 = vmul.f32 %v1300, %v1300
        %v1813 = vmul.f32 %v1301, %v1301
        %v1814 = vmul.f32 %v1302, %v1302
        %v1815 = vmul.f32 %v1303, %v1303
        %v1816 = vmul.f32 %v1304, %v1304
        %v1817 = vmul.f32 %v1305, %v1305
        %v1818 = vmul.f32 %v1306, %v1306
        %v1819 = vmul.f32 %v1307, %v1307
        %v1820 = vmul.f32 %v1308, %v1308
        %v1821 = vmul.f32 %v1309, %v1309
        %v1822 = vmul.f32 %v1310, %v1310
        %v1823 = vmul.f32 %v1311, %v1311
        %v1824 = vmul.f32 %v1312, %v1312
        %v1825 = vmul.f32 %v1313, %v1313
        %v1826 = vmul.f32 %v1314, %v1314
        %v1827 = vmul.f32 %v1315, %v1315
        %v1828 = vmul.f32 %v1316, %v1316
        %v1829 = vmul.f32 %v1317, %v1317
        %v1830 = vmul.f32 %v1318, %v1318
        %v1831 = vmul.f32 %v1319, %v1319
        %v1832 = vmul.f32 %v1320, %v1320
        %v1833 = vmul.f32 %v1321, %v1321
        %v1834 = vmul.f32 %v1322, %v1322
        %v1835 = vmul.f32 %v1323, %v1323
        %v1836 = vmul.f32 %v1324, %v1324
        %v1837 = vmul.f32 %v1325, %v1325
        %v1838 = vmul.f32 %v1326, %v1326
        %v1839 = vmul.f32 %v1327, %v1327
        %v1840 = vmul.f32 %v1328, %v1328
        %v1841 = vmul.f32 %v1329, %v1329
        %v1842 = vmul.f32 %v1330, %v1330
        %v1843 = vmul.f32 %v1331, %v1331
        %v1844 = vmul.f32 %v1332, %v1332
        %v1845 = vmul.f32 %v1333, %v1333
        %v1846 = vmul.f32 %v1334, %v1334
        %v1847 = vmul.f32 %v1335, %v1335
        %v1848 = vmul.f32 %v1336, %v1336
        %v1849 = vmul.f32 %v1337, %v1337
        %v1850 = vmul.f32 %v1338, %v1338
        %v1851 = vmul.f32 %v1339, %v1339
        %v1852 = vmul.f32 %v1340, %v1340
        %v1853 = vmul.f32 %v1341, %v1341
        %v1854 = vmul.f32 %v1342, %v1342
        %v1855 = vmul.f32 %v1343, %v1343
        %v1856 = vmul.f32 %v1344, %v1344
        %v1857 = vmul.f32 %v1345, %v1345
        %v1858 = vmul.f32 %v1346, %v1346
        %v1859 = vmul.f32 %v1347, %v1347
        %v1860 = vmul.f32 %v1348, %v1348
        %v1861 = vmul.f32 %v1349, %v1349
        %v1862 = vmul.f32 %v1350, %v1350
        %v1863 = vmul.f32 %v1351, %v1351
        %v1864 = vmul.f32 %v1352, %v1352
        %v1865 = vmul.f32 %v1353, %v1353
        %v1866 = vmul.f32 %v1354, %v1354
        %v1867 = vmul.f32 %v1355, %v1355
        %v1868 = vmul.f32 %v1356, %v1356
        %v1869 = vmul.f32 %v1357, %v1357
        %v1870 = vmul.f32 %v1358, %v1358
        %v1871 = vmul.f32 %v1359, %v1359
        %v1872 = vmul.f32 %v1360, %v1360
        %v1873 = vmul.f32 %v1361, %v1361
        %v1874 = vmul.f32 %v1362, %v1362
        %v1875 = vmul.f32 %v1363, %v1363
        %v1876 = vmul.f32 %v1364, %v1364
        %v1877 = vmul.f32 %v1365, %v1365
        %v1878 = vmul.f32 %v1366, %v1366
        %v1879 = vmul.f32 %v1367, %v1367
        %v1880 = vmul.f32 %v1368, %v1368
        %v1881 = vmul.f32 %v1369, %v1369
        %v1882 = vmul.f32 %v1370, %v1370
        %v1883 = vmul.f32 %v1371, %v1371
        %v1884 = vmul.f32 %v1372, %v1372
        %v1885 = vmul.f32 %v1373, %v1373
        %v1886 = vmul.f32 %v1374, %v1374
        %v1887 = vmul.f32 %v1375, %v1375
        %v1888 = vmul.f32 %v1376, %v1376
        %v1889 = vmul.f32 %v1377, %v1377
        %v1890 = vmul.f32 %v1378, %v1378
        %v1891 = vmul.f32 %v1379, %v1379
        %v1892 = vmul.f32 %v1380, %v1380
        %v1893 = vmul.f32 %v1381, %v1381
        %v1894 = vmul.f32 %v1382, %v1382
        %v1895 = vmul.f32 %v1383, %v1383
        %v1896 = vmul.f32 %v1384, %v1384
        %v1897 = vmul.f32 %v1385, %v1385
        %v1898 = vmul.f32 %v1386, %v1386
        %v1899 = vmul.f32 %v1387, %v1387
        %v1900 = vmul.f32 %v1388, %v1388
        %v1901 = vmul.f32 %v1389, %v1389
        %v1902 = vmul.f32 %v1390, %v1390
        %v1903 = vmul.f32 %v1391, %v1391
        %v1904 = vmul.f32 %v1392, %v1392
        %v1905 = vmul.f32 %v1393, %v1393
        %v1906 = vmul.f32 %v1394, %v1394
        %v1907 = vmul.f32 %v1395, %v1395
        %v1908 = vmul.f32 %v1396, %v1396
        %v1909 = vmul.f32 %v1397, %v1397
        %v1910 = vmul.f32 %v1398, %v1398
        %v1911 = vmul.f32 %v1399, %v1399
        %v1912 = vmul.f32 %v1400, %v1400
        %v1913 = vmul.f32 %v1401, %v1401
        %v1914 = vmul.f32 %v1402, %v1402
        %v1915 = vmul.f32 %v1403, %v1403
        %v1916 = vmul.f32 %v1404, %v1404
        %v1917 = vmul.f32 %v1405, %v1405
        %v1918 = vmul.f32 %v1406, %v1406
        %v1919 = vmul.f32 %v1407, %v1407
        %v1920 = vmul.f32 %v1408, %v1408
        %v1921 = vmul.f32 %v1409, %v1409
        %v1922 = vmul.f32 %v1410, %v1410
        %v1923 = vmul.f32 %v1411, %v1411
        %v1924 = vmul.f32 %v1412, %v1412
        %v1925 = vmul.f32 %v1413, %v1413
        %v1926 = vmul.f32 %v1414, %v1414
        %v1927 = vmul.f32 %v1415, %v1415
        %v1928 = vmul.f32 %v1416, %v1416
        %v1929 = vmul.f32 %v1417, %v1417
        %v1930 = vmul.f32 %v1418, %v1418
        %v1931 = vmul.f32 %v1419, %v1419
        %v1932 = vmul.f32 %v1420, %v1420
        %v1933 = vmul.f32 %v1421, %v1421
        %v1934 = vmul.f32 %v1422, %v1422
        %v1935 = vmul.f32 %v1423, %v1423
        %v1936 = vmul.f32 %v1424, %v1424
        %v1937 = vmul.f32 %v1425, %v1425
        %v1938 = vmul.f32 %v1426, %v1426
        %v1939 = vmul.f32 %v1427, %v1427
        %v1940 = vmul.f32 %v1428, %v1428
        %v1941 = vmul.f32 %v1429, %v1429
        %v1942 = vmul.f32 %v1430, %v1430
        %v1943 = vmul.f32 %v1431, %v1431
        %v1944 = vmul.f32 %v1432, %v1432
        %v1945 = vmul.f32 %v1433, %v1433
        %v1946 = vmul.f32 %v1434, %v1434
        %v1947 = vmul.f32 %v1435, %v1435
        %v1948 = vmul.f32 %v1436, %v1436
        %v1949 = vmul.f32 %v1437, %v1437
        %v1950 = vmul.f32 %v1438, %v1438
        %v1951 = vmul.f32 %v1439, %v1439
        %v1952 = vmul.f32 %v1440, %v1440
        %v1953 = vmul.f32 %v1441, %v1441
        %v1954 = vmul.f32 %v1442, %v1442
        %v1955 = vmul.f32 %v1443, %v1443
        %v1956 = vmul.f32 %v1444, %v1444
        %v1957 = vmul.f32 %v1445, %v1445
        %v1958 = vmul.f32 %v1446, %v1446
        %v1959 = vmul.f32 %v1447, %v1447
        %v1960 = vmul.f32 %v1448, %v1448
        %v1961 = vmul.f32 %v1449, %v1449
        %v1962 = vmul.f32 %v1450, %v1450
        %v1963 = vmul.f32 %v1451, %v1451
        %v1964 = vmul.f32 %v1452, %v1452
        %v1965 = vmul.f32 %v1453, %v1453
        %v1966 = vmul.f32 %v1454, %v1454
        %v1967 = vmul.f32 %v1455, %v1455
        %v1968 = vmul.f32 %v1456, %v1456
        %v1969 = vmul.f32 %v1457, %v1457
        %v1970 = vmul.f32 %v1458, %v1458
        %v1971 = vmul.f32 %v1459, %v1459
        %v1972 = vmul.f32 %v1460, %v1460
        %v1973 = vmul.f32 %v1461, %v1461
        %v1974 = vmul.f32 %v1462, %v1462
        %v1975 = vmul.f32 %v1463, %v1463
        %v1976 = vmul.f32 %v1464, %v1464
        %v1977 = vmul.f32 %v1465, %v1465
        %v1978 = vmul.f32 %v1466, %v1466
        %v1979 = vmul.f32 %v1467, %v1467
        %v1980 = vmul.f32 %v1468, %v1468
        %v1981 = vmul.f32 %v1469, %v1469
        %v1982 = vmul.f32 %v1470, %v1470
        %v1983 = vmul.f32 %v1471, %v1471
        %v1984 = vmul.f32 %v1472, %v1472
        %v1985 = vmul.f32 %v1473, %v1473
        %v1986 = vmul.f32 %v1474, %v1474
        %v1987 = vmul.f32 %v1475, %v1475
        %v1988 = vmul.f32 %v1476, %v1476
        %v1989 = vmul.f32 %v1477, %v1477
        %v1990 = vmul.f32 %v1478, %v1478
        %v1991 = vmul.f32 %v1479, %v1479
        %v1992 = vmul.f32 %v1480, %v1480
        %v1993 = vmul.f32 %v1481, %v1481
        %v1994 = vmul.f32 %v1482, %v1482
        %v1995 = vmul.f32 %v1483, %v1483
        %v1996 = vmul.f32 %v1484, %v1484
        %v1997 = vmul.f32 %v1485, %v1485
        %v1998 = vmul.f32 %v1486, %v1486
        %v1999 = vmul.f32 %v1487, %v1487
        %v2000 = vmul.f32 %v1488, %v1488
        %v2001 = vmul.f32 %v1489, %v1489
        %v2002 = vmul.f32 %v1490, %v1490
        %v2003 = vmul.f32 %v1491, %v1491
        %v2004 = vmul.f32 %v1492, %v1492
        %v2005 = vmul.f32 %v1493, %v1493
        %v2006 = vmul.f32 %v1494, %v1494
        %v2007 = vmul.f32 %v1495, %v1495
        %v2008 = vmul.f32 %v1496, %v1496
        %v2009 = vmul.f32 %v1497, %v1497
        %v2010 = vmul.f32 %v1498, %v1498
        %v2011 = vmul.f32 %v1499, %v1499
        %v2012 = vmul.f32 %v1500, %v1500
        %v2013 = vmul.f32 %v1501, %v1501
        %v2014 = vmul.f32 %v1502, %v1502
        %v2015 = vmul.f32 %v1503, %v1503
        %v2016 = vmul.f32 %v1504, %v1504
        %v2017 = vmul.f32 %v1505, %v1505
        %v2018 = vmul.f32 %v1506, %v1506
        %v2019 = vmul.f32 %v1507, %v1507
        %v2020 = vmul.f32 %v1508, %v1508
        %v2021 = vmul.f32 %v1509, %v1509
        %v2022 = vmul.f32 %v1510, %v1510
        %v2023 = vmul.f32 %v1511, %v1511
        %v2024 = vmul.f32 %v1512, %v1512
        %v2025 = vmul.f32 %v1513, %v1513
        %v2026 = vmul.f32 %v1514, %v1514
        %v2027 = vmul.f32 %v1515, %v1515
        %v2028 = vmul.f32 %v1516, %v1516
        %v2029 = vmul.f32 %v1517, %v1517
        %v2030 = vmul.f32 %v1518, %v1518
        %v2031 = vmul.f32 %v1519, %v1519
        %v2032 = vmul.f32 %v1520, %v1520
        %v2033 = vmul.f32 %v1521, %v1521
        %v2034 = vmul.f32 %v1522, %v1522
        %v2035 = vmul.f32 %v1523, %v1523
        %v2036 = vmul.f32 %v1524, %v1524
        %v2037 = vmul.f32 %v1525, %v1525
        %v2038 = vmul.f32 %v1526, %v1526
        %v2039 = vmul.f32 %v1527, %v1527
        %v2040 = vmul.f32 %v1528, %v1528
        %v2041 = vmul.f32 %v1529, %v1529
        %v2042 = vmul.f32 %v1530, %v1530
        %v2043 = vmul.f32 %v1531, %v1531
        %v2044 = vmul.f32 %v1532, %v1532
        %v2045 = vmul.f32 %v1533, %v1533
        %v2046 = vmul.f32 %v1534, %v1534
        %v2047 = vmul.f32 %v1535, %v1535
        %v2048 = vmul.f32 %v1536, %v1536
        %v2049 = vmul.f32 %v1537, %v1537
        %v2050 = vmul.f32 %v1538, %v1538
        %v2051 = vmul.f32 %v1539, %v1539
        %v2052 = vmul.f32 %v1540, %v1540
        %v2053 = vmul.f32 %v1541, %v1541
        %v2054 = vmul.f32 %v1542, %v1542
        %v2055 = vmul.f32 %v1543, %v1543
        %v2056 = vmul.f32 %v1544, %v1544
        %v2057 = vmul.f32 %v1545, %v1545
        %v2058 = vmul.f32 %v1546, %v1546
        %v2059 = vmul.f32 %v1547, %v1547
        %v2060 = vmul.f32 %v1548, %v1548
        %v2061 = vmul.f32 %v1549, %v1549
        %v2062 = vmul.f32 %v1550, %v1550
        %v2063 = vmul.f32 %v1551, %v1551
        %v2064 = vmul.f32 %v1552, %v1552
        %v2065 = vmul.f32 %v1553, %v1553
        %v2066 = vmul.f32 %v1554, %v1554
        %v2067 = vmul.f32 %v1555, %v1555
        %v2068 = vmul.f32 %v1556, %v1556
        %v2069 = vmul.f32 %v1557, %v1557
        %v2070 = vmul.f32 %v1558, %v1558
        %v2071 = vmul.f32 %v1559, %v1559
        %v2072 = vmul.f32 %v1560, %v1560
        %v2073 = vmul.f32 %v1561, %v1561
        %v2074 = vmul.f32 %v1562, %v1562
        %v2075 = vmul.f32 %v1563, %v1563
        %v2076 = vmul.f32 %v1564, %v1564
        %v2077 = vmul.f32 %v1565, %v1565
        %v2078 = vmul.f32 %v1566, %v1566
        %v2079 = vmul.f32 %v1567, %v1567
        %v2080 = vmul.f32 %v1568, %v1568
        %v2081 = vmul.f32 %v1569, %v1569
        %v2082 = vmul.f32 %v1570, %v1570
        %v2083 = vmul.f32 %v1571, %v1571
        %v2084 = vmul.f32 %v1572, %v1572
        %v2085 = vmul.f32 %v1573, %v1573
        %v2086 = vmul.f32 %v1574, %v1574
        %v2087 = vmul.f32 %v1575, %v1575
        %v2088 = vmul.f32 %v1576, %v1576
        %v2089 = vmul.f32 %v1577, %v1577
        %v2090 = vmul.f32 %v1578, %v1578
        %v2091 = vmul.f32 %v1579, %v1579
        %v2092 = vmul.f32 %v1580, %v1580
        %v2093 = vmul.f32 %v1581, %v1581
        %v2094 = vmul.f32 %v1582, %v1582
        %v2095 = vmul.f32 %v1583, %v1583
        %v2096 = vmul.f32 %v1584, %v1584
        %v2097 = vmul.f32 %v1585, %v1585
        %v2098 = vmul.f32 %v1586, %v1586
        %v2099 = vmul.f32 %v1587, %v1587
        %v2100 = vmul.f32 %v1588, %v1588
        %v2101 = vmul.f32 %v1589, %v1589
        %v2102 = vmul.f32 %v1590, %v1590
        %v2103 = vmul.f32 %v1591, %v1591
        %v2104 = vmul.f32 %v1592, %v1592
        %v2105 = vmul.f32 %v1593, %v1593
        %v2106 = vmul.f32 %v1594, %v1594
        %v2107 = vmul.f32 %v1595, %v1595
        %v2108 = vmul.f32 %v1596, %v1596
        %v2109 = vmul.f32 %v1597, %v1597
        %v2110 = vmul.f32 %v1598, %v1598
        %v2111 = vmul.f32 %v1599, %v1599
        %v2112 = vmul.f32 %v1600, %v1600
        %v2113 = vmul.f32 %v1601, %v1601
        %v2114 = vmul.f32 %v1602, %v1602
        %v2115 = vmul.f32 %v1603, %v1603
        %v2116 = vmul.f32 %v1604, %v1604
        %v2117 = vmul.f32 %v1605, %v1605
        %v2118 = vmul.f32 %v1606, %v1606
        %v2119 = vmul.f32 %v1607, %v1607
        %v2120 = vmul.f32 %v1608, %v1608
        %v2121 = vmul.f32 %v1609, %v1609
        %v2122 = vmul.f32 %v1610, %v1610
        %v2123 = vmul.f32 %v1611, %v1611
        %v2124 = vmul.f32 %v1612, %v1612
        %v2125 = vmul.f32 %v1613, %v1613
        %v2126 = vmul.f32 %v1614, %v1614
        %v2127 = vmul.f32 %v1615, %v1615
        %v2128 = vmul.f32 %v1616, %v1616
        %v2129 = vmul.f32 %v1617, %v1617
        %v2130 = vmul.f32 %v1618, %v1618
        %v2131 = vmul.f32 %v1619, %v1619
        %v2132 = vmul.f32 %v1620, %v1620
        %v2133 = vmul.f32 %v1621, %v1621
        %v2134 = vmul.f32 %v1622, %v1622
        %v2135 = vmul.f32 %v1623, %v1623
        %v2136 = vmul.f32 %v1624, %v1624
        %v2137 = vmul.f32 %v1625, %v1625
        %v2138 = vmul.f32 %v1626, %v1626
        %v2139 = vmul.f32 %v1627, %v1627
        %v2140 = vmul.f32 %v1628, %v1628
        %v2141 = vmul.f32 %v1629, %v1629
        %v2142 = vmul.f32 %v1630, %v1630
        %v2143 = vmul.f32 %v1631, %v1631
        %v2144 = vmul.f32 %v1632, %v1632
        %v2145 = vmul.f32 %v1633, %v1633
        %v2146 = vmul.f32 %v1634, %v1634
        %v2147 = vmul.f32 %v1635, %v1635
        %v2148 = vmul.f32 %v1636, %v1636
        %v2149 = vmul.f32 %v1637, %v1637
        %v2150 = vmul.f32 %v1638, %v1638
        %v2151 = vmul.f32 %v1639, %v1639
        %v2152 = vmul.f32 %v1640, %v1640
        %v2153 = vmul.f32 %v1641, %v1641
        %v2154 = vmul.f32 %v1642, %v1642
        %v2155 = vmul.f32 %v1643, %v1643
        %v2156 = vmul.f32 %v1644, %v1644
        %v2157 = vmul.f32 %v1645, %v1645
        %v2158 = vmul.f32 %v1646, %v1646
        %v2159 = vmul.f32 %v1647, %v1647
        %v2160 = vmul.f32 %v1648, %v1648
        %v2161 = vmul.f32 %v1649, %v1649
        %v2162 = vmul.f32 %v1650, %v1650
        %v2163 = vmul.f32 %v1651, %v1651
        %v2164 = vmul.f32 %v1652, %v1652
        %v2165 = vmul.f32 %v1653, %v1653
        %v2166 = vmul.f32 %v1654, %v1654
        %v2167 = vmul.f32 %v1655, %v1655
        %v2168 = vmul.f32 %v1656, %v1656
        %v2169 = vmul.f32 %v1657, %v1657
        %v2170 = vmul.f32 %v1658, %v1658
        %v2171 = vmul.f32 %v1659, %v1659
        %v2172 = vmul.f32 %v1660, %v1660
        %v2173 = vmul.f32 %v1661, %v1661
        %v2174 = vmul.f32 %v1662, %v1662
        %v2175 = vmul.f32 %v1663, %v1663
        %v2176 = vmul.f32 %v1664, %v1664
        %v2177 = vmul.f32 %v1665, %v1665
        %v2178 = vmul.f32 %v1666, %v1666
        %v2179 = vmul.f32 %v1667, %v1667
        %v2180 = vmul.f32 %v1668, %v1668
        %v2181 = vmul.f32 %v1669, %v1669
        %v2182 = vmul.f32 %v1670, %v1670
        %v2183 = vmul.f32 %v1671, %v1671
        %v2184 = vmul.f32 %v1672, %v1672
        %v2185 = vmul.f32 %v1673, %v1673
        %v2186 = vmul.f32 %v1674, %v1674
        %v2187 = vmul.f32 %v1675, %v1675
        %v2188 = vmul.f32 %v1676, %v1676
        %v2189 = vmul.f32 %v1677, %v1677
        %v2190 = vmul.f32 %v1678, %v1678
        %v2191 = vmul.f32 %v1679, %v1679
        %v2192 = vmul.f32 %v1680, %v1680
        %v2193 = vmul.f32 %v1681, %v1681
        %v2194 = vmul.f32 %v1682, %v1682
        %v2195 = vmul.f32 %v1683, %v1683
        %v2196 = vmul.f32 %v1684, %v1684
        %v2197 = vmul.f32 %v1685, %v1685
        %v2198 = vmul.f32 %v1686, %v1686
        %v2199 = vmul.f32 %v1687, %v1687
        %v2200 = vmul.f32 %v1688, %v1688
        %v2201 = vmul.f32 %v1689, %v1689
        %v2202 = vmul.f32 %v1690, %v1690
        %v2203 = vmul.f32 %v1691, %v1691
        %v2204 = vmul.f32 %v1692, %v1692
        %v2205 = vmul.f32 %v1693, %v1693
        %v2206 = vmul.f32 %v1694, %v1694
        %v2207 = vmul.f32 %v1695, %v1695
        %v2208 = vmul.f32 %v1696, %v1696
        %v2209 = vmul.f32 %v1697, %v1697
        %v2210 = vmul.f32 %v1698, %v1698
        %v2211 = vmul.f32 %v1699, %v1699
        %v2212 = vmul.f32 %v1700, %v1700
        %v2213 = vmul.f32 %v1701, %v1701
        %v2214 = vmul.f32 %v1702, %v1702
        %v2215 = vmul.f32 %v1703, %v1703
        %v2216 = vmul.f32 %v1704, %v1704
        %v2217 = vmul.f32 %v1705, %v1705
        %v2218 = vmul.f32 %v1706, %v1706
        %v2219 = vmul.f32 %v1707, %v1707
        %v2220 = vmul.f32 %v1708, %v1708
        %v2221 = vmul.f32 %v1709, %v1709
        %v2222 = vmul.f32 %v1710, %v1710
        %v2223 = vmul.f32 %v1711, %v1711
        %v2224 = vmul.f32 %v1712, %v1712
        %v2225 = vmul.f32 %v1713, %v1713
        %v2226 = vmul.f32 %v1714, %v1714
        %v2227 = vmul.f32 %v1715, %v1715
        %v2228 = vmul.f32 %v1716, %v1716
        %v2229 = vmul.f32 %v1717, %v1717
        %v2230 = vmul.f32 %v1718, %v1718
        %v2231 = vmul.f32 %v1719, %v1719
        %v2232 = vmul.f32 %v1720, %v1720
        %v2233 = vmul.f32 %v1721, %v1721
        %v2234 = vmul.f32 %v1722, %v1722
        %v2235 = vmul.f32 %v1723, %v1723
        %v2236 = vmul.f32 %v1724, %v1724
        %v2237 = vmul.f32 %v1725, %v1725
        %v2238 = vmul.f32 %v1726, %v1726
        %v2239 = vmul.f32 %v1727, %v1727
        %v2240 = vmul.f32 %v1728, %v1728
        %v2241 = vmul.f32 %v1729, %v1729
        %v2242 = vmul.f32 %v1730, %v1730
        %v2243 = vmul.f32 %v1731, %v1731
        %v2244 = vmul.f32 %v1732, %v1732
        %v2245 = vmul.f32 %v1733, %v1733
        %v2246 = vmul.f32 %v1734, %v1734
        %v2247 = vmul.f32 %v1735, %v1735
        %v2248 = vmul.f32 %v1736, %v1736
        %v2249 = vmul.f32 %v1737, %v1737
        %v2250 = vmul.f32 %v1738, %v1738
        %v2251 = vmul.f32 %v1739, %v1739
        %v2252 = vmul.f32 %v1740, %v1740
        %v2253 = vmul.f32 %v1741, %v1741
        %v2254 = vmul.f32 %v1742, %v1742
        %v2255 = vmul.f32 %v1743, %v1743
        %v2256 = vmul.f32 %v1744, %v1744
        %v2257 = vmul.f32 %v1745, %v1745
        %v2258 = vmul.f32 %v1746, %v1746
        %v2259 = vmul.f32 %v1747, %v1747
        %v2260 = vmul.f32 %v1748, %v1748
        %v2261 = vmul.f32 %v1749, %v1749
        %v2262 = vmul.f32 %v1750, %v1750
        %v2263 = vmul.f32 %v1751, %v1751
        %v2264 = vmul.f32 %v1752, %v1752
        %v2265 = vmul.f32 %v1753, %v1753
        %v2266 = vmul.f32 %v1754, %v1754
        %v2267 = vmul.f32 %v1755, %v1755
        %v2268 = vmul.f32 %v1756, %v1756
        %v2269 = vmul.f32 %v1757, %v1757
        %v2270 = vmul.f32 %v1758, %v1758
        %v2271 = vmul.f32 %v1759, %v1759
        %v2272 = vmul.f32 %v1760, %v1760
        %v2273 = vmul.f32 %v1761, %v1761
        %v2274 = vmul.f32 %v1762, %v1762
        %v2275 = vmul.f32 %v1763, %v1763
        %v2276 = vmul.f32 %v1764, %v1764
        %v2277 = vmul.f32 %v1765, %v1765
        %v2278 = vmul.f32 %v1766, %v1766
        %v2279 = vmul.f32 %v1767, %v1767
        %v2280 = vmul.f32 %v1768, %v1768
        %v2281 = vmul.f32 %v1769, %v1769
        %v2282 = vmul.f32 %v1770, %v1770
        %v2283 = vmul.f32 %v1771, %v1771
        %v2284 = vmul.f32 %v1772, %v1772
        %v2285 = vmul.f32 %v1773, %v1773
        %v2286 = vmul.f32 %v1774, %v1774
        %v2287 = vmul.f32 %v1775, %v1775
        %v2288 = vmul.f32 %v1776, %v1776
        %v2289 = vmul.f32 %v1777, %v1777
        %v2290 = vmul.f32 %v1778, %v1778
        %v2291 = vmul.f32 %v1779, %v1779
        %v2292 = vmul.f32 %v1780, %v1780
        %v2293 = vmul.f32 %v1781, %v1781
        %v2294 = vmul.f32 %v1782, %v1782
        %v2295 = vmul.f32 %v1783, %v1783
        %v2296 = vmul.f32 %v1784, %v1784
        %v2297 = vmul.f32 %v1785, %v1785
        %v2298 = vmul.f32 %v1786, %v1786
        %v2299 = vmul.f32 %v1787, %v1787
        %v2300 = vmul.f32 %v1788, %v1788
        %v2301 = vmul.f32 %v1789, %v1789
        %v2302 = vmul.f32 %v1790, %v1790
        %v2303 = vmul.f32 %v1791, %v1791
        %v2304 = vmul.f32 %v1792, %v1792
        %s2305 = smul.u32 %s24, 3
        %s2306 = sadd.s32 %s2305, %s25
        %p2307 = scmp.ne.s32.totalorder %s2306, 2
        // Predicated region
        $region41: #{tpu_custom_call.1} parent=27 // pred_check
          %p2308 = pneg %p2307
        $region42: #{tpu_custom_call.1} parent=27 // pred_check_branch
          %2310 = sbr.rel (%p2308) target = $region44
        $region43: #{tpu_custom_call.1} parent=27 // pred_region
          %v2311 = vld [vmem:[#allocation2] sm:$0xff]
          %v2312 = vld [vmem:[#allocation2 + $0x8] sm:$0xff]
          %v2313 = vadd.f32 %v1793, %v1795
          %v2314 = vadd.f32 %v2313, %v1797
          %v2315 = vadd.f32 %v2314, %v1799
          %v2316 = vadd.f32 %v2315, %v1801
          %v2317 = vadd.f32 %v2316, %v1803
          %v2318 = vadd.f32 %v2317, %v1805
          %v2319 = vadd.f32 %v2318, %v1807
          %v2320 = vadd.f32 %v2319, %v1809
          %v2321 = vadd.f32 %v2320, %v1811
          %v2322 = vadd.f32 %v2321, %v1813
          %v2323 = vadd.f32 %v2322, %v1815
          %v2324 = vadd.f32 %v2323, %v1817
          %v2325 = vadd.f32 %v2324, %v1819
          %v2326 = vadd.f32 %v2325, %v1821
          %v2327 = vadd.f32 %v2326, %v1823
          %v2328 = vadd.f32 %v2327, %v1825
          %v2329 = vadd.f32 %v2328, %v1827
          %v2330 = vadd.f32 %v2329, %v1829
          %v2331 = vadd.f32 %v2330, %v1831
          %v2332 = vadd.f32 %v2331, %v1833
          %v2333 = vadd.f32 %v2332, %v1835
          %v2334 = vadd.f32 %v2333, %v1837
          %v2335 = vadd.f32 %v2334, %v1839
          %v2336 = vadd.f32 %v2335, %v1841
          %v2337 = vadd.f32 %v2336, %v1843
          %v2338 = vadd.f32 %v2337, %v1845
          %v2339 = vadd.f32 %v2338, %v1847
          %v2340 = vadd.f32 %v2339, %v1849
          %v2341 = vadd.f32 %v2340, %v1851
          %v2342 = vadd.f32 %v2341, %v1853
          %v2343 = vadd.f32 %v2342, %v1855
          %v2344 = vadd.f32 %v2343, %v1857
          %v2345 = vadd.f32 %v2344, %v1859
          %v2346 = vadd.f32 %v2345, %v1861
          %v2347 = vadd.f32 %v2346, %v1863
          %v2348 = vadd.f32 %v2347, %v1865
          %v2349 = vadd.f32 %v2348, %v1867
          %v2350 = vadd.f32 %v2349, %v1869
          %v2351 = vadd.f32 %v2350, %v1871
          %v2352 = vadd.f32 %v2351, %v1873
          %v2353 = vadd.f32 %v2352, %v1875
          %v2354 = vadd.f32 %v2353, %v1877
          %v2355 = vadd.f32 %v2354, %v1879
          %v2356 = vadd.f32 %v2355, %v1881
          %v2357 = vadd.f32 %v2356, %v1883
          %v2358 = vadd.f32 %v2357, %v1885
          %v2359 = vadd.f32 %v2358, %v1887
          %v2360 = vadd.f32 %v2359, %v1889
          %v2361 = vadd.f32 %v2360, %v1891
          %v2362 = vadd.f32 %v2361, %v1893
          %v2363 = vadd.f32 %v2362, %v1895
          %v2364 = vadd.f32 %v2363, %v1897
          %v2365 = vadd.f32 %v2364, %v1899
          %v2366 = vadd.f32 %v2365, %v1901
          %v2367 = vadd.f32 %v2366, %v1903
          %v2368 = vadd.f32 %v2367, %v1905
          %v2369 = vadd.f32 %v2368, %v1907
          %v2370 = vadd.f32 %v2369, %v1909
          %v2371 = vadd.f32 %v2370, %v1911
          %v2372 = vadd.f32 %v2371, %v1913
          %v2373 = vadd.f32 %v2372, %v1915
          %v2374 = vadd.f32 %v2373, %v1917
          %v2375 = vadd.f32 %v2374, %v1919
          %v2376 = vadd.f32 %v2375, %v1921
          %v2377 = vadd.f32 %v2376, %v1923
          %v2378 = vadd.f32 %v2377, %v1925
          %v2379 = vadd.f32 %v2378, %v1927
          %v2380 = vadd.f32 %v2379, %v1929
          %v2381 = vadd.f32 %v2380, %v1931
          %v2382 = vadd.f32 %v2381, %v1933
          %v2383 = vadd.f32 %v2382, %v1935
          %v2384 = vadd.f32 %v2383, %v1937
          %v2385 = vadd.f32 %v2384, %v1939
          %v2386 = vadd.f32 %v2385, %v1941
          %v2387 = vadd.f32 %v2386, %v1943
          %v2388 = vadd.f32 %v2387, %v1945
          %v2389 = vadd.f32 %v2388, %v1947
          %v2390 = vadd.f32 %v2389, %v1949
          %v2391 = vadd.f32 %v2390, %v1951
          %v2392 = vadd.f32 %v2391, %v1953
          %v2393 = vadd.f32 %v2392, %v1955
          %v2394 = vadd.f32 %v2393, %v1957
          %v2395 = vadd.f32 %v2394, %v1959
          %v2396 = vadd.f32 %v2395, %v1961
          %v2397 = vadd.f32 %v2396, %v1963
          %v2398 = vadd.f32 %v2397, %v1965
          %v2399 = vadd.f32 %v2398, %v1967
          %v2400 = vadd.f32 %v2399, %v1969
          %v2401 = vadd.f32 %v2400, %v1971
          %v2402 = vadd.f32 %v2401, %v1973
          %v2403 = vadd.f32 %v2402, %v1975
          %v2404 = vadd.f32 %v2403, %v1977
          %v2405 = vadd.f32 %v2404, %v1979
          %v2406 = vadd.f32 %v2405, %v1981
          %v2407 = vadd.f32 %v2406, %v1983
          %v2408 = vadd.f32 %v2407, %v1985
          %v2409 = vadd.f32 %v2408, %v1987
          %v2410 = vadd.f32 %v2409, %v1989
          %v2411 = vadd.f32 %v2410, %v1991
          %v2412 = vadd.f32 %v2411, %v1993
          %v2413 = vadd.f32 %v2412, %v1995
          %v2414 = vadd.f32 %v2413, %v1997
          %v2415 = vadd.f32 %v2414, %v1999
          %v2416 = vadd.f32 %v2415, %v2001
          %v2417 = vadd.f32 %v2416, %v2003
          %v2418 = vadd.f32 %v2417, %v2005
          %v2419 = vadd.f32 %v2418, %v2007
          %v2420 = vadd.f32 %v2419, %v2009
          %v2421 = vadd.f32 %v2420, %v2011
          %v2422 = vadd.f32 %v2421, %v2013
          %v2423 = vadd.f32 %v2422, %v2015
          %v2424 = vadd.f32 %v2423, %v2017
          %v2425 = vadd.f32 %v2424, %v2019
          %v2426 = vadd.f32 %v2425, %v2021
          %v2427 = vadd.f32 %v2426, %v2023
          %v2428 = vadd.f32 %v2427, %v2025
          %v2429 = vadd.f32 %v2428, %v2027
          %v2430 = vadd.f32 %v2429, %v2029
          %v2431 = vadd.f32 %v2430, %v2031
          %v2432 = vadd.f32 %v2431, %v2033
          %v2433 = vadd.f32 %v2432, %v2035
          %v2434 = vadd.f32 %v2433, %v2037
          %v2435 = vadd.f32 %v2434, %v2039
          %v2436 = vadd.f32 %v2435, %v2041
          %v2437 = vadd.f32 %v2436, %v2043
          %v2438 = vadd.f32 %v2437, %v2045
          %v2439 = vadd.f32 %v2438, %v2047
          %v2440 = vadd.f32 %v2439, %v2049
          %v2441 = vadd.f32 %v2440, %v2051
          %v2442 = vadd.f32 %v2441, %v2053
          %v2443 = vadd.f32 %v2442, %v2055
          %v2444 = vadd.f32 %v2443, %v2057
          %v2445 = vadd.f32 %v2444, %v2059
          %v2446 = vadd.f32 %v2445, %v2061
          %v2447 = vadd.f32 %v2446, %v2063
          %v2448 = vadd.f32 %v2447, %v2065
          %v2449 = vadd.f32 %v2448, %v2067
          %v2450 = vadd.f32 %v2449, %v2069
          %v2451 = vadd.f32 %v2450, %v2071
          %v2452 = vadd.f32 %v2451, %v2073
          %v2453 = vadd.f32 %v2452, %v2075
          %v2454 = vadd.f32 %v2453, %v2077
          %v2455 = vadd.f32 %v2454, %v2079
          %v2456 = vadd.f32 %v2455, %v2081
          %v2457 = vadd.f32 %v2456, %v2083
          %v2458 = vadd.f32 %v2457, %v2085
          %v2459 = vadd.f32 %v2458, %v2087
          %v2460 = vadd.f32 %v2459, %v2089
          %v2461 = vadd.f32 %v2460, %v2091
          %v2462 = vadd.f32 %v2461, %v2093
          %v2463 = vadd.f32 %v2462, %v2095
          %v2464 = vadd.f32 %v2463, %v2097
          %v2465 = vadd.f32 %v2464, %v2099
          %v2466 = vadd.f32 %v2465, %v2101
          %v2467 = vadd.f32 %v2466, %v2103
          %v2468 = vadd.f32 %v2467, %v2105
          %v2469 = vadd.f32 %v2468, %v2107
          %v2470 = vadd.f32 %v2469, %v2109
          %v2471 = vadd.f32 %v2470, %v2111
          %v2472 = vadd.f32 %v2471, %v2113
          %v2473 = vadd.f32 %v2472, %v2115
          %v2474 = vadd.f32 %v2473, %v2117
          %v2475 = vadd.f32 %v2474, %v2119
          %v2476 = vadd.f32 %v2475, %v2121
          %v2477 = vadd.f32 %v2476, %v2123
          %v2478 = vadd.f32 %v2477, %v2125
          %v2479 = vadd.f32 %v2478, %v2127
          %v2480 = vadd.f32 %v2479, %v2129
          %v2481 = vadd.f32 %v2480, %v2131
          %v2482 = vadd.f32 %v2481, %v2133
          %v2483 = vadd.f32 %v2482, %v2135
          %v2484 = vadd.f32 %v2483, %v2137
          %v2485 = vadd.f32 %v2484, %v2139
          %v2486 = vadd.f32 %v2485, %v2141
          %v2487 = vadd.f32 %v2486, %v2143
          %v2488 = vadd.f32 %v2487, %v2145
          %v2489 = vadd.f32 %v2488, %v2147
          %v2490 = vadd.f32 %v2489, %v2149
          %v2491 = vadd.f32 %v2490, %v2151
          %v2492 = vadd.f32 %v2491, %v2153
          %v2493 = vadd.f32 %v2492, %v2155
          %v2494 = vadd.f32 %v2493, %v2157
          %v2495 = vadd.f32 %v2494, %v2159
          %v2496 = vadd.f32 %v2495, %v2161
          %v2497 = vadd.f32 %v2496, %v2163
          %v2498 = vadd.f32 %v2497, %v2165
          %v2499 = vadd.f32 %v2498, %v2167
          %v2500 = vadd.f32 %v2499, %v2169
          %v2501 = vadd.f32 %v2500, %v2171
          %v2502 = vadd.f32 %v2501, %v2173
          %v2503 = vadd.f32 %v2502, %v2175
          %v2504 = vadd.f32 %v2503, %v2177
          %v2505 = vadd.f32 %v2504, %v2179
          %v2506 = vadd.f32 %v2505, %v2181
          %v2507 = vadd.f32 %v2506, %v2183
          %v2508 = vadd.f32 %v2507, %v2185
          %v2509 = vadd.f32 %v2508, %v2187
          %v2510 = vadd.f32 %v2509, %v2189
          %v2511 = vadd.f32 %v2510, %v2191
          %v2512 = vadd.f32 %v2511, %v2193
          %v2513 = vadd.f32 %v2512, %v2195
          %v2514 = vadd.f32 %v2513, %v2197
          %v2515 = vadd.f32 %v2514, %v2199
          %v2516 = vadd.f32 %v2515, %v2201
          %v2517 = vadd.f32 %v2516, %v2203
          %v2518 = vadd.f32 %v2517, %v2205
          %v2519 = vadd.f32 %v2518, %v2207
          %v2520 = vadd.f32 %v2519, %v2209
          %v2521 = vadd.f32 %v2520, %v2211
          %v2522 = vadd.f32 %v2521, %v2213
          %v2523 = vadd.f32 %v2522, %v2215
          %v2524 = vadd.f32 %v2523, %v2217
          %v2525 = vadd.f32 %v2524, %v2219
          %v2526 = vadd.f32 %v2525, %v2221
          %v2527 = vadd.f32 %v2526, %v2223
          %v2528 = vadd.f32 %v2527, %v2225
          %v2529 = vadd.f32 %v2528, %v2227
          %v2530 = vadd.f32 %v2529, %v2229
          %v2531 = vadd.f32 %v2530, %v2231
          %v2532 = vadd.f32 %v2531, %v2233
          %v2533 = vadd.f32 %v2532, %v2235
          %v2534 = vadd.f32 %v2533, %v2237
          %v2535 = vadd.f32 %v2534, %v2239
          %v2536 = vadd.f32 %v2535, %v2241
          %v2537 = vadd.f32 %v2536, %v2243
          %v2538 = vadd.f32 %v2537, %v2245
          %v2539 = vadd.f32 %v2538, %v2247
          %v2540 = vadd.f32 %v2539, %v2249
          %v2541 = vadd.f32 %v2540, %v2251
          %v2542 = vadd.f32 %v2541, %v2253
          %v2543 = vadd.f32 %v2542, %v2255
          %v2544 = vadd.f32 %v2543, %v2257
          %v2545 = vadd.f32 %v2544, %v2259
          %v2546 = vadd.f32 %v2545, %v2261
          %v2547 = vadd.f32 %v2546, %v2263
          %v2548 = vadd.f32 %v2547, %v2265
          %v2549 = vadd.f32 %v2548, %v2267
          %v2550 = vadd.f32 %v2549, %v2269
          %v2551 = vadd.f32 %v2550, %v2271
          %v2552 = vadd.f32 %v2551, %v2273
          %v2553 = vadd.f32 %v2552, %v2275
          %v2554 = vadd.f32 %v2553, %v2277
          %v2555 = vadd.f32 %v2554, %v2279
          %v2556 = vadd.f32 %v2555, %v2281
          %v2557 = vadd.f32 %v2556, %v2283
          %v2558 = vadd.f32 %v2557, %v2285
          %v2559 = vadd.f32 %v2558, %v2287
          %v2560 = vadd.f32 %v2559, %v2289
          %v2561 = vadd.f32 %v2560, %v2291
          %v2562 = vadd.f32 %v2561, %v2293
          %v2563 = vadd.f32 %v2562, %v2295
          %v2564 = vadd.f32 %v2563, %v2297
          %v2565 = vadd.f32 %v2564, %v2299
          %v2566 = vadd.f32 %v2565, %v2301
          %v2567 = vadd.f32 %v2566, %v2303
          %v2568 = vadd.f32 %v1794, %v1796
          %v2569 = vadd.f32 %v2568, %v1798
          %v2570 = vadd.f32 %v2569, %v1800
          %v2571 = vadd.f32 %v2570, %v1802
          %v2572 = vadd.f32 %v2571, %v1804
          %v2573 = vadd.f32 %v2572, %v1806
          %v2574 = vadd.f32 %v2573, %v1808
          %v2575 = vadd.f32 %v2574, %v1810
          %v2576 = vadd.f32 %v2575, %v1812
          %v2577 = vadd.f32 %v2576, %v1814
          %v2578 = vadd.f32 %v2577, %v1816
          %v2579 = vadd.f32 %v2578, %v1818
          %v2580 = vadd.f32 %v2579, %v1820
          %v2581 = vadd.f32 %v2580, %v1822
          %v2582 = vadd.f32 %v2581, %v1824
          %v2583 = vadd.f32 %v2582, %v1826
          %v2584 = vadd.f32 %v2583, %v1828
          %v2585 = vadd.f32 %v2584, %v1830
          %v2586 = vadd.f32 %v2585, %v1832
          %v2587 = vadd.f32 %v2586, %v1834
          %v2588 = vadd.f32 %v2587, %v1836
          %v2589 = vadd.f32 %v2588, %v1838
          %v2590 = vadd.f32 %v2589, %v1840
          %v2591 = vadd.f32 %v2590, %v1842
          %v2592 = vadd.f32 %v2591, %v1844
          %v2593 = vadd.f32 %v2592, %v1846
          %v2594 = vadd.f32 %v2593, %v1848
          %v2595 = vadd.f32 %v2594, %v1850
          %v2596 = vadd.f32 %v2595, %v1852
          %v2597 = vadd.f32 %v2596, %v1854
          %v2598 = vadd.f32 %v2597, %v1856
          %v2599 = vadd.f32 %v2598, %v1858
          %v2600 = vadd.f32 %v2599, %v1860
          %v2601 = vadd.f32 %v2600, %v1862
          %v2602 = vadd.f32 %v2601, %v1864
          %v2603 = vadd.f32 %v2602, %v1866
          %v2604 = vadd.f32 %v2603, %v1868
          %v2605 = vadd.f32 %v2604, %v1870
          %v2606 = vadd.f32 %v2605, %v1872
          %v2607 = vadd.f32 %v2606, %v1874
          %v2608 = vadd.f32 %v2607, %v1876
          %v2609 = vadd.f32 %v2608, %v1878
          %v2610 = vadd.f32 %v2609, %v1880
          %v2611 = vadd.f32 %v2610, %v1882
          %v2612 = vadd.f32 %v2611, %v1884
          %v2613 = vadd.f32 %v2612, %v1886
          %v2614 = vadd.f32 %v2613, %v1888
          %v2615 = vadd.f32 %v2614, %v1890
          %v2616 = vadd.f32 %v2615, %v1892
          %v2617 = vadd.f32 %v2616, %v1894
          %v2618 = vadd.f32 %v2617, %v1896
          %v2619 = vadd.f32 %v2618, %v1898
          %v2620 = vadd.f32 %v2619, %v1900
          %v2621 = vadd.f32 %v2620, %v1902
          %v2622 = vadd.f32 %v2621, %v1904
          %v2623 = vadd.f32 %v2622, %v1906
          %v2624 = vadd.f32 %v2623, %v1908
          %v2625 = vadd.f32 %v2624, %v1910
          %v2626 = vadd.f32 %v2625, %v1912
          %v2627 = vadd.f32 %v2626, %v1914
          %v2628 = vadd.f32 %v2627, %v1916
          %v2629 = vadd.f32 %v2628, %v1918
          %v2630 = vadd.f32 %v2629, %v1920
          %v2631 = vadd.f32 %v2630, %v1922
          %v2632 = vadd.f32 %v2631, %v1924
          %v2633 = vadd.f32 %v2632, %v1926
          %v2634 = vadd.f32 %v2633, %v1928
          %v2635 = vadd.f32 %v2634, %v1930
          %v2636 = vadd.f32 %v2635, %v1932
          %v2637 = vadd.f32 %v2636, %v1934
          %v2638 = vadd.f32 %v2637, %v1936
          %v2639 = vadd.f32 %v2638, %v1938
          %v2640 = vadd.f32 %v2639, %v1940
          %v2641 = vadd.f32 %v2640, %v1942
          %v2642 = vadd.f32 %v2641, %v1944
          %v2643 = vadd.f32 %v2642, %v1946
          %v2644 = vadd.f32 %v2643, %v1948
          %v2645 = vadd.f32 %v2644, %v1950
          %v2646 = vadd.f32 %v2645, %v1952
          %v2647 = vadd.f32 %v2646, %v1954
          %v2648 = vadd.f32 %v2647, %v1956
          %v2649 = vadd.f32 %v2648, %v1958
          %v2650 = vadd.f32 %v2649, %v1960
          %v2651 = vadd.f32 %v2650, %v1962
          %v2652 = vadd.f32 %v2651, %v1964
          %v2653 = vadd.f32 %v2652, %v1966
          %v2654 = vadd.f32 %v2653, %v1968
          %v2655 = vadd.f32 %v2654, %v1970
          %v2656 = vadd.f32 %v2655, %v1972
          %v2657 = vadd.f32 %v2656, %v1974
          %v2658 = vadd.f32 %v2657, %v1976
          %v2659 = vadd.f32 %v2658, %v1978
          %v2660 = vadd.f32 %v2659, %v1980
          %v2661 = vadd.f32 %v2660, %v1982
          %v2662 = vadd.f32 %v2661, %v1984
          %v2663 = vadd.f32 %v2662, %v1986
          %v2664 = vadd.f32 %v2663, %v1988
          %v2665 = vadd.f32 %v2664, %v1990
          %v2666 = vadd.f32 %v2665, %v1992
          %v2667 = vadd.f32 %v2666, %v1994
          %v2668 = vadd.f32 %v2667, %v1996
          %v2669 = vadd.f32 %v2668, %v1998
          %v2670 = vadd.f32 %v2669, %v2000
          %v2671 = vadd.f32 %v2670, %v2002
          %v2672 = vadd.f32 %v2671, %v2004
          %v2673 = vadd.f32 %v2672, %v2006
          %v2674 = vadd.f32 %v2673, %v2008
          %v2675 = vadd.f32 %v2674, %v2010
          %v2676 = vadd.f32 %v2675, %v2012
          %v2677 = vadd.f32 %v2676, %v2014
          %v2678 = vadd.f32 %v2677, %v2016
          %v2679 = vadd.f32 %v2678, %v2018
          %v2680 = vadd.f32 %v2679, %v2020
          %v2681 = vadd.f32 %v2680, %v2022
          %v2682 = vadd.f32 %v2681, %v2024
          %v2683 = vadd.f32 %v2682, %v2026
          %v2684 = vadd.f32 %v2683, %v2028
          %v2685 = vadd.f32 %v2684, %v2030
          %v2686 = vadd.f32 %v2685, %v2032
          %v2687 = vadd.f32 %v2686, %v2034
          %v2688 = vadd.f32 %v2687, %v2036
          %v2689 = vadd.f32 %v2688, %v2038
          %v2690 = vadd.f32 %v2689, %v2040
          %v2691 = vadd.f32 %v2690, %v2042
          %v2692 = vadd.f32 %v2691, %v2044
          %v2693 = vadd.f32 %v2692, %v2046
          %v2694 = vadd.f32 %v2693, %v2048
          %v2695 = vadd.f32 %v2694, %v2050
          %v2696 = vadd.f32 %v2695, %v2052
          %v2697 = vadd.f32 %v2696, %v2054
          %v2698 = vadd.f32 %v2697, %v2056
          %v2699 = vadd.f32 %v2698, %v2058
          %v2700 = vadd.f32 %v2699, %v2060
          %v2701 = vadd.f32 %v2700, %v2062
          %v2702 = vadd.f32 %v2701, %v2064
          %v2703 = vadd.f32 %v2702, %v2066
          %v2704 = vadd.f32 %v2703, %v2068
          %v2705 = vadd.f32 %v2704, %v2070
          %v2706 = vadd.f32 %v2705, %v2072
          %v2707 = vadd.f32 %v2706, %v2074
          %v2708 = vadd.f32 %v2707, %v2076
          %v2709 = vadd.f32 %v2708, %v2078
          %v2710 = vadd.f32 %v2709, %v2080
          %v2711 = vadd.f32 %v2710, %v2082
          %v2712 = vadd.f32 %v2711, %v2084
          %v2713 = vadd.f32 %v2712, %v2086
          %v2714 = vadd.f32 %v2713, %v2088
          %v2715 = vadd.f32 %v2714, %v2090
          %v2716 = vadd.f32 %v2715, %v2092
          %v2717 = vadd.f32 %v2716, %v2094
          %v2718 = vadd.f32 %v2717, %v2096
          %v2719 = vadd.f32 %v2718, %v2098
          %v2720 = vadd.f32 %v2719, %v2100
          %v2721 = vadd.f32 %v2720, %v2102
          %v2722 = vadd.f32 %v2721, %v2104
          %v2723 = vadd.f32 %v2722, %v2106
          %v2724 = vadd.f32 %v2723, %v2108
          %v2725 = vadd.f32 %v2724, %v2110
          %v2726 = vadd.f32 %v2725, %v2112
          %v2727 = vadd.f32 %v2726, %v2114
          %v2728 = vadd.f32 %v2727, %v2116
          %v2729 = vadd.f32 %v2728, %v2118
          %v2730 = vadd.f32 %v2729, %v2120
          %v2731 = vadd.f32 %v2730, %v2122
          %v2732 = vadd.f32 %v2731, %v2124
          %v2733 = vadd.f32 %v2732, %v2126
          %v2734 = vadd.f32 %v2733, %v2128
          %v2735 = vadd.f32 %v2734, %v2130
          %v2736 = vadd.f32 %v2735, %v2132
          %v2737 = vadd.f32 %v2736, %v2134
          %v2738 = vadd.f32 %v2737, %v2136
          %v2739 = vadd.f32 %v2738, %v2138
          %v2740 = vadd.f32 %v2739, %v2140
          %v2741 = vadd.f32 %v2740, %v2142
          %v2742 = vadd.f32 %v2741, %v2144
          %v2743 = vadd.f32 %v2742, %v2146
          %v2744 = vadd.f32 %v2743, %v2148
          %v2745 = vadd.f32 %v2744, %v2150
          %v2746 = vadd.f32 %v2745, %v2152
          %v2747 = vadd.f32 %v2746, %v2154
          %v2748 = vadd.f32 %v2747, %v2156
          %v2749 = vadd.f32 %v2748, %v2158
          %v2750 = vadd.f32 %v2749, %v2160
          %v2751 = vadd.f32 %v2750, %v2162
          %v2752 = vadd.f32 %v2751, %v2164
          %v2753 = vadd.f32 %v2752, %v2166
          %v2754 = vadd.f32 %v2753, %v2168
          %v2755 = vadd.f32 %v2754, %v2170
          %v2756 = vadd.f32 %v2755, %v2172
          %v2757 = vadd.f32 %v2756, %v2174
          %v2758 = vadd.f32 %v2757, %v2176
          %v2759 = vadd.f32 %v2758, %v2178
          %v2760 = vadd.f32 %v2759, %v2180
          %v2761 = vadd.f32 %v2760, %v2182
          %v2762 = vadd.f32 %v2761, %v2184
          %v2763 = vadd.f32 %v2762, %v2186
          %v2764 = vadd.f32 %v2763, %v2188
          %v2765 = vadd.f32 %v2764, %v2190
          %v2766 = vadd.f32 %v2765, %v2192
          %v2767 = vadd.f32 %v2766, %v2194
          %v2768 = vadd.f32 %v2767, %v2196
          %v2769 = vadd.f32 %v2768, %v2198
          %v2770 = vadd.f32 %v2769, %v2200
          %v2771 = vadd.f32 %v2770, %v2202
          %v2772 = vadd.f32 %v2771, %v2204
          %v2773 = vadd.f32 %v2772, %v2206
          %v2774 = vadd.f32 %v2773, %v2208
          %v2775 = vadd.f32 %v2774, %v2210
          %v2776 = vadd.f32 %v2775, %v2212
          %v2777 = vadd.f32 %v2776, %v2214
          %v2778 = vadd.f32 %v2777, %v2216
          %v2779 = vadd.f32 %v2778, %v2218
          %v2780 = vadd.f32 %v2779, %v2220
          %v2781 = vadd.f32 %v2780, %v2222
          %v2782 = vadd.f32 %v2781, %v2224
          %v2783 = vadd.f32 %v2782, %v2226
          %v2784 = vadd.f32 %v2783, %v2228
          %v2785 = vadd.f32 %v2784, %v2230
          %v2786 = vadd.f32 %v2785, %v2232
          %v2787 = vadd.f32 %v2786, %v2234
          %v2788 = vadd.f32 %v2787, %v2236
          %v2789 = vadd.f32 %v2788, %v2238
          %v2790 = vadd.f32 %v2789, %v2240
          %v2791 = vadd.f32 %v2790, %v2242
          %v2792 = vadd.f32 %v2791, %v2244
          %v2793 = vadd.f32 %v2792, %v2246
          %v2794 = vadd.f32 %v2793, %v2248
          %v2795 = vadd.f32 %v2794, %v2250
          %v2796 = vadd.f32 %v2795, %v2252
          %v2797 = vadd.f32 %v2796, %v2254
          %v2798 = vadd.f32 %v2797, %v2256
          %v2799 = vadd.f32 %v2798, %v2258
          %v2800 = vadd.f32 %v2799, %v2260
          %v2801 = vadd.f32 %v2800, %v2262
          %v2802 = vadd.f32 %v2801, %v2264
          %v2803 = vadd.f32 %v2802, %v2266
          %v2804 = vadd.f32 %v2803, %v2268
          %v2805 = vadd.f32 %v2804, %v2270
          %v2806 = vadd.f32 %v2805, %v2272
          %v2807 = vadd.f32 %v2806, %v2274
          %v2808 = vadd.f32 %v2807, %v2276
          %v2809 = vadd.f32 %v2808, %v2278
          %v2810 = vadd.f32 %v2809, %v2280
          %v2811 = vadd.f32 %v2810, %v2282
          %v2812 = vadd.f32 %v2811, %v2284
          %v2813 = vadd.f32 %v2812, %v2286
          %v2814 = vadd.f32 %v2813, %v2288
          %v2815 = vadd.f32 %v2814, %v2290
          %v2816 = vadd.f32 %v2815, %v2292
          %v2817 = vadd.f32 %v2816, %v2294
          %v2818 = vadd.f32 %v2817, %v2296
          %v2819 = vadd.f32 %v2818, %v2298
          %v2820 = vadd.f32 %v2819, %v2300
          %v2821 = vadd.f32 %v2820, %v2302
          %v2822 = vadd.f32 %v2821, %v2304
          %v2823 = vadd.f32 %v2311, %v2567
          %v2824 = vadd.f32 %v2312, %v2822
          %2825 = vst [vmem:[#allocation2] sm:$0xff] %v2823
          %2826 = vst [vmem:[#allocation2 + $0x8] sm:$0xff] %v2824
        $region44: #{tpu_custom_call.1} parent=27 // pred_fallthru
          _
        %p2827 = scmp.eq.s32.totalorder %s2306, 2
        // Predicated region
        $region45: #{tpu_custom_call.1} parent=27 // pred_check
          %p2828 = pneg %p2827
        $region46: #{tpu_custom_call.1} parent=27 // pred_check_branch
          %2830 = sbr.rel (%p2828) target = $region48
        $region47: #{tpu_custom_call.1} parent=27 // pred_region
          %v2831 = vlaneseq
          %v2832 = vshrl.u32 %v2831, 7
          %v2833 = vadd.s32 %v2832, 8
          %v2834 = vadd.s32 %v2832, 16
          %v2835 = vadd.s32 %v2832, 24
          %v2836 = vadd.s32 %v2832, 32
          %v2837 = vadd.s32 %v2832, 40
          %v2838 = vadd.s32 %v2832, 48
          %v2839 = vadd.s32 %v2832, 56
          %v2840 = vadd.s32 %v2832, 64
          %v2841 = vadd.s32 %v2832, 72
          %v2842 = vadd.s32 %v2832, 80
          %v2843 = vadd.s32 %v2832, 88
          %v2844 = vadd.s32 %v2832, 96
          %v2845 = vadd.s32 %v2832, 104
          %v2846 = vadd.s32 %v2832, 112
          %v2847 = vadd.s32 %v2832, 120
          %v2848 = vadd.s32 %v2832, 128
          %v2849 = vadd.s32 %v2832, 136
          %v2850 = vadd.s32 %v2832, 144
          %v2851 = vadd.s32 %v2832, 152
          %v2852 = vadd.s32 %v2832, 160
          %v2853 = vadd.s32 %v2832, 168
          %v2854 = vadd.s32 %v2832, 176
          %v2855 = vadd.s32 %v2832, 184
          %v2856 = vadd.s32 %v2832, 192
          %v2857 = vadd.s32 %v2832, 200
          %v2858 = vadd.s32 %v2832, 208
          %v2859 = vadd.s32 %v2832, 216
          %v2860 = vadd.s32 %v2832, 224
          %v2861 = vadd.s32 %v2832, 232
          %v2862 = vadd.s32 %v2832, 240
          %v2863 = vadd.s32 %v2832, 248
          %v2864 = vadd.s32 %v2832, 256
          %v2865 = vadd.s32 %v2832, 264
          %v2866 = vadd.s32 %v2832, 272
          %v2867 = vadd.s32 %v2832, 280
          %v2868 = vadd.s32 %v2832, 288
          %v2869 = vadd.s32 %v2832, 296
          %v2870 = vadd.s32 %v2832, 304
          %v2871 = vadd.s32 %v2832, 312
          %v2872 = vadd.s32 %v2832, 320
          %v2873 = vadd.s32 %v2832, 328
          %v2874 = vadd.s32 %v2832, 336
          %v2875 = vadd.s32 %v2832, 344
          %v2876 = vadd.s32 %v2832, 352
          %v2877 = vadd.s32 %v2832, 360
          %v2878 = vadd.s32 %v2832, 368
          %v2879 = vadd.s32 %v2832, 376
          %v2880 = vadd.s32 %v2832, 384
          %v2881 = vadd.s32 %v2832, 392
          %v2882 = vadd.s32 %v2832, 400
          %v2883 = vadd.s32 %v2832, 408
          %v2884 = vadd.s32 %v2832, 416
          %v2885 = vadd.s32 %v2832, 424
          %v2886 = vadd.s32 %v2832, 432
          %v2887 = vadd.s32 %v2832, 440
          %v2888 = vadd.s32 %v2832, 448
          %v2889 = vadd.s32 %v2832, 456
          %v2890 = vadd.s32 %v2832, 464
          %v2891 = vadd.s32 %v2832, 472
          %v2892 = vadd.s32 %v2832, 480
          %v2893 = vadd.s32 %v2832, 488
          %v2894 = vadd.s32 %v2832, 496
          %v2895 = vadd.s32 %v2832, 504
          %v2896 = vadd.s32 %v2832, 512
          %v2897 = vadd.s32 %v2832, 520
          %v2898 = vadd.s32 %v2832, 528
          %v2899 = vadd.s32 %v2832, 536
          %v2900 = vadd.s32 %v2832, 544
          %v2901 = vadd.s32 %v2832, 552
          %v2902 = vadd.s32 %v2832, 560
          %v2903 = vadd.s32 %v2832, 568
          %v2904 = vadd.s32 %v2832, 576
          %v2905 = vadd.s32 %v2832, 584
          %v2906 = vadd.s32 %v2832, 592
          %v2907 = vadd.s32 %v2832, 600
          %v2908 = vadd.s32 %v2832, 608
          %v2909 = vadd.s32 %v2832, 616
          %v2910 = vadd.s32 %v2832, 624
          %v2911 = vadd.s32 %v2832, 632
          %v2912 = vadd.s32 %v2832, 640
          %v2913 = vadd.s32 %v2832, 648
          %v2914 = vadd.s32 %v2832, 656
          %v2915 = vadd.s32 %v2832, 664
          %v2916 = vadd.s32 %v2832, 672
          %v2917 = vadd.s32 %v2832, 680
          %v2918 = vadd.s32 %v2832, 688
          %v2919 = vadd.s32 %v2832, 696
          %v2920 = vadd.s32 %v2832, 704
          %v2921 = vadd.s32 %v2832, 712
          %v2922 = vadd.s32 %v2832, 720
          %v2923 = vadd.s32 %v2832, 728
          %v2924 = vadd.s32 %v2832, 736
          %v2925 = vadd.s32 %v2832, 744
          %v2926 = vadd.s32 %v2832, 752
          %v2927 = vadd.s32 %v2832, 760
          %v2928 = vadd.s32 %v2832, 768
          %v2929 = vadd.s32 %v2832, 776
          %v2930 = vadd.s32 %v2832, 784
          %v2931 = vadd.s32 %v2832, 792
          %v2932 = vadd.s32 %v2832, 800
          %v2933 = vadd.s32 %v2832, 808
          %v2934 = vadd.s32 %v2832, 816
          %v2935 = vadd.s32 %v2832, 824
          %v2936 = vadd.s32 %v2832, 832
          %v2937 = vadd.s32 %v2832, 840
          %v2938 = vadd.s32 %v2832, 848
          %v2939 = vadd.s32 %v2832, 856
          %v2940 = vadd.s32 %v2832, 864
          %v2941 = vadd.s32 %v2832, 872
          %v2942 = vadd.s32 %v2832, 880
          %v2943 = vadd.s32 %v2832, 888
          %v2944 = vadd.s32 %v2832, 896
          %v2945 = vadd.s32 %v2832, 904
          %v2946 = vadd.s32 %v2832, 912
          %v2947 = vadd.s32 %v2832, 920
          %v2948 = vadd.s32 %v2832, 928
          %v2949 = vadd.s32 %v2832, 936
          %v2950 = vadd.s32 %v2832, 944
          %v2951 = vadd.s32 %v2832, 952
          %v2952 = vadd.s32 %v2832, 960
          %v2953 = vadd.s32 %v2832, 968
          %v2954 = vadd.s32 %v2832, 976
          %v2955 = vadd.s32 %v2832, 984
          %v2956 = vadd.s32 %v2832, 992
          %v2957 = vadd.s32 %v2832, 1000
          %v2958 = vadd.s32 %v2832, 1008
          %v2959 = vadd.s32 %v2832, 1016
          %v2960 = vadd.s32 %v2832, 1024
          %v2961 = vadd.s32 %v2832, 1032
          %v2962 = vadd.s32 %v2832, 1040
          %v2963 = vadd.s32 %v2832, 1048
          %v2964 = vadd.s32 %v2832, 1056
          %v2965 = vadd.s32 %v2832, 1064
          %v2966 = vadd.s32 %v2832, 1072
          %v2967 = vadd.s32 %v2832, 1080
          %v2968 = vadd.s32 %v2832, 1088
          %v2969 = vadd.s32 %v2832, 1096
          %v2970 = vadd.s32 %v2832, 1104
          %v2971 = vadd.s32 %v2832, 1112
          %v2972 = vadd.s32 %v2832, 1120
          %v2973 = vadd.s32 %v2832, 1128
          %v2974 = vadd.s32 %v2832, 1136
          %v2975 = vadd.s32 %v2832, 1144
          %v2976 = vadd.s32 %v2832, 1152
          %v2977 = vadd.s32 %v2832, 1160
          %v2978 = vadd.s32 %v2832, 1168
          %v2979 = vadd.s32 %v2832, 1176
          %v2980 = vadd.s32 %v2832, 1184
          %v2981 = vadd.s32 %v2832, 1192
          %v2982 = vadd.s32 %v2832, 1200
          %v2983 = vadd.s32 %v2832, 1208
          %v2984 = vadd.s32 %v2832, 1216
          %v2985 = vadd.s32 %v2832, 1224
          %v2986 = vadd.s32 %v2832, 1232
          %v2987 = vadd.s32 %v2832, 1240
          %v2988 = vadd.s32 %v2832, 1248
          %v2989 = vadd.s32 %v2832, 1256
          %v2990 = vadd.s32 %v2832, 1264
          %v2991 = vadd.s32 %v2832, 1272
          %v2992 = vadd.s32 %v2832, 1280
          %v2993 = vadd.s32 %v2832, 1288
          %v2994 = vadd.s32 %v2832, 1296
          %v2995 = vadd.s32 %v2832, 1304
          %v2996 = vadd.s32 %v2832, 1312
          %v2997 = vadd.s32 %v2832, 1320
          %v2998 = vadd.s32 %v2832, 1328
          %v2999 = vadd.s32 %v2832, 1336
          %v3000 = vadd.s32 %v2832, 1344
          %v3001 = vadd.s32 %v2832, 1352
          %v3002 = vadd.s32 %v2832, 1360
          %v3003 = vadd.s32 %v2832, 1368
          %v3004 = vadd.s32 %v2832, 1376
          %v3005 = vadd.s32 %v2832, 1384
          %v3006 = vadd.s32 %v2832, 1392
          %v3007 = vadd.s32 %v2832, 1400
          %v3008 = vadd.s32 %v2832, 1408
          %v3009 = vadd.s32 %v2832, 1416
          %v3010 = vadd.s32 %v2832, 1424
          %v3011 = vadd.s32 %v2832, 1432
          %v3012 = vadd.s32 %v2832, 1440
          %v3013 = vadd.s32 %v2832, 1448
          %v3014 = vadd.s32 %v2832, 1456
          %v3015 = vadd.s32 %v2832, 1464
          %v3016 = vadd.s32 %v2832, 1472
          %v3017 = vadd.s32 %v2832, 1480
          %v3018 = vadd.s32 %v2832, 1488
          %v3019 = vadd.s32 %v2832, 1496
          %v3020 = vadd.s32 %v2832, 1504
          %v3021 = vadd.s32 %v2832, 1512
          %v3022 = vadd.s32 %v2832, 1520
          %v3023 = vadd.s32 %v2832, 1528
          %v3024 = vadd.s32 %v2832, 1536
          %v3025 = vadd.s32 %v2832, 1544
          %v3026 = vadd.s32 %v2832, 1552
          %v3027 = vadd.s32 %v2832, 1560
          %v3028 = vadd.s32 %v2832, 1568
          %v3029 = vadd.s32 %v2832, 1576
          %v3030 = vadd.s32 %v2832, 1584
          %v3031 = vadd.s32 %v2832, 1592
          %v3032 = vadd.s32 %v2832, 1600
          %v3033 = vadd.s32 %v2832, 1608
          %v3034 = vadd.s32 %v2832, 1616
          %v3035 = vadd.s32 %v2832, 1624
          %v3036 = vadd.s32 %v2832, 1632
          %v3037 = vadd.s32 %v2832, 1640
          %v3038 = vadd.s32 %v2832, 1648
          %v3039 = vadd.s32 %v2832, 1656
          %v3040 = vadd.s32 %v2832, 1664
          %v3041 = vadd.s32 %v2832, 1672
          %v3042 = vadd.s32 %v2832, 1680
          %v3043 = vadd.s32 %v2832, 1688
          %v3044 = vadd.s32 %v2832, 1696
          %v3045 = vadd.s32 %v2832, 1704
          %v3046 = vadd.s32 %v2832, 1712
          %v3047 = vadd.s32 %v2832, 1720
          %v3048 = vadd.s32 %v2832, 1728
          %v3049 = vadd.s32 %v2832, 1736
          %v3050 = vadd.s32 %v2832, 1744
          %v3051 = vadd.s32 %v2832, 1752
          %v3052 = vadd.s32 %v2832, 1760
          %v3053 = vadd.s32 %v2832, 1768
          %v3054 = vadd.s32 %v2832, 1776
          %v3055 = vadd.s32 %v2832, 1784
          %v3056 = vadd.s32 %v2832, 1792
          %v3057 = vadd.s32 %v2832, 1800
          %v3058 = vadd.s32 %v2832, 1808
          %v3059 = vadd.s32 %v2832, 1816
          %v3060 = vadd.s32 %v2832, 1824
          %v3061 = vadd.s32 %v2832, 1832
          %v3062 = vadd.s32 %v2832, 1840
          %v3063 = vadd.s32 %v2832, 1848
          %v3064 = vadd.s32 %v2832, 1856
          %v3065 = vadd.s32 %v2832, 1864
          %v3066 = vadd.s32 %v2832, 1872
          %v3067 = vadd.s32 %v2832, 1880
          %v3068 = vadd.s32 %v2832, 1888
          %v3069 = vadd.s32 %v2832, 1896
          %v3070 = vadd.s32 %v2832, 1904
          %v3071 = vadd.s32 %v2832, 1912
          %v3072 = vadd.s32 %v2832, 1920
          %v3073 = vadd.s32 %v2832, 1928
          %v3074 = vadd.s32 %v2832, 1936
          %v3075 = vadd.s32 %v2832, 1944
          %v3076 = vadd.s32 %v2832, 1952
          %v3077 = vadd.s32 %v2832, 1960
          %v3078 = vadd.s32 %v2832, 1968
          %v3079 = vadd.s32 %v2832, 1976
          %v3080 = vadd.s32 %v2832, 1984
          %v3081 = vadd.s32 %v2832, 1992
          %v3082 = vadd.s32 %v2832, 2000
          %v3083 = vadd.s32 %v2832, 2008
          %v3084 = vadd.s32 %v2832, 2016
          %v3085 = vadd.s32 %v2832, 2024
          %v3086 = vadd.s32 %v2832, 2032
          %v3087 = vadd.s32 %v2832, 2040
          %v3088 = vadd.s32 %v2832, 4096
          %v3089 = vadd.s32 %v2833, 4096
          %v3090 = vadd.s32 %v2834, 4096
          %v3091 = vadd.s32 %v2835, 4096
          %v3092 = vadd.s32 %v2836, 4096
          %v3093 = vadd.s32 %v2837, 4096
          %v3094 = vadd.s32 %v2838, 4096
          %v3095 = vadd.s32 %v2839, 4096
          %v3096 = vadd.s32 %v2840, 4096
          %v3097 = vadd.s32 %v2841, 4096
          %v3098 = vadd.s32 %v2842, 4096
          %v3099 = vadd.s32 %v2843, 4096
          %v3100 = vadd.s32 %v2844, 4096
          %v3101 = vadd.s32 %v2845, 4096
          %v3102 = vadd.s32 %v2846, 4096
          %v3103 = vadd.s32 %v2847, 4096
          %v3104 = vadd.s32 %v2848, 4096
          %v3105 = vadd.s32 %v2849, 4096
          %v3106 = vadd.s32 %v2850, 4096
          %v3107 = vadd.s32 %v2851, 4096
          %v3108 = vadd.s32 %v2852, 4096
          %v3109 = vadd.s32 %v2853, 4096
          %v3110 = vadd.s32 %v2854, 4096
          %v3111 = vadd.s32 %v2855, 4096
          %v3112 = vadd.s32 %v2856, 4096
          %v3113 = vadd.s32 %v2857, 4096
          %v3114 = vadd.s32 %v2858, 4096
          %v3115 = vadd.s32 %v2859, 4096
          %v3116 = vadd.s32 %v2860, 4096
          %v3117 = vadd.s32 %v2861, 4096
          %v3118 = vadd.s32 %v2862, 4096
          %v3119 = vadd.s32 %v2863, 4096
          %v3120 = vadd.s32 %v2864, 4096
          %v3121 = vadd.s32 %v2865, 4096
          %v3122 = vadd.s32 %v2866, 4096
          %v3123 = vadd.s32 %v2867, 4096
          %v3124 = vadd.s32 %v2868, 4096
          %v3125 = vadd.s32 %v2869, 4096
          %v3126 = vadd.s32 %v2870, 4096
          %v3127 = vadd.s32 %v2871, 4096
          %v3128 = vadd.s32 %v2872, 4096
          %v3129 = vadd.s32 %v2873, 4096
          %v3130 = vadd.s32 %v2874, 4096
          %v3131 = vadd.s32 %v2875, 4096
          %v3132 = vadd.s32 %v2876, 4096
          %v3133 = vadd.s32 %v2877, 4096
          %v3134 = vadd.s32 %v2878, 4096
          %v3135 = vadd.s32 %v2879, 4096
          %v3136 = vadd.s32 %v2880, 4096
          %v3137 = vadd.s32 %v2881, 4096
          %v3138 = vadd.s32 %v2882, 4096
          %v3139 = vadd.s32 %v2883, 4096
          %v3140 = vadd.s32 %v2884, 4096
          %v3141 = vadd.s32 %v2885, 4096
          %v3142 = vadd.s32 %v2886, 4096
          %v3143 = vadd.s32 %v2887, 4096
          %v3144 = vadd.s32 %v2888, 4096
          %v3145 = vadd.s32 %v2889, 4096
          %v3146 = vadd.s32 %v2890, 4096
          %v3147 = vadd.s32 %v2891, 4096
          %v3148 = vadd.s32 %v2892, 4096
          %v3149 = vadd.s32 %v2893, 4096
          %v3150 = vadd.s32 %v2894, 4096
          %v3151 = vadd.s32 %v2895, 4096
          %v3152 = vadd.s32 %v2896, 4096
          %v3153 = vadd.s32 %v2897, 4096
          %v3154 = vadd.s32 %v2898, 4096
          %v3155 = vadd.s32 %v2899, 4096
          %v3156 = vadd.s32 %v2900, 4096
          %v3157 = vadd.s32 %v2901, 4096
          %v3158 = vadd.s32 %v2902, 4096
          %v3159 = vadd.s32 %v2903, 4096
          %v3160 = vadd.s32 %v2904, 4096
          %v3161 = vadd.s32 %v2905, 4096
          %v3162 = vadd.s32 %v2906, 4096
          %v3163 = vadd.s32 %v2907, 4096
          %v3164 = vadd.s32 %v2908, 4096
          %v3165 = vadd.s32 %v2909, 4096
          %v3166 = vadd.s32 %v2910, 4096
          %v3167 = vadd.s32 %v2911, 4096
          %v3168 = vadd.s32 %v2912, 4096
          %v3169 = vadd.s32 %v2913, 4096
          %v3170 = vadd.s32 %v2914, 4096
          %v3171 = vadd.s32 %v2915, 4096
          %v3172 = vadd.s32 %v2916, 4096
          %v3173 = vadd.s32 %v2917, 4096
          %v3174 = vadd.s32 %v2918, 4096
          %v3175 = vadd.s32 %v2919, 4096
          %v3176 = vadd.s32 %v2920, 4096
          %v3177 = vadd.s32 %v2921, 4096
          %v3178 = vadd.s32 %v2922, 4096
          %v3179 = vadd.s32 %v2923, 4096
          %v3180 = vadd.s32 %v2924, 4096
          %v3181 = vadd.s32 %v2925, 4096
          %v3182 = vadd.s32 %v2926, 4096
          %v3183 = vadd.s32 %v2927, 4096
          %v3184 = vadd.s32 %v2928, 4096
          %v3185 = vadd.s32 %v2929, 4096
          %v3186 = vadd.s32 %v2930, 4096
          %v3187 = vadd.s32 %v2931, 4096
          %v3188 = vadd.s32 %v2932, 4096
          %v3189 = vadd.s32 %v2933, 4096
          %v3190 = vadd.s32 %v2934, 4096
          %v3191 = vadd.s32 %v2935, 4096
          %v3192 = vadd.s32 %v2936, 4096
          %v3193 = vadd.s32 %v2937, 4096
          %v3194 = vadd.s32 %v2938, 4096
          %v3195 = vadd.s32 %v2939, 4096
          %v3196 = vadd.s32 %v2940, 4096
          %v3197 = vadd.s32 %v2941, 4096
          %v3198 = vadd.s32 %v2942, 4096
          %v3199 = vadd.s32 %v2943, 4096
          %v3200 = vadd.s32 %v2944, 4096
          %v3201 = vadd.s32 %v2945, 4096
          %v3202 = vadd.s32 %v2946, 4096
          %v3203 = vadd.s32 %v2947, 4096
          %v3204 = vadd.s32 %v2948, 4096
          %v3205 = vadd.s32 %v2949, 4096
          %v3206 = vadd.s32 %v2950, 4096
          %v3207 = vadd.s32 %v2951, 4096
          %v3208 = vadd.s32 %v2952, 4096
          %v3209 = vadd.s32 %v2953, 4096
          %v3210 = vadd.s32 %v2954, 4096
          %v3211 = vadd.s32 %v2955, 4096
          %v3212 = vadd.s32 %v2956, 4096
          %v3213 = vadd.s32 %v2957, 4096
          %v3214 = vadd.s32 %v2958, 4096
          %v3215 = vadd.s32 %v2959, 4096
          %v3216 = vadd.s32 %v2960, 4096
          %v3217 = vadd.s32 %v2961, 4096
          %v3218 = vadd.s32 %v2962, 4096
          %v3219 = vadd.s32 %v2963, 4096
          %v3220 = vadd.s32 %v2964, 4096
          %v3221 = vadd.s32 %v2965, 4096
          %v3222 = vadd.s32 %v2966, 4096
          %v3223 = vadd.s32 %v2967, 4096
          %v3224 = vadd.s32 %v2968, 4096
          %v3225 = vadd.s32 %v2969, 4096
          %v3226 = vadd.s32 %v2970, 4096
          %v3227 = vadd.s32 %v2971, 4096
          %v3228 = vadd.s32 %v2972, 4096
          %v3229 = vadd.s32 %v2973, 4096
          %v3230 = vadd.s32 %v2974, 4096
          %v3231 = vadd.s32 %v2975, 4096
          %v3232 = vadd.s32 %v2976, 4096
          %v3233 = vadd.s32 %v2977, 4096
          %v3234 = vadd.s32 %v2978, 4096
          %v3235 = vadd.s32 %v2979, 4096
          %v3236 = vadd.s32 %v2980, 4096
          %v3237 = vadd.s32 %v2981, 4096
          %v3238 = vadd.s32 %v2982, 4096
          %v3239 = vadd.s32 %v2983, 4096
          %v3240 = vadd.s32 %v2984, 4096
          %v3241 = vadd.s32 %v2985, 4096
          %v3242 = vadd.s32 %v2986, 4096
          %v3243 = vadd.s32 %v2987, 4096
          %v3244 = vadd.s32 %v2988, 4096
          %v3245 = vadd.s32 %v2989, 4096
          %v3246 = vadd.s32 %v2990, 4096
          %v3247 = vadd.s32 %v2991, 4096
          %v3248 = vadd.s32 %v2992, 4096
          %v3249 = vadd.s32 %v2993, 4096
          %v3250 = vadd.s32 %v2994, 4096
          %v3251 = vadd.s32 %v2995, 4096
          %v3252 = vadd.s32 %v2996, 4096
          %v3253 = vadd.s32 %v2997, 4096
          %v3254 = vadd.s32 %v2998, 4096
          %v3255 = vadd.s32 %v2999, 4096
          %v3256 = vadd.s32 %v3000, 4096
          %v3257 = vadd.s32 %v3001, 4096
          %v3258 = vadd.s32 %v3002, 4096
          %v3259 = vadd.s32 %v3003, 4096
          %v3260 = vadd.s32 %v3004, 4096
          %v3261 = vadd.s32 %v3005, 4096
          %v3262 = vadd.s32 %v3006, 4096
          %v3263 = vadd.s32 %v3007, 4096
          %v3264 = vadd.s32 %v3008, 4096
          %v3265 = vadd.s32 %v3009, 4096
          %v3266 = vadd.s32 %v3010, 4096
          %v3267 = vadd.s32 %v3011, 4096
          %v3268 = vadd.s32 %v3012, 4096
          %v3269 = vadd.s32 %v3013, 4096
          %v3270 = vadd.s32 %v3014, 4096
          %v3271 = vadd.s32 %v3015, 4096
          %v3272 = vadd.s32 %v3016, 4096
          %v3273 = vadd.s32 %v3017, 4096
          %v3274 = vadd.s32 %v3018, 4096
          %v3275 = vadd.s32 %v3019, 4096
          %v3276 = vadd.s32 %v3020, 4096
          %v3277 = vadd.s32 %v3021, 4096
          %v3278 = vadd.s32 %v3022, 4096
          %v3279 = vadd.s32 %v3023, 4096
          %v3280 = vadd.s32 %v3024, 4096
          %v3281 = vadd.s32 %v3025, 4096
          %v3282 = vadd.s32 %v3026, 4096
          %v3283 = vadd.s32 %v3027, 4096
          %v3284 = vadd.s32 %v3028, 4096
          %v3285 = vadd.s32 %v3029, 4096
          %v3286 = vadd.s32 %v3030, 4096
          %v3287 = vadd.s32 %v3031, 4096
          %v3288 = vadd.s32 %v3032, 4096
          %v3289 = vadd.s32 %v3033, 4096
          %v3290 = vadd.s32 %v3034, 4096
          %v3291 = vadd.s32 %v3035, 4096
          %v3292 = vadd.s32 %v3036, 4096
          %v3293 = vadd.s32 %v3037, 4096
          %v3294 = vadd.s32 %v3038, 4096
          %v3295 = vadd.s32 %v3039, 4096
          %v3296 = vadd.s32 %v3040, 4096
          %v3297 = vadd.s32 %v3041, 4096
          %v3298 = vadd.s32 %v3042, 4096
          %v3299 = vadd.s32 %v3043, 4096
          %v3300 = vadd.s32 %v3044, 4096
          %v3301 = vadd.s32 %v3045, 4096
          %v3302 = vadd.s32 %v3046, 4096
          %v3303 = vadd.s32 %v3047, 4096
          %v3304 = vadd.s32 %v3048, 4096
          %v3305 = vadd.s32 %v3049, 4096
          %v3306 = vadd.s32 %v3050, 4096
          %v3307 = vadd.s32 %v3051, 4096
          %v3308 = vadd.s32 %v3052, 4096
          %v3309 = vadd.s32 %v3053, 4096
          %v3310 = vadd.s32 %v3054, 4096
          %v3311 = vadd.s32 %v3055, 4096
          %v3312 = vadd.s32 %v3056, 4096
          %v3313 = vadd.s32 %v3057, 4096
          %v3314 = vadd.s32 %v3058, 4096
          %v3315 = vadd.s32 %v3059, 4096
          %v3316 = vadd.s32 %v3060, 4096
          %v3317 = vadd.s32 %v3061, 4096
          %v3318 = vadd.s32 %v3062, 4096
          %v3319 = vadd.s32 %v3063, 4096
          %v3320 = vadd.s32 %v3064, 4096
          %v3321 = vadd.s32 %v3065, 4096
          %v3322 = vadd.s32 %v3066, 4096
          %v3323 = vadd.s32 %v3067, 4096
          %v3324 = vadd.s32 %v3068, 4096
          %v3325 = vadd.s32 %v3069, 4096
          %v3326 = vadd.s32 %v3070, 4096
          %v3327 = vadd.s32 %v3071, 4096
          %v3328 = vadd.s32 %v3072, 4096
          %v3329 = vadd.s32 %v3073, 4096
          %v3330 = vadd.s32 %v3074, 4096
          %v3331 = vadd.s32 %v3075, 4096
          %v3332 = vadd.s32 %v3076, 4096
          %v3333 = vadd.s32 %v3077, 4096
          %v3334 = vadd.s32 %v3078, 4096
          %v3335 = vadd.s32 %v3079, 4096
          %v3336 = vadd.s32 %v3080, 4096
          %v3337 = vadd.s32 %v3081, 4096
          %v3338 = vadd.s32 %v3082, 4096
          %v3339 = vadd.s32 %v3083, 4096
          %v3340 = vadd.s32 %v3084, 4096
          %v3341 = vadd.s32 %v3085, 4096
          %v3342 = vadd.s32 %v3086, 4096
          %v3343 = vadd.s32 %v3087, 4096
          %vm3344 = vcmp.lt.s32.totalorder %v3088, 5000
          %vm3345 = vcmp.lt.s32.totalorder %v3089, 5000
          %vm3346 = vcmp.lt.s32.totalorder %v3090, 5000
          %vm3347 = vcmp.lt.s32.totalorder %v3091, 5000
          %vm3348 = vcmp.lt.s32.totalorder %v3092, 5000
          %vm3349 = vcmp.lt.s32.totalorder %v3093, 5000
          %vm3350 = vcmp.lt.s32.totalorder %v3094, 5000
          %vm3351 = vcmp.lt.s32.totalorder %v3095, 5000
          %vm3352 = vcmp.lt.s32.totalorder %v3096, 5000
          %vm3353 = vcmp.lt.s32.totalorder %v3097, 5000
          %vm3354 = vcmp.lt.s32.totalorder %v3098, 5000
          %vm3355 = vcmp.lt.s32.totalorder %v3099, 5000
          %vm3356 = vcmp.lt.s32.totalorder %v3100, 5000
          %vm3357 = vcmp.lt.s32.totalorder %v3101, 5000
          %vm3358 = vcmp.lt.s32.totalorder %v3102, 5000
          %vm3359 = vcmp.lt.s32.totalorder %v3103, 5000
          %vm3360 = vcmp.lt.s32.totalorder %v3104, 5000
          %vm3361 = vcmp.lt.s32.totalorder %v3105, 5000
          %vm3362 = vcmp.lt.s32.totalorder %v3106, 5000
          %vm3363 = vcmp.lt.s32.totalorder %v3107, 5000
          %vm3364 = vcmp.lt.s32.totalorder %v3108, 5000
          %vm3365 = vcmp.lt.s32.totalorder %v3109, 5000
          %vm3366 = vcmp.lt.s32.totalorder %v3110, 5000
          %vm3367 = vcmp.lt.s32.totalorder %v3111, 5000
          %vm3368 = vcmp.lt.s32.totalorder %v3112, 5000
          %vm3369 = vcmp.lt.s32.totalorder %v3113, 5000
          %vm3370 = vcmp.lt.s32.totalorder %v3114, 5000
          %vm3371 = vcmp.lt.s32.totalorder %v3115, 5000
          %vm3372 = vcmp.lt.s32.totalorder %v3116, 5000
          %vm3373 = vcmp.lt.s32.totalorder %v3117, 5000
          %vm3374 = vcmp.lt.s32.totalorder %v3118, 5000
          %vm3375 = vcmp.lt.s32.totalorder %v3119, 5000
          %vm3376 = vcmp.lt.s32.totalorder %v3120, 5000
          %vm3377 = vcmp.lt.s32.totalorder %v3121, 5000
          %vm3378 = vcmp.lt.s32.totalorder %v3122, 5000
          %vm3379 = vcmp.lt.s32.totalorder %v3123, 5000
          %vm3380 = vcmp.lt.s32.totalorder %v3124, 5000
          %vm3381 = vcmp.lt.s32.totalorder %v3125, 5000
          %vm3382 = vcmp.lt.s32.totalorder %v3126, 5000
          %vm3383 = vcmp.lt.s32.totalorder %v3127, 5000
          %vm3384 = vcmp.lt.s32.totalorder %v3128, 5000
          %vm3385 = vcmp.lt.s32.totalorder %v3129, 5000
          %vm3386 = vcmp.lt.s32.totalorder %v3130, 5000
          %vm3387 = vcmp.lt.s32.totalorder %v3131, 5000
          %vm3388 = vcmp.lt.s32.totalorder %v3132, 5000
          %vm3389 = vcmp.lt.s32.totalorder %v3133, 5000
          %vm3390 = vcmp.lt.s32.totalorder %v3134, 5000
          %vm3391 = vcmp.lt.s32.totalorder %v3135, 5000
          %vm3392 = vcmp.lt.s32.totalorder %v3136, 5000
          %vm3393 = vcmp.lt.s32.totalorder %v3137, 5000
          %vm3394 = vcmp.lt.s32.totalorder %v3138, 5000
          %vm3395 = vcmp.lt.s32.totalorder %v3139, 5000
          %vm3396 = vcmp.lt.s32.totalorder %v3140, 5000
          %vm3397 = vcmp.lt.s32.totalorder %v3141, 5000
          %vm3398 = vcmp.lt.s32.totalorder %v3142, 5000
          %vm3399 = vcmp.lt.s32.totalorder %v3143, 5000
          %vm3400 = vcmp.lt.s32.totalorder %v3144, 5000
          %vm3401 = vcmp.lt.s32.totalorder %v3145, 5000
          %vm3402 = vcmp.lt.s32.totalorder %v3146, 5000
          %vm3403 = vcmp.lt.s32.totalorder %v3147, 5000
          %vm3404 = vcmp.lt.s32.totalorder %v3148, 5000
          %vm3405 = vcmp.lt.s32.totalorder %v3149, 5000
          %vm3406 = vcmp.lt.s32.totalorder %v3150, 5000
          %vm3407 = vcmp.lt.s32.totalorder %v3151, 5000
          %vm3408 = vcmp.lt.s32.totalorder %v3152, 5000
          %vm3409 = vcmp.lt.s32.totalorder %v3153, 5000
          %vm3410 = vcmp.lt.s32.totalorder %v3154, 5000
          %vm3411 = vcmp.lt.s32.totalorder %v3155, 5000
          %vm3412 = vcmp.lt.s32.totalorder %v3156, 5000
          %vm3413 = vcmp.lt.s32.totalorder %v3157, 5000
          %vm3414 = vcmp.lt.s32.totalorder %v3158, 5000
          %vm3415 = vcmp.lt.s32.totalorder %v3159, 5000
          %vm3416 = vcmp.lt.s32.totalorder %v3160, 5000
          %vm3417 = vcmp.lt.s32.totalorder %v3161, 5000
          %vm3418 = vcmp.lt.s32.totalorder %v3162, 5000
          %vm3419 = vcmp.lt.s32.totalorder %v3163, 5000
          %vm3420 = vcmp.lt.s32.totalorder %v3164, 5000
          %vm3421 = vcmp.lt.s32.totalorder %v3165, 5000
          %vm3422 = vcmp.lt.s32.totalorder %v3166, 5000
          %vm3423 = vcmp.lt.s32.totalorder %v3167, 5000
          %vm3424 = vcmp.lt.s32.totalorder %v3168, 5000
          %vm3425 = vcmp.lt.s32.totalorder %v3169, 5000
          %vm3426 = vcmp.lt.s32.totalorder %v3170, 5000
          %vm3427 = vcmp.lt.s32.totalorder %v3171, 5000
          %vm3428 = vcmp.lt.s32.totalorder %v3172, 5000
          %vm3429 = vcmp.lt.s32.totalorder %v3173, 5000
          %vm3430 = vcmp.lt.s32.totalorder %v3174, 5000
          %vm3431 = vcmp.lt.s32.totalorder %v3175, 5000
          %vm3432 = vcmp.lt.s32.totalorder %v3176, 5000
          %vm3433 = vcmp.lt.s32.totalorder %v3177, 5000
          %vm3434 = vcmp.lt.s32.totalorder %v3178, 5000
          %vm3435 = vcmp.lt.s32.totalorder %v3179, 5000
          %vm3436 = vcmp.lt.s32.totalorder %v3180, 5000
          %vm3437 = vcmp.lt.s32.totalorder %v3181, 5000
          %vm3438 = vcmp.lt.s32.totalorder %v3182, 5000
          %vm3439 = vcmp.lt.s32.totalorder %v3183, 5000
          %vm3440 = vcmp.lt.s32.totalorder %v3184, 5000
          %vm3441 = vcmp.lt.s32.totalorder %v3185, 5000
          %vm3442 = vcmp.lt.s32.totalorder %v3186, 5000
          %vm3443 = vcmp.lt.s32.totalorder %v3187, 5000
          %vm3444 = vcmp.lt.s32.totalorder %v3188, 5000
          %vm3445 = vcmp.lt.s32.totalorder %v3189, 5000
          %vm3446 = vcmp.lt.s32.totalorder %v3190, 5000
          %vm3447 = vcmp.lt.s32.totalorder %v3191, 5000
          %vm3448 = vcmp.lt.s32.totalorder %v3192, 5000
          %vm3449 = vcmp.lt.s32.totalorder %v3193, 5000
          %vm3450 = vcmp.lt.s32.totalorder %v3194, 5000
          %vm3451 = vcmp.lt.s32.totalorder %v3195, 5000
          %vm3452 = vcmp.lt.s32.totalorder %v3196, 5000
          %vm3453 = vcmp.lt.s32.totalorder %v3197, 5000
          %vm3454 = vcmp.lt.s32.totalorder %v3198, 5000
          %vm3455 = vcmp.lt.s32.totalorder %v3199, 5000
          %vm3456 = vcmp.lt.s32.totalorder %v3200, 5000
          %vm3457 = vcmp.lt.s32.totalorder %v3201, 5000
          %vm3458 = vcmp.lt.s32.totalorder %v3202, 5000
          %vm3459 = vcmp.lt.s32.totalorder %v3203, 5000
          %vm3460 = vcmp.lt.s32.totalorder %v3204, 5000
          %vm3461 = vcmp.lt.s32.totalorder %v3205, 5000
          %vm3462 = vcmp.lt.s32.totalorder %v3206, 5000
          %vm3463 = vcmp.lt.s32.totalorder %v3207, 5000
          %vm3464 = vcmp.lt.s32.totalorder %v3208, 5000
          %vm3465 = vcmp.lt.s32.totalorder %v3209, 5000
          %vm3466 = vcmp.lt.s32.totalorder %v3210, 5000
          %vm3467 = vcmp.lt.s32.totalorder %v3211, 5000
          %vm3468 = vcmp.lt.s32.totalorder %v3212, 5000
          %vm3469 = vcmp.lt.s32.totalorder %v3213, 5000
          %vm3470 = vcmp.lt.s32.totalorder %v3214, 5000
          %vm3471 = vcmp.lt.s32.totalorder %v3215, 5000
          %vm3472 = vcmp.lt.s32.totalorder %v3216, 5000
          %vm3473 = vcmp.lt.s32.totalorder %v3217, 5000
          %vm3474 = vcmp.lt.s32.totalorder %v3218, 5000
          %vm3475 = vcmp.lt.s32.totalorder %v3219, 5000
          %vm3476 = vcmp.lt.s32.totalorder %v3220, 5000
          %vm3477 = vcmp.lt.s32.totalorder %v3221, 5000
          %vm3478 = vcmp.lt.s32.totalorder %v3222, 5000
          %vm3479 = vcmp.lt.s32.totalorder %v3223, 5000
          %vm3480 = vcmp.lt.s32.totalorder %v3224, 5000
          %vm3481 = vcmp.lt.s32.totalorder %v3225, 5000
          %vm3482 = vcmp.lt.s32.totalorder %v3226, 5000
          %vm3483 = vcmp.lt.s32.totalorder %v3227, 5000
          %vm3484 = vcmp.lt.s32.totalorder %v3228, 5000
          %vm3485 = vcmp.lt.s32.totalorder %v3229, 5000
          %vm3486 = vcmp.lt.s32.totalorder %v3230, 5000
          %vm3487 = vcmp.lt.s32.totalorder %v3231, 5000
          %vm3488 = vcmp.lt.s32.totalorder %v3232, 5000
          %vm3489 = vcmp.lt.s32.totalorder %v3233, 5000
          %vm3490 = vcmp.lt.s32.totalorder %v3234, 5000
          %vm3491 = vcmp.lt.s32.totalorder %v3235, 5000
          %vm3492 = vcmp.lt.s32.totalorder %v3236, 5000
          %vm3493 = vcmp.lt.s32.totalorder %v3237, 5000
          %vm3494 = vcmp.lt.s32.totalorder %v3238, 5000
          %vm3495 = vcmp.lt.s32.totalorder %v3239, 5000
          %vm3496 = vcmp.lt.s32.totalorder %v3240, 5000
          %vm3497 = vcmp.lt.s32.totalorder %v3241, 5000
          %vm3498 = vcmp.lt.s32.totalorder %v3242, 5000
          %vm3499 = vcmp.lt.s32.totalorder %v3243, 5000
          %vm3500 = vcmp.lt.s32.totalorder %v3244, 5000
          %vm3501 = vcmp.lt.s32.totalorder %v3245, 5000
          %vm3502 = vcmp.lt.s32.totalorder %v3246, 5000
          %vm3503 = vcmp.lt.s32.totalorder %v3247, 5000
          %vm3504 = vcmp.lt.s32.totalorder %v3248, 5000
          %vm3505 = vcmp.lt.s32.totalorder %v3249, 5000
          %vm3506 = vcmp.lt.s32.totalorder %v3250, 5000
          %vm3507 = vcmp.lt.s32.totalorder %v3251, 5000
          %vm3508 = vcmp.lt.s32.totalorder %v3252, 5000
          %vm3509 = vcmp.lt.s32.totalorder %v3253, 5000
          %vm3510 = vcmp.lt.s32.totalorder %v3254, 5000
          %vm3511 = vcmp.lt.s32.totalorder %v3255, 5000
          %vm3512 = vcmp.lt.s32.totalorder %v3256, 5000
          %vm3513 = vcmp.lt.s32.totalorder %v3257, 5000
          %vm3514 = vcmp.lt.s32.totalorder %v3258, 5000
          %vm3515 = vcmp.lt.s32.totalorder %v3259, 5000
          %vm3516 = vcmp.lt.s32.totalorder %v3260, 5000
          %vm3517 = vcmp.lt.s32.totalorder %v3261, 5000
          %vm3518 = vcmp.lt.s32.totalorder %v3262, 5000
          %vm3519 = vcmp.lt.s32.totalorder %v3263, 5000
          %vm3520 = vcmp.lt.s32.totalorder %v3264, 5000
          %vm3521 = vcmp.lt.s32.totalorder %v3265, 5000
          %vm3522 = vcmp.lt.s32.totalorder %v3266, 5000
          %vm3523 = vcmp.lt.s32.totalorder %v3267, 5000
          %vm3524 = vcmp.lt.s32.totalorder %v3268, 5000
          %vm3525 = vcmp.lt.s32.totalorder %v3269, 5000
          %vm3526 = vcmp.lt.s32.totalorder %v3270, 5000
          %vm3527 = vcmp.lt.s32.totalorder %v3271, 5000
          %vm3528 = vcmp.lt.s32.totalorder %v3272, 5000
          %vm3529 = vcmp.lt.s32.totalorder %v3273, 5000
          %vm3530 = vcmp.lt.s32.totalorder %v3274, 5000
          %vm3531 = vcmp.lt.s32.totalorder %v3275, 5000
          %vm3532 = vcmp.lt.s32.totalorder %v3276, 5000
          %vm3533 = vcmp.lt.s32.totalorder %v3277, 5000
          %vm3534 = vcmp.lt.s32.totalorder %v3278, 5000
          %vm3535 = vcmp.lt.s32.totalorder %v3279, 5000
          %vm3536 = vcmp.lt.s32.totalorder %v3280, 5000
          %vm3537 = vcmp.lt.s32.totalorder %v3281, 5000
          %vm3538 = vcmp.lt.s32.totalorder %v3282, 5000
          %vm3539 = vcmp.lt.s32.totalorder %v3283, 5000
          %vm3540 = vcmp.lt.s32.totalorder %v3284, 5000
          %vm3541 = vcmp.lt.s32.totalorder %v3285, 5000
          %vm3542 = vcmp.lt.s32.totalorder %v3286, 5000
          %vm3543 = vcmp.lt.s32.totalorder %v3287, 5000
          %vm3544 = vcmp.lt.s32.totalorder %v3288, 5000
          %vm3545 = vcmp.lt.s32.totalorder %v3289, 5000
          %vm3546 = vcmp.lt.s32.totalorder %v3290, 5000
          %vm3547 = vcmp.lt.s32.totalorder %v3291, 5000
          %vm3548 = vcmp.lt.s32.totalorder %v3292, 5000
          %vm3549 = vcmp.lt.s32.totalorder %v3293, 5000
          %vm3550 = vcmp.lt.s32.totalorder %v3294, 5000
          %vm3551 = vcmp.lt.s32.totalorder %v3295, 5000
          %vm3552 = vcmp.lt.s32.totalorder %v3296, 5000
          %vm3553 = vcmp.lt.s32.totalorder %v3297, 5000
          %vm3554 = vcmp.lt.s32.totalorder %v3298, 5000
          %vm3555 = vcmp.lt.s32.totalorder %v3299, 5000
          %vm3556 = vcmp.lt.s32.totalorder %v3300, 5000
          %vm3557 = vcmp.lt.s32.totalorder %v3301, 5000
          %vm3558 = vcmp.lt.s32.totalorder %v3302, 5000
          %vm3559 = vcmp.lt.s32.totalorder %v3303, 5000
          %vm3560 = vcmp.lt.s32.totalorder %v3304, 5000
          %vm3561 = vcmp.lt.s32.totalorder %v3305, 5000
          %vm3562 = vcmp.lt.s32.totalorder %v3306, 5000
          %vm3563 = vcmp.lt.s32.totalorder %v3307, 5000
          %vm3564 = vcmp.lt.s32.totalorder %v3308, 5000
          %vm3565 = vcmp.lt.s32.totalorder %v3309, 5000
          %vm3566 = vcmp.lt.s32.totalorder %v3310, 5000
          %vm3567 = vcmp.lt.s32.totalorder %v3311, 5000
          %vm3568 = vcmp.lt.s32.totalorder %v3312, 5000
          %vm3569 = vcmp.lt.s32.totalorder %v3313, 5000
          %vm3570 = vcmp.lt.s32.totalorder %v3314, 5000
          %vm3571 = vcmp.lt.s32.totalorder %v3315, 5000
          %vm3572 = vcmp.lt.s32.totalorder %v3316, 5000
          %vm3573 = vcmp.lt.s32.totalorder %v3317, 5000
          %vm3574 = vcmp.lt.s32.totalorder %v3318, 5000
          %vm3575 = vcmp.lt.s32.totalorder %v3319, 5000
          %vm3576 = vcmp.lt.s32.totalorder %v3320, 5000
          %vm3577 = vcmp.lt.s32.totalorder %v3321, 5000
          %vm3578 = vcmp.lt.s32.totalorder %v3322, 5000
          %vm3579 = vcmp.lt.s32.totalorder %v3323, 5000
          %vm3580 = vcmp.lt.s32.totalorder %v3324, 5000
          %vm3581 = vcmp.lt.s32.totalorder %v3325, 5000
          %vm3582 = vcmp.lt.s32.totalorder %v3326, 5000
          %vm3583 = vcmp.lt.s32.totalorder %v3327, 5000
          %vm3584 = vcmp.lt.s32.totalorder %v3328, 5000
          %vm3585 = vcmp.lt.s32.totalorder %v3329, 5000
          %vm3586 = vcmp.lt.s32.totalorder %v3330, 5000
          %vm3587 = vcmp.lt.s32.totalorder %v3331, 5000
          %vm3588 = vcmp.lt.s32.totalorder %v3332, 5000
          %vm3589 = vcmp.lt.s32.totalorder %v3333, 5000
          %vm3590 = vcmp.lt.s32.totalorder %v3334, 5000
          %vm3591 = vcmp.lt.s32.totalorder %v3335, 5000
          %vm3592 = vcmp.lt.s32.totalorder %v3336, 5000
          %vm3593 = vcmp.lt.s32.totalorder %v3337, 5000
          %vm3594 = vcmp.lt.s32.totalorder %v3338, 5000
          %vm3595 = vcmp.lt.s32.totalorder %v3339, 5000
          %vm3596 = vcmp.lt.s32.totalorder %v3340, 5000
          %vm3597 = vcmp.lt.s32.totalorder %v3341, 5000
          %vm3598 = vcmp.lt.s32.totalorder %v3342, 5000
          %vm3599 = vcmp.lt.s32.totalorder %v3343, 5000
          %v3600 = vsel %vm3344, 1, 0
          %v3601 = vsel %vm3345, 1, 0
          %v3602 = vsel %vm3346, 1, 0
          %v3603 = vsel %vm3347, 1, 0
          %v3604 = vsel %vm3348, 1, 0
          %v3605 = vsel %vm3349, 1, 0
          %v3606 = vsel %vm3350, 1, 0
          %v3607 = vsel %vm3351, 1, 0
          %v3608 = vsel %vm3352, 1, 0
          %v3609 = vsel %vm3353, 1, 0
          %v3610 = vsel %vm3354, 1, 0
          %v3611 = vsel %vm3355, 1, 0
          %v3612 = vsel %vm3356, 1, 0
          %v3613 = vsel %vm3357, 1, 0
          %v3614 = vsel %vm3358, 1, 0
          %v3615 = vsel %vm3359, 1, 0
          %v3616 = vsel %vm3360, 1, 0
          %v3617 = vsel %vm3361, 1, 0
          %v3618 = vsel %vm3362, 1, 0
          %v3619 = vsel %vm3363, 1, 0
          %v3620 = vsel %vm3364, 1, 0
          %v3621 = vsel %vm3365, 1, 0
          %v3622 = vsel %vm3366, 1, 0
          %v3623 = vsel %vm3367, 1, 0
          %v3624 = vsel %vm3368, 1, 0
          %v3625 = vsel %vm3369, 1, 0
          %v3626 = vsel %vm3370, 1, 0
          %v3627 = vsel %vm3371, 1, 0
          %v3628 = vsel %vm3372, 1, 0
          %v3629 = vsel %vm3373, 1, 0
          %v3630 = vsel %vm3374, 1, 0
          %v3631 = vsel %vm3375, 1, 0
          %v3632 = vsel %vm3376, 1, 0
          %v3633 = vsel %vm3377, 1, 0
          %v3634 = vsel %vm3378, 1, 0
          %v3635 = vsel %vm3379, 1, 0
          %v3636 = vsel %vm3380, 1, 0
          %v3637 = vsel %vm3381, 1, 0
          %v3638 = vsel %vm3382, 1, 0
          %v3639 = vsel %vm3383, 1, 0
          %v3640 = vsel %vm3384, 1, 0
          %v3641 = vsel %vm3385, 1, 0
          %v3642 = vsel %vm3386, 1, 0
          %v3643 = vsel %vm3387, 1, 0
          %v3644 = vsel %vm3388, 1, 0
          %v3645 = vsel %vm3389, 1, 0
          %v3646 = vsel %vm3390, 1, 0
          %v3647 = vsel %vm3391, 1, 0
          %v3648 = vsel %vm3392, 1, 0
          %v3649 = vsel %vm3393, 1, 0
          %v3650 = vsel %vm3394, 1, 0
          %v3651 = vsel %vm3395, 1, 0
          %v3652 = vsel %vm3396, 1, 0
          %v3653 = vsel %vm3397, 1, 0
          %v3654 = vsel %vm3398, 1, 0
          %v3655 = vsel %vm3399, 1, 0
          %v3656 = vsel %vm3400, 1, 0
          %v3657 = vsel %vm3401, 1, 0
          %v3658 = vsel %vm3402, 1, 0
          %v3659 = vsel %vm3403, 1, 0
          %v3660 = vsel %vm3404, 1, 0
          %v3661 = vsel %vm3405, 1, 0
          %v3662 = vsel %vm3406, 1, 0
          %v3663 = vsel %vm3407, 1, 0
          %v3664 = vsel %vm3408, 1, 0
          %v3665 = vsel %vm3409, 1, 0
          %v3666 = vsel %vm3410, 1, 0
          %v3667 = vsel %vm3411, 1, 0
          %v3668 = vsel %vm3412, 1, 0
          %v3669 = vsel %vm3413, 1, 0
          %v3670 = vsel %vm3414, 1, 0
          %v3671 = vsel %vm3415, 1, 0
          %v3672 = vsel %vm3416, 1, 0
          %v3673 = vsel %vm3417, 1, 0
          %v3674 = vsel %vm3418, 1, 0
          %v3675 = vsel %vm3419, 1, 0
          %v3676 = vsel %vm3420, 1, 0
          %v3677 = vsel %vm3421, 1, 0
          %v3678 = vsel %vm3422, 1, 0
          %v3679 = vsel %vm3423, 1, 0
          %v3680 = vsel %vm3424, 1, 0
          %v3681 = vsel %vm3425, 1, 0
          %v3682 = vsel %vm3426, 1, 0
          %v3683 = vsel %vm3427, 1, 0
          %v3684 = vsel %vm3428, 1, 0
          %v3685 = vsel %vm3429, 1, 0
          %v3686 = vsel %vm3430, 1, 0
          %v3687 = vsel %vm3431, 1, 0
          %v3688 = vsel %vm3432, 1, 0
          %v3689 = vsel %vm3433, 1, 0
          %v3690 = vsel %vm3434, 1, 0
          %v3691 = vsel %vm3435, 1, 0
          %v3692 = vsel %vm3436, 1, 0
          %v3693 = vsel %vm3437, 1, 0
          %v3694 = vsel %vm3438, 1, 0
          %v3695 = vsel %vm3439, 1, 0
          %v3696 = vsel %vm3440, 1, 0
          %v3697 = vsel %vm3441, 1, 0
          %v3698 = vsel %vm3442, 1, 0
          %v3699 = vsel %vm3443, 1, 0
          %v3700 = vsel %vm3444, 1, 0
          %v3701 = vsel %vm3445, 1, 0
          %v3702 = vsel %vm3446, 1, 0
          %v3703 = vsel %vm3447, 1, 0
          %v3704 = vsel %vm3448, 1, 0
          %v3705 = vsel %vm3449, 1, 0
          %v3706 = vsel %vm3450, 1, 0
          %v3707 = vsel %vm3451, 1, 0
          %v3708 = vsel %vm3452, 1, 0
          %v3709 = vsel %vm3453, 1, 0
          %v3710 = vsel %vm3454, 1, 0
          %v3711 = vsel %vm3455, 1, 0
          %v3712 = vsel %vm3456, 1, 0
          %v3713 = vsel %vm3457, 1, 0
          %v3714 = vsel %vm3458, 1, 0
          %v3715 = vsel %vm3459, 1, 0
          %v3716 = vsel %vm3460, 1, 0
          %v3717 = vsel %vm3461, 1, 0
          %v3718 = vsel %vm3462, 1, 0
          %v3719 = vsel %vm3463, 1, 0
          %v3720 = vsel %vm3464, 1, 0
          %v3721 = vsel %vm3465, 1, 0
          %v3722 = vsel %vm3466, 1, 0
          %v3723 = vsel %vm3467, 1, 0
          %v3724 = vsel %vm3468, 1, 0
          %v3725 = vsel %vm3469, 1, 0
          %v3726 = vsel %vm3470, 1, 0
          %v3727 = vsel %vm3471, 1, 0
          %v3728 = vsel %vm3472, 1, 0
          %v3729 = vsel %vm3473, 1, 0
          %v3730 = vsel %vm3474, 1, 0
          %v3731 = vsel %vm3475, 1, 0
          %v3732 = vsel %vm3476, 1, 0
          %v3733 = vsel %vm3477, 1, 0
          %v3734 = vsel %vm3478, 1, 0
          %v3735 = vsel %vm3479, 1, 0
          %v3736 = vsel %vm3480, 1, 0
          %v3737 = vsel %vm3481, 1, 0
          %v3738 = vsel %vm3482, 1, 0
          %v3739 = vsel %vm3483, 1, 0
          %v3740 = vsel %vm3484, 1, 0
          %v3741 = vsel %vm3485, 1, 0
          %v3742 = vsel %vm3486, 1, 0
          %v3743 = vsel %vm3487, 1, 0
          %v3744 = vsel %vm3488, 1, 0
          %v3745 = vsel %vm3489, 1, 0
          %v3746 = vsel %vm3490, 1, 0
          %v3747 = vsel %vm3491, 1, 0
          %v3748 = vsel %vm3492, 1, 0
          %v3749 = vsel %vm3493, 1, 0
          %v3750 = vsel %vm3494, 1, 0
          %v3751 = vsel %vm3495, 1, 0
          %v3752 = vsel %vm3496, 1, 0
          %v3753 = vsel %vm3497, 1, 0
          %v3754 = vsel %vm3498, 1, 0
          %v3755 = vsel %vm3499, 1, 0
          %v3756 = vsel %vm3500, 1, 0
          %v3757 = vsel %vm3501, 1, 0
          %v3758 = vsel %vm3502, 1, 0
          %v3759 = vsel %vm3503, 1, 0
          %v3760 = vsel %vm3504, 1, 0
          %v3761 = vsel %vm3505, 1, 0
          %v3762 = vsel %vm3506, 1, 0
          %v3763 = vsel %vm3507, 1, 0
          %v3764 = vsel %vm3508, 1, 0
          %v3765 = vsel %vm3509, 1, 0
          %v3766 = vsel %vm3510, 1, 0
          %v3767 = vsel %vm3511, 1, 0
          %v3768 = vsel %vm3512, 1, 0
          %v3769 = vsel %vm3513, 1, 0
          %v3770 = vsel %vm3514, 1, 0
          %v3771 = vsel %vm3515, 1, 0
          %v3772 = vsel %vm3516, 1, 0
          %v3773 = vsel %vm3517, 1, 0
          %v3774 = vsel %vm3518, 1, 0
          %v3775 = vsel %vm3519, 1, 0
          %v3776 = vsel %vm3520, 1, 0
          %v3777 = vsel %vm3521, 1, 0
          %v3778 = vsel %vm3522, 1, 0
          %v3779 = vsel %vm3523, 1, 0
          %v3780 = vsel %vm3524, 1, 0
          %v3781 = vsel %vm3525, 1, 0
          %v3782 = vsel %vm3526, 1, 0
          %v3783 = vsel %vm3527, 1, 0
          %v3784 = vsel %vm3528, 1, 0
          %v3785 = vsel %vm3529, 1, 0
          %v3786 = vsel %vm3530, 1, 0
          %v3787 = vsel %vm3531, 1, 0
          %v3788 = vsel %vm3532, 1, 0
          %v3789 = vsel %vm3533, 1, 0
          %v3790 = vsel %vm3534, 1, 0
          %v3791 = vsel %vm3535, 1, 0
          %v3792 = vsel %vm3536, 1, 0
          %v3793 = vsel %vm3537, 1, 0
          %v3794 = vsel %vm3538, 1, 0
          %v3795 = vsel %vm3539, 1, 0
          %v3796 = vsel %vm3540, 1, 0
          %v3797 = vsel %vm3541, 1, 0
          %v3798 = vsel %vm3542, 1, 0
          %v3799 = vsel %vm3543, 1, 0
          %v3800 = vsel %vm3544, 1, 0
          %v3801 = vsel %vm3545, 1, 0
          %v3802 = vsel %vm3546, 1, 0
          %v3803 = vsel %vm3547, 1, 0
          %v3804 = vsel %vm3548, 1, 0
          %v3805 = vsel %vm3549, 1, 0
          %v3806 = vsel %vm3550, 1, 0
          %v3807 = vsel %vm3551, 1, 0
          %v3808 = vsel %vm3552, 1, 0
          %v3809 = vsel %vm3553, 1, 0
          %v3810 = vsel %vm3554, 1, 0
          %v3811 = vsel %vm3555, 1, 0
          %v3812 = vsel %vm3556, 1, 0
          %v3813 = vsel %vm3557, 1, 0
          %v3814 = vsel %vm3558, 1, 0
          %v3815 = vsel %vm3559, 1, 0
          %v3816 = vsel %vm3560, 1, 0
          %v3817 = vsel %vm3561, 1, 0
          %v3818 = vsel %vm3562, 1, 0
          %v3819 = vsel %vm3563, 1, 0
          %v3820 = vsel %vm3564, 1, 0
          %v3821 = vsel %vm3565, 1, 0
          %v3822 = vsel %vm3566, 1, 0
          %v3823 = vsel %vm3567, 1, 0
          %v3824 = vsel %vm3568, 1, 0
          %v3825 = vsel %vm3569, 1, 0
          %v3826 = vsel %vm3570, 1, 0
          %v3827 = vsel %vm3571, 1, 0
          %v3828 = vsel %vm3572, 1, 0
          %v3829 = vsel %vm3573, 1, 0
          %v3830 = vsel %vm3574, 1, 0
          %v3831 = vsel %vm3575, 1, 0
          %v3832 = vsel %vm3576, 1, 0
          %v3833 = vsel %vm3577, 1, 0
          %v3834 = vsel %vm3578, 1, 0
          %v3835 = vsel %vm3579, 1, 0
          %v3836 = vsel %vm3580, 1, 0
          %v3837 = vsel %vm3581, 1, 0
          %v3838 = vsel %vm3582, 1, 0
          %v3839 = vsel %vm3583, 1, 0
          %v3840 = vsel %vm3584, 1, 0
          %v3841 = vsel %vm3585, 1, 0
          %v3842 = vsel %vm3586, 1, 0
          %v3843 = vsel %vm3587, 1, 0
          %v3844 = vsel %vm3588, 1, 0
          %v3845 = vsel %vm3589, 1, 0
          %v3846 = vsel %vm3590, 1, 0
          %v3847 = vsel %vm3591, 1, 0
          %v3848 = vsel %vm3592, 1, 0
          %v3849 = vsel %vm3593, 1, 0
          %v3850 = vsel %vm3594, 1, 0
          %v3851 = vsel %vm3595, 1, 0
          %v3852 = vsel %vm3596, 1, 0
          %v3853 = vsel %vm3597, 1, 0
          %v3854 = vsel %vm3598, 1, 0
          %v3855 = vsel %vm3599, 1, 0
          %vm3856 = vcmp.eq.s32.totalorder %v3600, 1
          %vm3857 = vcmp.eq.s32.totalorder %v3601, 1
          %vm3858 = vcmp.eq.s32.totalorder %v3602, 1
          %vm3859 = vcmp.eq.s32.totalorder %v3603, 1
          %vm3860 = vcmp.eq.s32.totalorder %v3604, 1
          %vm3861 = vcmp.eq.s32.totalorder %v3605, 1
          %vm3862 = vcmp.eq.s32.totalorder %v3606, 1
          %vm3863 = vcmp.eq.s32.totalorder %v3607, 1
          %vm3864 = vcmp.eq.s32.totalorder %v3608, 1
          %vm3865 = vcmp.eq.s32.totalorder %v3609, 1
          %vm3866 = vcmp.eq.s32.totalorder %v3610, 1
          %vm3867 = vcmp.eq.s32.totalorder %v3611, 1
          %vm3868 = vcmp.eq.s32.totalorder %v3612, 1
          %vm3869 = vcmp.eq.s32.totalorder %v3613, 1
          %vm3870 = vcmp.eq.s32.totalorder %v3614, 1
          %vm3871 = vcmp.eq.s32.totalorder %v3615, 1
          %vm3872 = vcmp.eq.s32.totalorder %v3616, 1
          %vm3873 = vcmp.eq.s32.totalorder %v3617, 1
          %vm3874 = vcmp.eq.s32.totalorder %v3618, 1
          %vm3875 = vcmp.eq.s32.totalorder %v3619, 1
          %vm3876 = vcmp.eq.s32.totalorder %v3620, 1
          %vm3877 = vcmp.eq.s32.totalorder %v3621, 1
          %vm3878 = vcmp.eq.s32.totalorder %v3622, 1
          %vm3879 = vcmp.eq.s32.totalorder %v3623, 1
          %vm3880 = vcmp.eq.s32.totalorder %v3624, 1
          %vm3881 = vcmp.eq.s32.totalorder %v3625, 1
          %vm3882 = vcmp.eq.s32.totalorder %v3626, 1
          %vm3883 = vcmp.eq.s32.totalorder %v3627, 1
          %vm3884 = vcmp.eq.s32.totalorder %v3628, 1
          %vm3885 = vcmp.eq.s32.totalorder %v3629, 1
          %vm3886 = vcmp.eq.s32.totalorder %v3630, 1
          %vm3887 = vcmp.eq.s32.totalorder %v3631, 1
          %vm3888 = vcmp.eq.s32.totalorder %v3632, 1
          %vm3889 = vcmp.eq.s32.totalorder %v3633, 1
          %vm3890 = vcmp.eq.s32.totalorder %v3634, 1
          %vm3891 = vcmp.eq.s32.totalorder %v3635, 1
          %vm3892 = vcmp.eq.s32.totalorder %v3636, 1
          %vm3893 = vcmp.eq.s32.totalorder %v3637, 1
          %vm3894 = vcmp.eq.s32.totalorder %v3638, 1
          %vm3895 = vcmp.eq.s32.totalorder %v3639, 1
          %vm3896 = vcmp.eq.s32.totalorder %v3640, 1
          %vm3897 = vcmp.eq.s32.totalorder %v3641, 1
          %vm3898 = vcmp.eq.s32.totalorder %v3642, 1
          %vm3899 = vcmp.eq.s32.totalorder %v3643, 1
          %vm3900 = vcmp.eq.s32.totalorder %v3644, 1
          %vm3901 = vcmp.eq.s32.totalorder %v3645, 1
          %vm3902 = vcmp.eq.s32.totalorder %v3646, 1
          %vm3903 = vcmp.eq.s32.totalorder %v3647, 1
          %vm3904 = vcmp.eq.s32.totalorder %v3648, 1
          %vm3905 = vcmp.eq.s32.totalorder %v3649, 1
          %vm3906 = vcmp.eq.s32.totalorder %v3650, 1
          %vm3907 = vcmp.eq.s32.totalorder %v3651, 1
          %vm3908 = vcmp.eq.s32.totalorder %v3652, 1
          %vm3909 = vcmp.eq.s32.totalorder %v3653, 1
          %vm3910 = vcmp.eq.s32.totalorder %v3654, 1
          %vm3911 = vcmp.eq.s32.totalorder %v3655, 1
          %vm3912 = vcmp.eq.s32.totalorder %v3656, 1
          %vm3913 = vcmp.eq.s32.totalorder %v3657, 1
          %vm3914 = vcmp.eq.s32.totalorder %v3658, 1
          %vm3915 = vcmp.eq.s32.totalorder %v3659, 1
          %vm3916 = vcmp.eq.s32.totalorder %v3660, 1
          %vm3917 = vcmp.eq.s32.totalorder %v3661, 1
          %vm3918 = vcmp.eq.s32.totalorder %v3662, 1
          %vm3919 = vcmp.eq.s32.totalorder %v3663, 1
          %vm3920 = vcmp.eq.s32.totalorder %v3664, 1
          %vm3921 = vcmp.eq.s32.totalorder %v3665, 1
          %vm3922 = vcmp.eq.s32.totalorder %v3666, 1
          %vm3923 = vcmp.eq.s32.totalorder %v3667, 1
          %vm3924 = vcmp.eq.s32.totalorder %v3668, 1
          %vm3925 = vcmp.eq.s32.totalorder %v3669, 1
          %vm3926 = vcmp.eq.s32.totalorder %v3670, 1
          %vm3927 = vcmp.eq.s32.totalorder %v3671, 1
          %vm3928 = vcmp.eq.s32.totalorder %v3672, 1
          %vm3929 = vcmp.eq.s32.totalorder %v3673, 1
          %vm3930 = vcmp.eq.s32.totalorder %v3674, 1
          %vm3931 = vcmp.eq.s32.totalorder %v3675, 1
          %vm3932 = vcmp.eq.s32.totalorder %v3676, 1
          %vm3933 = vcmp.eq.s32.totalorder %v3677, 1
          %vm3934 = vcmp.eq.s32.totalorder %v3678, 1
          %vm3935 = vcmp.eq.s32.totalorder %v3679, 1
          %vm3936 = vcmp.eq.s32.totalorder %v3680, 1
          %vm3937 = vcmp.eq.s32.totalorder %v3681, 1
          %vm3938 = vcmp.eq.s32.totalorder %v3682, 1
          %vm3939 = vcmp.eq.s32.totalorder %v3683, 1
          %vm3940 = vcmp.eq.s32.totalorder %v3684, 1
          %vm3941 = vcmp.eq.s32.totalorder %v3685, 1
          %vm3942 = vcmp.eq.s32.totalorder %v3686, 1
          %vm3943 = vcmp.eq.s32.totalorder %v3687, 1
          %vm3944 = vcmp.eq.s32.totalorder %v3688, 1
          %vm3945 = vcmp.eq.s32.totalorder %v3689, 1
          %vm3946 = vcmp.eq.s32.totalorder %v3690, 1
          %vm3947 = vcmp.eq.s32.totalorder %v3691, 1
          %vm3948 = vcmp.eq.s32.totalorder %v3692, 1
          %vm3949 = vcmp.eq.s32.totalorder %v3693, 1
          %vm3950 = vcmp.eq.s32.totalorder %v3694, 1
          %vm3951 = vcmp.eq.s32.totalorder %v3695, 1
          %vm3952 = vcmp.eq.s32.totalorder %v3696, 1
          %vm3953 = vcmp.eq.s32.totalorder %v3697, 1
          %vm3954 = vcmp.eq.s32.totalorder %v3698, 1
          %vm3955 = vcmp.eq.s32.totalorder %v3699, 1
          %vm3956 = vcmp.eq.s32.totalorder %v3700, 1
          %vm3957 = vcmp.eq.s32.totalorder %v3701, 1
          %vm3958 = vcmp.eq.s32.totalorder %v3702, 1
          %vm3959 = vcmp.eq.s32.totalorder %v3703, 1
          %vm3960 = vcmp.eq.s32.totalorder %v3704, 1
          %vm3961 = vcmp.eq.s32.totalorder %v3705, 1
          %vm3962 = vcmp.eq.s32.totalorder %v3706, 1
          %vm3963 = vcmp.eq.s32.totalorder %v3707, 1
          %vm3964 = vcmp.eq.s32.totalorder %v3708, 1
          %vm3965 = vcmp.eq.s32.totalorder %v3709, 1
          %vm3966 = vcmp.eq.s32.totalorder %v3710, 1
          %vm3967 = vcmp.eq.s32.totalorder %v3711, 1
          %vm3968 = vcmp.eq.s32.totalorder %v3712, 1
          %vm3969 = vcmp.eq.s32.totalorder %v3713, 1
          %vm3970 = vcmp.eq.s32.totalorder %v3714, 1
          %vm3971 = vcmp.eq.s32.totalorder %v3715, 1
          %vm3972 = vcmp.eq.s32.totalorder %v3716, 1
          %vm3973 = vcmp.eq.s32.totalorder %v3717, 1
          %vm3974 = vcmp.eq.s32.totalorder %v3718, 1
          %vm3975 = vcmp.eq.s32.totalorder %v3719, 1
          %vm3976 = vcmp.eq.s32.totalorder %v3720, 1
          %vm3977 = vcmp.eq.s32.totalorder %v3721, 1
          %vm3978 = vcmp.eq.s32.totalorder %v3722, 1
          %vm3979 = vcmp.eq.s32.totalorder %v3723, 1
          %vm3980 = vcmp.eq.s32.totalorder %v3724, 1
          %vm3981 = vcmp.eq.s32.totalorder %v3725, 1
          %vm3982 = vcmp.eq.s32.totalorder %v3726, 1
          %vm3983 = vcmp.eq.s32.totalorder %v3727, 1
          %vm3984 = vcmp.eq.s32.totalorder %v3728, 1
          %vm3985 = vcmp.eq.s32.totalorder %v3729, 1
          %vm3986 = vcmp.eq.s32.totalorder %v3730, 1
          %vm3987 = vcmp.eq.s32.totalorder %v3731, 1
          %vm3988 = vcmp.eq.s32.totalorder %v3732, 1
          %vm3989 = vcmp.eq.s32.totalorder %v3733, 1
          %vm3990 = vcmp.eq.s32.totalorder %v3734, 1
          %vm3991 = vcmp.eq.s32.totalorder %v3735, 1
          %vm3992 = vcmp.eq.s32.totalorder %v3736, 1
          %vm3993 = vcmp.eq.s32.totalorder %v3737, 1
          %vm3994 = vcmp.eq.s32.totalorder %v3738, 1
          %vm3995 = vcmp.eq.s32.totalorder %v3739, 1
          %vm3996 = vcmp.eq.s32.totalorder %v3740, 1
          %vm3997 = vcmp.eq.s32.totalorder %v3741, 1
          %vm3998 = vcmp.eq.s32.totalorder %v3742, 1
          %vm3999 = vcmp.eq.s32.totalorder %v3743, 1
          %vm4000 = vcmp.eq.s32.totalorder %v3744, 1
          %vm4001 = vcmp.eq.s32.totalorder %v3745, 1
          %vm4002 = vcmp.eq.s32.totalorder %v3746, 1
          %vm4003 = vcmp.eq.s32.totalorder %v3747, 1
          %vm4004 = vcmp.eq.s32.totalorder %v3748, 1
          %vm4005 = vcmp.eq.s32.totalorder %v3749, 1
          %vm4006 = vcmp.eq.s32.totalorder %v3750, 1
          %vm4007 = vcmp.eq.s32.totalorder %v3751, 1
          %vm4008 = vcmp.eq.s32.totalorder %v3752, 1
          %vm4009 = vcmp.eq.s32.totalorder %v3753, 1
          %vm4010 = vcmp.eq.s32.totalorder %v3754, 1
          %vm4011 = vcmp.eq.s32.totalorder %v3755, 1
          %vm4012 = vcmp.eq.s32.totalorder %v3756, 1
          %vm4013 = vcmp.eq.s32.totalorder %v3757, 1
          %vm4014 = vcmp.eq.s32.totalorder %v3758, 1
          %vm4015 = vcmp.eq.s32.totalorder %v3759, 1
          %vm4016 = vcmp.eq.s32.totalorder %v3760, 1
          %vm4017 = vcmp.eq.s32.totalorder %v3761, 1
          %vm4018 = vcmp.eq.s32.totalorder %v3762, 1
          %vm4019 = vcmp.eq.s32.totalorder %v3763, 1
          %vm4020 = vcmp.eq.s32.totalorder %v3764, 1
          %vm4021 = vcmp.eq.s32.totalorder %v3765, 1
          %vm4022 = vcmp.eq.s32.totalorder %v3766, 1
          %vm4023 = vcmp.eq.s32.totalorder %v3767, 1
          %vm4024 = vcmp.eq.s32.totalorder %v3768, 1
          %vm4025 = vcmp.eq.s32.totalorder %v3769, 1
          %vm4026 = vcmp.eq.s32.totalorder %v3770, 1
          %vm4027 = vcmp.eq.s32.totalorder %v3771, 1
          %vm4028 = vcmp.eq.s32.totalorder %v3772, 1
          %vm4029 = vcmp.eq.s32.totalorder %v3773, 1
          %vm4030 = vcmp.eq.s32.totalorder %v3774, 1
          %vm4031 = vcmp.eq.s32.totalorder %v3775, 1
          %vm4032 = vcmp.eq.s32.totalorder %v3776, 1
          %vm4033 = vcmp.eq.s32.totalorder %v3777, 1
          %vm4034 = vcmp.eq.s32.totalorder %v3778, 1
          %vm4035 = vcmp.eq.s32.totalorder %v3779, 1
          %vm4036 = vcmp.eq.s32.totalorder %v3780, 1
          %vm4037 = vcmp.eq.s32.totalorder %v3781, 1
          %vm4038 = vcmp.eq.s32.totalorder %v3782, 1
          %vm4039 = vcmp.eq.s32.totalorder %v3783, 1
          %vm4040 = vcmp.eq.s32.totalorder %v3784, 1
          %vm4041 = vcmp.eq.s32.totalorder %v3785, 1
          %vm4042 = vcmp.eq.s32.totalorder %v3786, 1
          %vm4043 = vcmp.eq.s32.totalorder %v3787, 1
          %vm4044 = vcmp.eq.s32.totalorder %v3788, 1
          %vm4045 = vcmp.eq.s32.totalorder %v3789, 1
          %vm4046 = vcmp.eq.s32.totalorder %v3790, 1
          %vm4047 = vcmp.eq.s32.totalorder %v3791, 1
          %vm4048 = vcmp.eq.s32.totalorder %v3792, 1
          %vm4049 = vcmp.eq.s32.totalorder %v3793, 1
          %vm4050 = vcmp.eq.s32.totalorder %v3794, 1
          %vm4051 = vcmp.eq.s32.totalorder %v3795, 1
          %vm4052 = vcmp.eq.s32.totalorder %v3796, 1
          %vm4053 = vcmp.eq.s32.totalorder %v3797, 1
          %vm4054 = vcmp.eq.s32.totalorder %v3798, 1
          %vm4055 = vcmp.eq.s32.totalorder %v3799, 1
          %vm4056 = vcmp.eq.s32.totalorder %v3800, 1
          %vm4057 = vcmp.eq.s32.totalorder %v3801, 1
          %vm4058 = vcmp.eq.s32.totalorder %v3802, 1
          %vm4059 = vcmp.eq.s32.totalorder %v3803, 1
          %vm4060 = vcmp.eq.s32.totalorder %v3804, 1
          %vm4061 = vcmp.eq.s32.totalorder %v3805, 1
          %vm4062 = vcmp.eq.s32.totalorder %v3806, 1
          %vm4063 = vcmp.eq.s32.totalorder %v3807, 1
          %vm4064 = vcmp.eq.s32.totalorder %v3808, 1
          %vm4065 = vcmp.eq.s32.totalorder %v3809, 1
          %vm4066 = vcmp.eq.s32.totalorder %v3810, 1
          %vm4067 = vcmp.eq.s32.totalorder %v3811, 1
          %vm4068 = vcmp.eq.s32.totalorder %v3812, 1
          %vm4069 = vcmp.eq.s32.totalorder %v3813, 1
          %vm4070 = vcmp.eq.s32.totalorder %v3814, 1
          %vm4071 = vcmp.eq.s32.totalorder %v3815, 1
          %vm4072 = vcmp.eq.s32.totalorder %v3816, 1
          %vm4073 = vcmp.eq.s32.totalorder %v3817, 1
          %vm4074 = vcmp.eq.s32.totalorder %v3818, 1
          %vm4075 = vcmp.eq.s32.totalorder %v3819, 1
          %vm4076 = vcmp.eq.s32.totalorder %v3820, 1
          %vm4077 = vcmp.eq.s32.totalorder %v3821, 1
          %vm4078 = vcmp.eq.s32.totalorder %v3822, 1
          %vm4079 = vcmp.eq.s32.totalorder %v3823, 1
          %vm4080 = vcmp.eq.s32.totalorder %v3824, 1
          %vm4081 = vcmp.eq.s32.totalorder %v3825, 1
          %vm4082 = vcmp.eq.s32.totalorder %v3826, 1
          %vm4083 = vcmp.eq.s32.totalorder %v3827, 1
          %vm4084 = vcmp.eq.s32.totalorder %v3828, 1
          %vm4085 = vcmp.eq.s32.totalorder %v3829, 1
          %vm4086 = vcmp.eq.s32.totalorder %v3830, 1
          %vm4087 = vcmp.eq.s32.totalorder %v3831, 1
          %vm4088 = vcmp.eq.s32.totalorder %v3832, 1
          %vm4089 = vcmp.eq.s32.totalorder %v3833, 1
          %vm4090 = vcmp.eq.s32.totalorder %v3834, 1
          %vm4091 = vcmp.eq.s32.totalorder %v3835, 1
          %vm4092 = vcmp.eq.s32.totalorder %v3836, 1
          %vm4093 = vcmp.eq.s32.totalorder %v3837, 1
          %vm4094 = vcmp.eq.s32.totalorder %v3838, 1
          %vm4095 = vcmp.eq.s32.totalorder %v3839, 1
          %vm4096 = vcmp.eq.s32.totalorder %v3840, 1
          %vm4097 = vcmp.eq.s32.totalorder %v3841, 1
          %vm4098 = vcmp.eq.s32.totalorder %v3842, 1
          %vm4099 = vcmp.eq.s32.totalorder %v3843, 1
          %vm4100 = vcmp.eq.s32.totalorder %v3844, 1
          %vm4101 = vcmp.eq.s32.totalorder %v3845, 1
          %vm4102 = vcmp.eq.s32.totalorder %v3846, 1
          %vm4103 = vcmp.eq.s32.totalorder %v3847, 1
          %vm4104 = vcmp.eq.s32.totalorder %v3848, 1
          %vm4105 = vcmp.eq.s32.totalorder %v3849, 1
          %vm4106 = vcmp.eq.s32.totalorder %v3850, 1
          %vm4107 = vcmp.eq.s32.totalorder %v3851, 1
          %vm4108 = vcmp.eq.s32.totalorder %v3852, 1
          %vm4109 = vcmp.eq.s32.totalorder %v3853, 1
          %vm4110 = vcmp.eq.s32.totalorder %v3854, 1
          %vm4111 = vcmp.eq.s32.totalorder %v3855, 1
          %v4112 = vsel %vm3856, %v1793, 0.0
          %v4113 = vsel %vm3856, %v1794, 0.0
          %v4114 = vsel %vm3857, %v1795, 0.0
          %v4115 = vsel %vm3857, %v1796, 0.0
          %v4116 = vsel %vm3858, %v1797, 0.0
          %v4117 = vsel %vm3858, %v1798, 0.0
          %v4118 = vsel %vm3859, %v1799, 0.0
          %v4119 = vsel %vm3859, %v1800, 0.0
          %v4120 = vsel %vm3860, %v1801, 0.0
          %v4121 = vsel %vm3860, %v1802, 0.0
          %v4122 = vsel %vm3861, %v1803, 0.0
          %v4123 = vsel %vm3861, %v1804, 0.0
          %v4124 = vsel %vm3862, %v1805, 0.0
          %v4125 = vsel %vm3862, %v1806, 0.0
          %v4126 = vsel %vm3863, %v1807, 0.0
          %v4127 = vsel %vm3863, %v1808, 0.0
          %v4128 = vsel %vm3864, %v1809, 0.0
          %v4129 = vsel %vm3864, %v1810, 0.0
          %v4130 = vsel %vm3865, %v1811, 0.0
          %v4131 = vsel %vm3865, %v1812, 0.0
          %v4132 = vsel %vm3866, %v1813, 0.0
          %v4133 = vsel %vm3866, %v1814, 0.0
          %v4134 = vsel %vm3867, %v1815, 0.0
          %v4135 = vsel %vm3867, %v1816, 0.0
          %v4136 = vsel %vm3868, %v1817, 0.0
          %v4137 = vsel %vm3868, %v1818, 0.0
          %v4138 = vsel %vm3869, %v1819, 0.0
          %v4139 = vsel %vm3869, %v1820, 0.0
          %v4140 = vsel %vm3870, %v1821, 0.0
          %v4141 = vsel %vm3870, %v1822, 0.0
          %v4142 = vsel %vm3871, %v1823, 0.0
          %v4143 = vsel %vm3871, %v1824, 0.0
          %v4144 = vsel %vm3872, %v1825, 0.0
          %v4145 = vsel %vm3872, %v1826, 0.0
          %v4146 = vsel %vm3873, %v1827, 0.0
          %v4147 = vsel %vm3873, %v1828, 0.0
          %v4148 = vsel %vm3874, %v1829, 0.0
          %v4149 = vsel %vm3874, %v1830, 0.0
          %v4150 = vsel %vm3875, %v1831, 0.0
          %v4151 = vsel %vm3875, %v1832, 0.0
          %v4152 = vsel %vm3876, %v1833, 0.0
          %v4153 = vsel %vm3876, %v1834, 0.0
          %v4154 = vsel %vm3877, %v1835, 0.0
          %v4155 = vsel %vm3877, %v1836, 0.0
          %v4156 = vsel %vm3878, %v1837, 0.0
          %v4157 = vsel %vm3878, %v1838, 0.0
          %v4158 = vsel %vm3879, %v1839, 0.0
          %v4159 = vsel %vm3879, %v1840, 0.0
          %v4160 = vsel %vm3880, %v1841, 0.0
          %v4161 = vsel %vm3880, %v1842, 0.0
          %v4162 = vsel %vm3881, %v1843, 0.0
          %v4163 = vsel %vm3881, %v1844, 0.0
          %v4164 = vsel %vm3882, %v1845, 0.0
          %v4165 = vsel %vm3882, %v1846, 0.0
          %v4166 = vsel %vm3883, %v1847, 0.0
          %v4167 = vsel %vm3883, %v1848, 0.0
          %v4168 = vsel %vm3884, %v1849, 0.0
          %v4169 = vsel %vm3884, %v1850, 0.0
          %v4170 = vsel %vm3885, %v1851, 0.0
          %v4171 = vsel %vm3885, %v1852, 0.0
          %v4172 = vsel %vm3886, %v1853, 0.0
          %v4173 = vsel %vm3886, %v1854, 0.0
          %v4174 = vsel %vm3887, %v1855, 0.0
          %v4175 = vsel %vm3887, %v1856, 0.0
          %v4176 = vsel %vm3888, %v1857, 0.0
          %v4177 = vsel %vm3888, %v1858, 0.0
          %v4178 = vsel %vm3889, %v1859, 0.0
          %v4179 = vsel %vm3889, %v1860, 0.0
          %v4180 = vsel %vm3890, %v1861, 0.0
          %v4181 = vsel %vm3890, %v1862, 0.0
          %v4182 = vsel %vm3891, %v1863, 0.0
          %v4183 = vsel %vm3891, %v1864, 0.0
          %v4184 = vsel %vm3892, %v1865, 0.0
          %v4185 = vsel %vm3892, %v1866, 0.0
          %v4186 = vsel %vm3893, %v1867, 0.0
          %v4187 = vsel %vm3893, %v1868, 0.0
          %v4188 = vsel %vm3894, %v1869, 0.0
          %v4189 = vsel %vm3894, %v1870, 0.0
          %v4190 = vsel %vm3895, %v1871, 0.0
          %v4191 = vsel %vm3895, %v1872, 0.0
          %v4192 = vsel %vm3896, %v1873, 0.0
          %v4193 = vsel %vm3896, %v1874, 0.0
          %v4194 = vsel %vm3897, %v1875, 0.0
          %v4195 = vsel %vm3897, %v1876, 0.0
          %v4196 = vsel %vm3898, %v1877, 0.0
          %v4197 = vsel %vm3898, %v1878, 0.0
          %v4198 = vsel %vm3899, %v1879, 0.0
          %v4199 = vsel %vm3899, %v1880, 0.0
          %v4200 = vsel %vm3900, %v1881, 0.0
          %v4201 = vsel %vm3900, %v1882, 0.0
          %v4202 = vsel %vm3901, %v1883, 0.0
          %v4203 = vsel %vm3901, %v1884, 0.0
          %v4204 = vsel %vm3902, %v1885, 0.0
          %v4205 = vsel %vm3902, %v1886, 0.0
          %v4206 = vsel %vm3903, %v1887, 0.0
          %v4207 = vsel %vm3903, %v1888, 0.0
          %v4208 = vsel %vm3904, %v1889, 0.0
          %v4209 = vsel %vm3904, %v1890, 0.0
          %v4210 = vsel %vm3905, %v1891, 0.0
          %v4211 = vsel %vm3905, %v1892, 0.0
          %v4212 = vsel %vm3906, %v1893, 0.0
          %v4213 = vsel %vm3906, %v1894, 0.0
          %v4214 = vsel %vm3907, %v1895, 0.0
          %v4215 = vsel %vm3907, %v1896, 0.0
          %v4216 = vsel %vm3908, %v1897, 0.0
          %v4217 = vsel %vm3908, %v1898, 0.0
          %v4218 = vsel %vm3909, %v1899, 0.0
          %v4219 = vsel %vm3909, %v1900, 0.0
          %v4220 = vsel %vm3910, %v1901, 0.0
          %v4221 = vsel %vm3910, %v1902, 0.0
          %v4222 = vsel %vm3911, %v1903, 0.0
          %v4223 = vsel %vm3911, %v1904, 0.0
          %v4224 = vsel %vm3912, %v1905, 0.0
          %v4225 = vsel %vm3912, %v1906, 0.0
          %v4226 = vsel %vm3913, %v1907, 0.0
          %v4227 = vsel %vm3913, %v1908, 0.0
          %v4228 = vsel %vm3914, %v1909, 0.0
          %v4229 = vsel %vm3914, %v1910, 0.0
          %v4230 = vsel %vm3915, %v1911, 0.0
          %v4231 = vsel %vm3915, %v1912, 0.0
          %v4232 = vsel %vm3916, %v1913, 0.0
          %v4233 = vsel %vm3916, %v1914, 0.0
          %v4234 = vsel %vm3917, %v1915, 0.0
          %v4235 = vsel %vm3917, %v1916, 0.0
          %v4236 = vsel %vm3918, %v1917, 0.0
          %v4237 = vsel %vm3918, %v1918, 0.0
          %v4238 = vsel %vm3919, %v1919, 0.0
          %v4239 = vsel %vm3919, %v1920, 0.0
          %v4240 = vsel %vm3920, %v1921, 0.0
          %v4241 = vsel %vm3920, %v1922, 0.0
          %v4242 = vsel %vm3921, %v1923, 0.0
          %v4243 = vsel %vm3921, %v1924, 0.0
          %v4244 = vsel %vm3922, %v1925, 0.0
          %v4245 = vsel %vm3922, %v1926, 0.0
          %v4246 = vsel %vm3923, %v1927, 0.0
          %v4247 = vsel %vm3923, %v1928, 0.0
          %v4248 = vsel %vm3924, %v1929, 0.0
          %v4249 = vsel %vm3924, %v1930, 0.0
          %v4250 = vsel %vm3925, %v1931, 0.0
          %v4251 = vsel %vm3925, %v1932, 0.0
          %v4252 = vsel %vm3926, %v1933, 0.0
          %v4253 = vsel %vm3926, %v1934, 0.0
          %v4254 = vsel %vm3927, %v1935, 0.0
          %v4255 = vsel %vm3927, %v1936, 0.0
          %v4256 = vsel %vm3928, %v1937, 0.0
          %v4257 = vsel %vm3928, %v1938, 0.0
          %v4258 = vsel %vm3929, %v1939, 0.0
          %v4259 = vsel %vm3929, %v1940, 0.0
          %v4260 = vsel %vm3930, %v1941, 0.0
          %v4261 = vsel %vm3930, %v1942, 0.0
          %v4262 = vsel %vm3931, %v1943, 0.0
          %v4263 = vsel %vm3931, %v1944, 0.0
          %v4264 = vsel %vm3932, %v1945, 0.0
          %v4265 = vsel %vm3932, %v1946, 0.0
          %v4266 = vsel %vm3933, %v1947, 0.0
          %v4267 = vsel %vm3933, %v1948, 0.0
          %v4268 = vsel %vm3934, %v1949, 0.0
          %v4269 = vsel %vm3934, %v1950, 0.0
          %v4270 = vsel %vm3935, %v1951, 0.0
          %v4271 = vsel %vm3935, %v1952, 0.0
          %v4272 = vsel %vm3936, %v1953, 0.0
          %v4273 = vsel %vm3936, %v1954, 0.0
          %v4274 = vsel %vm3937, %v1955, 0.0
          %v4275 = vsel %vm3937, %v1956, 0.0
          %v4276 = vsel %vm3938, %v1957, 0.0
          %v4277 = vsel %vm3938, %v1958, 0.0
          %v4278 = vsel %vm3939, %v1959, 0.0
          %v4279 = vsel %vm3939, %v1960, 0.0
          %v4280 = vsel %vm3940, %v1961, 0.0
          %v4281 = vsel %vm3940, %v1962, 0.0
          %v4282 = vsel %vm3941, %v1963, 0.0
          %v4283 = vsel %vm3941, %v1964, 0.0
          %v4284 = vsel %vm3942, %v1965, 0.0
          %v4285 = vsel %vm3942, %v1966, 0.0
          %v4286 = vsel %vm3943, %v1967, 0.0
          %v4287 = vsel %vm3943, %v1968, 0.0
          %v4288 = vsel %vm3944, %v1969, 0.0
          %v4289 = vsel %vm3944, %v1970, 0.0
          %v4290 = vsel %vm3945, %v1971, 0.0
          %v4291 = vsel %vm3945, %v1972, 0.0
          %v4292 = vsel %vm3946, %v1973, 0.0
          %v4293 = vsel %vm3946, %v1974, 0.0
          %v4294 = vsel %vm3947, %v1975, 0.0
          %v4295 = vsel %vm3947, %v1976, 0.0
          %v4296 = vsel %vm3948, %v1977, 0.0
          %v4297 = vsel %vm3948, %v1978, 0.0
          %v4298 = vsel %vm3949, %v1979, 0.0
          %v4299 = vsel %vm3949, %v1980, 0.0
          %v4300 = vsel %vm3950, %v1981, 0.0
          %v4301 = vsel %vm3950, %v1982, 0.0
          %v4302 = vsel %vm3951, %v1983, 0.0
          %v4303 = vsel %vm3951, %v1984, 0.0
          %v4304 = vsel %vm3952, %v1985, 0.0
          %v4305 = vsel %vm3952, %v1986, 0.0
          %v4306 = vsel %vm3953, %v1987, 0.0
          %v4307 = vsel %vm3953, %v1988, 0.0
          %v4308 = vsel %vm3954, %v1989, 0.0
          %v4309 = vsel %vm3954, %v1990, 0.0
          %v4310 = vsel %vm3955, %v1991, 0.0
          %v4311 = vsel %vm3955, %v1992, 0.0
          %v4312 = vsel %vm3956, %v1993, 0.0
          %v4313 = vsel %vm3956, %v1994, 0.0
          %v4314 = vsel %vm3957, %v1995, 0.0
          %v4315 = vsel %vm3957, %v1996, 0.0
          %v4316 = vsel %vm3958, %v1997, 0.0
          %v4317 = vsel %vm3958, %v1998, 0.0
          %v4318 = vsel %vm3959, %v1999, 0.0
          %v4319 = vsel %vm3959, %v2000, 0.0
          %v4320 = vsel %vm3960, %v2001, 0.0
          %v4321 = vsel %vm3960, %v2002, 0.0
          %v4322 = vsel %vm3961, %v2003, 0.0
          %v4323 = vsel %vm3961, %v2004, 0.0
          %v4324 = vsel %vm3962, %v2005, 0.0
          %v4325 = vsel %vm3962, %v2006, 0.0
          %v4326 = vsel %vm3963, %v2007, 0.0
          %v4327 = vsel %vm3963, %v2008, 0.0
          %v4328 = vsel %vm3964, %v2009, 0.0
          %v4329 = vsel %vm3964, %v2010, 0.0
          %v4330 = vsel %vm3965, %v2011, 0.0
          %v4331 = vsel %vm3965, %v2012, 0.0
          %v4332 = vsel %vm3966, %v2013, 0.0
          %v4333 = vsel %vm3966, %v2014, 0.0
          %v4334 = vsel %vm3967, %v2015, 0.0
          %v4335 = vsel %vm3967, %v2016, 0.0
          %v4336 = vsel %vm3968, %v2017, 0.0
          %v4337 = vsel %vm3968, %v2018, 0.0
          %v4338 = vsel %vm3969, %v2019, 0.0
          %v4339 = vsel %vm3969, %v2020, 0.0
          %v4340 = vsel %vm3970, %v2021, 0.0
          %v4341 = vsel %vm3970, %v2022, 0.0
          %v4342 = vsel %vm3971, %v2023, 0.0
          %v4343 = vsel %vm3971, %v2024, 0.0
          %v4344 = vsel %vm3972, %v2025, 0.0
          %v4345 = vsel %vm3972, %v2026, 0.0
          %v4346 = vsel %vm3973, %v2027, 0.0
          %v4347 = vsel %vm3973, %v2028, 0.0
          %v4348 = vsel %vm3974, %v2029, 0.0
          %v4349 = vsel %vm3974, %v2030, 0.0
          %v4350 = vsel %vm3975, %v2031, 0.0
          %v4351 = vsel %vm3975, %v2032, 0.0
          %v4352 = vsel %vm3976, %v2033, 0.0
          %v4353 = vsel %vm3976, %v2034, 0.0
          %v4354 = vsel %vm3977, %v2035, 0.0
          %v4355 = vsel %vm3977, %v2036, 0.0
          %v4356 = vsel %vm3978, %v2037, 0.0
          %v4357 = vsel %vm3978, %v2038, 0.0
          %v4358 = vsel %vm3979, %v2039, 0.0
          %v4359 = vsel %vm3979, %v2040, 0.0
          %v4360 = vsel %vm3980, %v2041, 0.0
          %v4361 = vsel %vm3980, %v2042, 0.0
          %v4362 = vsel %vm3981, %v2043, 0.0
          %v4363 = vsel %vm3981, %v2044, 0.0
          %v4364 = vsel %vm3982, %v2045, 0.0
          %v4365 = vsel %vm3982, %v2046, 0.0
          %v4366 = vsel %vm3983, %v2047, 0.0
          %v4367 = vsel %vm3983, %v2048, 0.0
          %v4368 = vsel %vm3984, %v2049, 0.0
          %v4369 = vsel %vm3984, %v2050, 0.0
          %v4370 = vsel %vm3985, %v2051, 0.0
          %v4371 = vsel %vm3985, %v2052, 0.0
          %v4372 = vsel %vm3986, %v2053, 0.0
          %v4373 = vsel %vm3986, %v2054, 0.0
          %v4374 = vsel %vm3987, %v2055, 0.0
          %v4375 = vsel %vm3987, %v2056, 0.0
          %v4376 = vsel %vm3988, %v2057, 0.0
          %v4377 = vsel %vm3988, %v2058, 0.0
          %v4378 = vsel %vm3989, %v2059, 0.0
          %v4379 = vsel %vm3989, %v2060, 0.0
          %v4380 = vsel %vm3990, %v2061, 0.0
          %v4381 = vsel %vm3990, %v2062, 0.0
          %v4382 = vsel %vm3991, %v2063, 0.0
          %v4383 = vsel %vm3991, %v2064, 0.0
          %v4384 = vsel %vm3992, %v2065, 0.0
          %v4385 = vsel %vm3992, %v2066, 0.0
          %v4386 = vsel %vm3993, %v2067, 0.0
          %v4387 = vsel %vm3993, %v2068, 0.0
          %v4388 = vsel %vm3994, %v2069, 0.0
          %v4389 = vsel %vm3994, %v2070, 0.0
          %v4390 = vsel %vm3995, %v2071, 0.0
          %v4391 = vsel %vm3995, %v2072, 0.0
          %v4392 = vsel %vm3996, %v2073, 0.0
          %v4393 = vsel %vm3996, %v2074, 0.0
          %v4394 = vsel %vm3997, %v2075, 0.0
          %v4395 = vsel %vm3997, %v2076, 0.0
          %v4396 = vsel %vm3998, %v2077, 0.0
          %v4397 = vsel %vm3998, %v2078, 0.0
          %v4398 = vsel %vm3999, %v2079, 0.0
          %v4399 = vsel %vm3999, %v2080, 0.0
          %v4400 = vsel %vm4000, %v2081, 0.0
          %v4401 = vsel %vm4000, %v2082, 0.0
          %v4402 = vsel %vm4001, %v2083, 0.0
          %v4403 = vsel %vm4001, %v2084, 0.0
          %v4404 = vsel %vm4002, %v2085, 0.0
          %v4405 = vsel %vm4002, %v2086, 0.0
          %v4406 = vsel %vm4003, %v2087, 0.0
          %v4407 = vsel %vm4003, %v2088, 0.0
          %v4408 = vsel %vm4004, %v2089, 0.0
          %v4409 = vsel %vm4004, %v2090, 0.0
          %v4410 = vsel %vm4005, %v2091, 0.0
          %v4411 = vsel %vm4005, %v2092, 0.0
          %v4412 = vsel %vm4006, %v2093, 0.0
          %v4413 = vsel %vm4006, %v2094, 0.0
          %v4414 = vsel %vm4007, %v2095, 0.0
          %v4415 = vsel %vm4007, %v2096, 0.0
          %v4416 = vsel %vm4008, %v2097, 0.0
          %v4417 = vsel %vm4008, %v2098, 0.0
          %v4418 = vsel %vm4009, %v2099, 0.0
          %v4419 = vsel %vm4009, %v2100, 0.0
          %v4420 = vsel %vm4010, %v2101, 0.0
          %v4421 = vsel %vm4010, %v2102, 0.0
          %v4422 = vsel %vm4011, %v2103, 0.0
          %v4423 = vsel %vm4011, %v2104, 0.0
          %v4424 = vsel %vm4012, %v2105, 0.0
          %v4425 = vsel %vm4012, %v2106, 0.0
          %v4426 = vsel %vm4013, %v2107, 0.0
          %v4427 = vsel %vm4013, %v2108, 0.0
          %v4428 = vsel %vm4014, %v2109, 0.0
          %v4429 = vsel %vm4014, %v2110, 0.0
          %v4430 = vsel %vm4015, %v2111, 0.0
          %v4431 = vsel %vm4015, %v2112, 0.0
          %v4432 = vsel %vm4016, %v2113, 0.0
          %v4433 = vsel %vm4016, %v2114, 0.0
          %v4434 = vsel %vm4017, %v2115, 0.0
          %v4435 = vsel %vm4017, %v2116, 0.0
          %v4436 = vsel %vm4018, %v2117, 0.0
          %v4437 = vsel %vm4018, %v2118, 0.0
          %v4438 = vsel %vm4019, %v2119, 0.0
          %v4439 = vsel %vm4019, %v2120, 0.0
          %v4440 = vsel %vm4020, %v2121, 0.0
          %v4441 = vsel %vm4020, %v2122, 0.0
          %v4442 = vsel %vm4021, %v2123, 0.0
          %v4443 = vsel %vm4021, %v2124, 0.0
          %v4444 = vsel %vm4022, %v2125, 0.0
          %v4445 = vsel %vm4022, %v2126, 0.0
          %v4446 = vsel %vm4023, %v2127, 0.0
          %v4447 = vsel %vm4023, %v2128, 0.0
          %v4448 = vsel %vm4024, %v2129, 0.0
          %v4449 = vsel %vm4024, %v2130, 0.0
          %v4450 = vsel %vm4025, %v2131, 0.0
          %v4451 = vsel %vm4025, %v2132, 0.0
          %v4452 = vsel %vm4026, %v2133, 0.0
          %v4453 = vsel %vm4026, %v2134, 0.0
          %v4454 = vsel %vm4027, %v2135, 0.0
          %v4455 = vsel %vm4027, %v2136, 0.0
          %v4456 = vsel %vm4028, %v2137, 0.0
          %v4457 = vsel %vm4028, %v2138, 0.0
          %v4458 = vsel %vm4029, %v2139, 0.0
          %v4459 = vsel %vm4029, %v2140, 0.0
          %v4460 = vsel %vm4030, %v2141, 0.0
          %v4461 = vsel %vm4030, %v2142, 0.0
          %v4462 = vsel %vm4031, %v2143, 0.0
          %v4463 = vsel %vm4031, %v2144, 0.0
          %v4464 = vsel %vm4032, %v2145, 0.0
          %v4465 = vsel %vm4032, %v2146, 0.0
          %v4466 = vsel %vm4033, %v2147, 0.0
          %v4467 = vsel %vm4033, %v2148, 0.0
          %v4468 = vsel %vm4034, %v2149, 0.0
          %v4469 = vsel %vm4034, %v2150, 0.0
          %v4470 = vsel %vm4035, %v2151, 0.0
          %v4471 = vsel %vm4035, %v2152, 0.0
          %v4472 = vsel %vm4036, %v2153, 0.0
          %v4473 = vsel %vm4036, %v2154, 0.0
          %v4474 = vsel %vm4037, %v2155, 0.0
          %v4475 = vsel %vm4037, %v2156, 0.0
          %v4476 = vsel %vm4038, %v2157, 0.0
          %v4477 = vsel %vm4038, %v2158, 0.0
          %v4478 = vsel %vm4039, %v2159, 0.0
          %v4479 = vsel %vm4039, %v2160, 0.0
          %v4480 = vsel %vm4040, %v2161, 0.0
          %v4481 = vsel %vm4040, %v2162, 0.0
          %v4482 = vsel %vm4041, %v2163, 0.0
          %v4483 = vsel %vm4041, %v2164, 0.0
          %v4484 = vsel %vm4042, %v2165, 0.0
          %v4485 = vsel %vm4042, %v2166, 0.0
          %v4486 = vsel %vm4043, %v2167, 0.0
          %v4487 = vsel %vm4043, %v2168, 0.0
          %v4488 = vsel %vm4044, %v2169, 0.0
          %v4489 = vsel %vm4044, %v2170, 0.0
          %v4490 = vsel %vm4045, %v2171, 0.0
          %v4491 = vsel %vm4045, %v2172, 0.0
          %v4492 = vsel %vm4046, %v2173, 0.0
          %v4493 = vsel %vm4046, %v2174, 0.0
          %v4494 = vsel %vm4047, %v2175, 0.0
          %v4495 = vsel %vm4047, %v2176, 0.0
          %v4496 = vsel %vm4048, %v2177, 0.0
          %v4497 = vsel %vm4048, %v2178, 0.0
          %v4498 = vsel %vm4049, %v2179, 0.0
          %v4499 = vsel %vm4049, %v2180, 0.0
          %v4500 = vsel %vm4050, %v2181, 0.0
          %v4501 = vsel %vm4050, %v2182, 0.0
          %v4502 = vsel %vm4051, %v2183, 0.0
          %v4503 = vsel %vm4051, %v2184, 0.0
          %v4504 = vsel %vm4052, %v2185, 0.0
          %v4505 = vsel %vm4052, %v2186, 0.0
          %v4506 = vsel %vm4053, %v2187, 0.0
          %v4507 = vsel %vm4053, %v2188, 0.0
          %v4508 = vsel %vm4054, %v2189, 0.0
          %v4509 = vsel %vm4054, %v2190, 0.0
          %v4510 = vsel %vm4055, %v2191, 0.0
          %v4511 = vsel %vm4055, %v2192, 0.0
          %v4512 = vsel %vm4056, %v2193, 0.0
          %v4513 = vsel %vm4056, %v2194, 0.0
          %v4514 = vsel %vm4057, %v2195, 0.0
          %v4515 = vsel %vm4057, %v2196, 0.0
          %v4516 = vsel %vm4058, %v2197, 0.0
          %v4517 = vsel %vm4058, %v2198, 0.0
          %v4518 = vsel %vm4059, %v2199, 0.0
          %v4519 = vsel %vm4059, %v2200, 0.0
          %v4520 = vsel %vm4060, %v2201, 0.0
          %v4521 = vsel %vm4060, %v2202, 0.0
          %v4522 = vsel %vm4061, %v2203, 0.0
          %v4523 = vsel %vm4061, %v2204, 0.0
          %v4524 = vsel %vm4062, %v2205, 0.0
          %v4525 = vsel %vm4062, %v2206, 0.0
          %v4526 = vsel %vm4063, %v2207, 0.0
          %v4527 = vsel %vm4063, %v2208, 0.0
          %v4528 = vsel %vm4064, %v2209, 0.0
          %v4529 = vsel %vm4064, %v2210, 0.0
          %v4530 = vsel %vm4065, %v2211, 0.0
          %v4531 = vsel %vm4065, %v2212, 0.0
          %v4532 = vsel %vm4066, %v2213, 0.0
          %v4533 = vsel %vm4066, %v2214, 0.0
          %v4534 = vsel %vm4067, %v2215, 0.0
          %v4535 = vsel %vm4067, %v2216, 0.0
          %v4536 = vsel %vm4068, %v2217, 0.0
          %v4537 = vsel %vm4068, %v2218, 0.0
          %v4538 = vsel %vm4069, %v2219, 0.0
          %v4539 = vsel %vm4069, %v2220, 0.0
          %v4540 = vsel %vm4070, %v2221, 0.0
          %v4541 = vsel %vm4070, %v2222, 0.0
          %v4542 = vsel %vm4071, %v2223, 0.0
          %v4543 = vsel %vm4071, %v2224, 0.0
          %v4544 = vsel %vm4072, %v2225, 0.0
          %v4545 = vsel %vm4072, %v2226, 0.0
          %v4546 = vsel %vm4073, %v2227, 0.0
          %v4547 = vsel %vm4073, %v2228, 0.0
          %v4548 = vsel %vm4074, %v2229, 0.0
          %v4549 = vsel %vm4074, %v2230, 0.0
          %v4550 = vsel %vm4075, %v2231, 0.0
          %v4551 = vsel %vm4075, %v2232, 0.0
          %v4552 = vsel %vm4076, %v2233, 0.0
          %v4553 = vsel %vm4076, %v2234, 0.0
          %v4554 = vsel %vm4077, %v2235, 0.0
          %v4555 = vsel %vm4077, %v2236, 0.0
          %v4556 = vsel %vm4078, %v2237, 0.0
          %v4557 = vsel %vm4078, %v2238, 0.0
          %v4558 = vsel %vm4079, %v2239, 0.0
          %v4559 = vsel %vm4079, %v2240, 0.0
          %v4560 = vsel %vm4080, %v2241, 0.0
          %v4561 = vsel %vm4080, %v2242, 0.0
          %v4562 = vsel %vm4081, %v2243, 0.0
          %v4563 = vsel %vm4081, %v2244, 0.0
          %v4564 = vsel %vm4082, %v2245, 0.0
          %v4565 = vsel %vm4082, %v2246, 0.0
          %v4566 = vsel %vm4083, %v2247, 0.0
          %v4567 = vsel %vm4083, %v2248, 0.0
          %v4568 = vsel %vm4084, %v2249, 0.0
          %v4569 = vsel %vm4084, %v2250, 0.0
          %v4570 = vsel %vm4085, %v2251, 0.0
          %v4571 = vsel %vm4085, %v2252, 0.0
          %v4572 = vsel %vm4086, %v2253, 0.0
          %v4573 = vsel %vm4086, %v2254, 0.0
          %v4574 = vsel %vm4087, %v2255, 0.0
          %v4575 = vsel %vm4087, %v2256, 0.0
          %v4576 = vsel %vm4088, %v2257, 0.0
          %v4577 = vsel %vm4088, %v2258, 0.0
          %v4578 = vsel %vm4089, %v2259, 0.0
          %v4579 = vsel %vm4089, %v2260, 0.0
          %v4580 = vsel %vm4090, %v2261, 0.0
          %v4581 = vsel %vm4090, %v2262, 0.0
          %v4582 = vsel %vm4091, %v2263, 0.0
          %v4583 = vsel %vm4091, %v2264, 0.0
          %v4584 = vsel %vm4092, %v2265, 0.0
          %v4585 = vsel %vm4092, %v2266, 0.0
          %v4586 = vsel %vm4093, %v2267, 0.0
          %v4587 = vsel %vm4093, %v2268, 0.0
          %v4588 = vsel %vm4094, %v2269, 0.0
          %v4589 = vsel %vm4094, %v2270, 0.0
          %v4590 = vsel %vm4095, %v2271, 0.0
          %v4591 = vsel %vm4095, %v2272, 0.0
          %v4592 = vsel %vm4096, %v2273, 0.0
          %v4593 = vsel %vm4096, %v2274, 0.0
          %v4594 = vsel %vm4097, %v2275, 0.0
          %v4595 = vsel %vm4097, %v2276, 0.0
          %v4596 = vsel %vm4098, %v2277, 0.0
          %v4597 = vsel %vm4098, %v2278, 0.0
          %v4598 = vsel %vm4099, %v2279, 0.0
          %v4599 = vsel %vm4099, %v2280, 0.0
          %v4600 = vsel %vm4100, %v2281, 0.0
          %v4601 = vsel %vm4100, %v2282, 0.0
          %v4602 = vsel %vm4101, %v2283, 0.0
          %v4603 = vsel %vm4101, %v2284, 0.0
          %v4604 = vsel %vm4102, %v2285, 0.0
          %v4605 = vsel %vm4102, %v2286, 0.0
          %v4606 = vsel %vm4103, %v2287, 0.0
          %v4607 = vsel %vm4103, %v2288, 0.0
          %v4608 = vsel %vm4104, %v2289, 0.0
          %v4609 = vsel %vm4104, %v2290, 0.0
          %v4610 = vsel %vm4105, %v2291, 0.0
          %v4611 = vsel %vm4105, %v2292, 0.0
          %v4612 = vsel %vm4106, %v2293, 0.0
          %v4613 = vsel %vm4106, %v2294, 0.0
          %v4614 = vsel %vm4107, %v2295, 0.0
          %v4615 = vsel %vm4107, %v2296, 0.0
          %v4616 = vsel %vm4108, %v2297, 0.0
          %v4617 = vsel %vm4108, %v2298, 0.0
          %v4618 = vsel %vm4109, %v2299, 0.0
          %v4619 = vsel %vm4109, %v2300, 0.0
          %v4620 = vsel %vm4110, %v2301, 0.0
          %v4621 = vsel %vm4110, %v2302, 0.0
          %v4622 = vsel %vm4111, %v2303, 0.0
          %v4623 = vsel %vm4111, %v2304, 0.0
          %v4624 = vld [vmem:[#allocation2] sm:$0xff]
          %v4625 = vld [vmem:[#allocation2 + $0x8] sm:$0xff]
          %v4626 = vadd.f32 %v4112, %v4114
          %v4627 = vadd.f32 %v4626, %v4116
          %v4628 = vadd.f32 %v4627, %v4118
          %v4629 = vadd.f32 %v4628, %v4120
          %v4630 = vadd.f32 %v4629, %v4122
          %v4631 = vadd.f32 %v4630, %v4124
          %v4632 = vadd.f32 %v4631, %v4126
          %v4633 = vadd.f32 %v4632, %v4128
          %v4634 = vadd.f32 %v4633, %v4130
          %v4635 = vadd.f32 %v4634, %v4132
          %v4636 = vadd.f32 %v4635, %v4134
          %v4637 = vadd.f32 %v4636, %v4136
          %v4638 = vadd.f32 %v4637, %v4138
          %v4639 = vadd.f32 %v4638, %v4140
          %v4640 = vadd.f32 %v4639, %v4142
          %v4641 = vadd.f32 %v4640, %v4144
          %v4642 = vadd.f32 %v4641, %v4146
          %v4643 = vadd.f32 %v4642, %v4148
          %v4644 = vadd.f32 %v4643, %v4150
          %v4645 = vadd.f32 %v4644, %v4152
          %v4646 = vadd.f32 %v4645, %v4154
          %v4647 = vadd.f32 %v4646, %v4156
          %v4648 = vadd.f32 %v4647, %v4158
          %v4649 = vadd.f32 %v4648, %v4160
          %v4650 = vadd.f32 %v4649, %v4162
          %v4651 = vadd.f32 %v4650, %v4164
          %v4652 = vadd.f32 %v4651, %v4166
          %v4653 = vadd.f32 %v4652, %v4168
          %v4654 = vadd.f32 %v4653, %v4170
          %v4655 = vadd.f32 %v4654, %v4172
          %v4656 = vadd.f32 %v4655, %v4174
          %v4657 = vadd.f32 %v4656, %v4176
          %v4658 = vadd.f32 %v4657, %v4178
          %v4659 = vadd.f32 %v4658, %v4180
          %v4660 = vadd.f32 %v4659, %v4182
          %v4661 = vadd.f32 %v4660, %v4184
          %v4662 = vadd.f32 %v4661, %v4186
          %v4663 = vadd.f32 %v4662, %v4188
          %v4664 = vadd.f32 %v4663, %v4190
          %v4665 = vadd.f32 %v4664, %v4192
          %v4666 = vadd.f32 %v4665, %v4194
          %v4667 = vadd.f32 %v4666, %v4196
          %v4668 = vadd.f32 %v4667, %v4198
          %v4669 = vadd.f32 %v4668, %v4200
          %v4670 = vadd.f32 %v4669, %v4202
          %v4671 = vadd.f32 %v4670, %v4204
          %v4672 = vadd.f32 %v4671, %v4206
          %v4673 = vadd.f32 %v4672, %v4208
          %v4674 = vadd.f32 %v4673, %v4210
          %v4675 = vadd.f32 %v4674, %v4212
          %v4676 = vadd.f32 %v4675, %v4214
          %v4677 = vadd.f32 %v4676, %v4216
          %v4678 = vadd.f32 %v4677, %v4218
          %v4679 = vadd.f32 %v4678, %v4220
          %v4680 = vadd.f32 %v4679, %v4222
          %v4681 = vadd.f32 %v4680, %v4224
          %v4682 = vadd.f32 %v4681, %v4226
          %v4683 = vadd.f32 %v4682, %v4228
          %v4684 = vadd.f32 %v4683, %v4230
          %v4685 = vadd.f32 %v4684, %v4232
          %v4686 = vadd.f32 %v4685, %v4234
          %v4687 = vadd.f32 %v4686, %v4236
          %v4688 = vadd.f32 %v4687, %v4238
          %v4689 = vadd.f32 %v4688, %v4240
          %v4690 = vadd.f32 %v4689, %v4242
          %v4691 = vadd.f32 %v4690, %v4244
          %v4692 = vadd.f32 %v4691, %v4246
          %v4693 = vadd.f32 %v4692, %v4248
          %v4694 = vadd.f32 %v4693, %v4250
          %v4695 = vadd.f32 %v4694, %v4252
          %v4696 = vadd.f32 %v4695, %v4254
          %v4697 = vadd.f32 %v4696, %v4256
          %v4698 = vadd.f32 %v4697, %v4258
          %v4699 = vadd.f32 %v4698, %v4260
          %v4700 = vadd.f32 %v4699, %v4262
          %v4701 = vadd.f32 %v4700, %v4264
          %v4702 = vadd.f32 %v4701, %v4266
          %v4703 = vadd.f32 %v4702, %v4268
          %v4704 = vadd.f32 %v4703, %v4270
          %v4705 = vadd.f32 %v4704, %v4272
          %v4706 = vadd.f32 %v4705, %v4274
          %v4707 = vadd.f32 %v4706, %v4276
          %v4708 = vadd.f32 %v4707, %v4278
          %v4709 = vadd.f32 %v4708, %v4280
          %v4710 = vadd.f32 %v4709, %v4282
          %v4711 = vadd.f32 %v4710, %v4284
          %v4712 = vadd.f32 %v4711, %v4286
          %v4713 = vadd.f32 %v4712, %v4288
          %v4714 = vadd.f32 %v4713, %v4290
          %v4715 = vadd.f32 %v4714, %v4292
          %v4716 = vadd.f32 %v4715, %v4294
          %v4717 = vadd.f32 %v4716, %v4296
          %v4718 = vadd.f32 %v4717, %v4298
          %v4719 = vadd.f32 %v4718, %v4300
          %v4720 = vadd.f32 %v4719, %v4302
          %v4721 = vadd.f32 %v4720, %v4304
          %v4722 = vadd.f32 %v4721, %v4306
          %v4723 = vadd.f32 %v4722, %v4308
          %v4724 = vadd.f32 %v4723, %v4310
          %v4725 = vadd.f32 %v4724, %v4312
          %v4726 = vadd.f32 %v4725, %v4314
          %v4727 = vadd.f32 %v4726, %v4316
          %v4728 = vadd.f32 %v4727, %v4318
          %v4729 = vadd.f32 %v4728, %v4320
          %v4730 = vadd.f32 %v4729, %v4322
          %v4731 = vadd.f32 %v4730, %v4324
          %v4732 = vadd.f32 %v4731, %v4326
          %v4733 = vadd.f32 %v4732, %v4328
          %v4734 = vadd.f32 %v4733, %v4330
          %v4735 = vadd.f32 %v4734, %v4332
          %v4736 = vadd.f32 %v4735, %v4334
          %v4737 = vadd.f32 %v4736, %v4336
          %v4738 = vadd.f32 %v4737, %v4338
          %v4739 = vadd.f32 %v4738, %v4340
          %v4740 = vadd.f32 %v4739, %v4342
          %v4741 = vadd.f32 %v4740, %v4344
          %v4742 = vadd.f32 %v4741, %v4346
          %v4743 = vadd.f32 %v4742, %v4348
          %v4744 = vadd.f32 %v4743, %v4350
          %v4745 = vadd.f32 %v4744, %v4352
          %v4746 = vadd.f32 %v4745, %v4354
          %v4747 = vadd.f32 %v4746, %v4356
          %v4748 = vadd.f32 %v4747, %v4358
          %v4749 = vadd.f32 %v4748, %v4360
          %v4750 = vadd.f32 %v4749, %v4362
          %v4751 = vadd.f32 %v4750, %v4364
          %v4752 = vadd.f32 %v4751, %v4366
          %v4753 = vadd.f32 %v4752, %v4368
          %v4754 = vadd.f32 %v4753, %v4370
          %v4755 = vadd.f32 %v4754, %v4372
          %v4756 = vadd.f32 %v4755, %v4374
          %v4757 = vadd.f32 %v4756, %v4376
          %v4758 = vadd.f32 %v4757, %v4378
          %v4759 = vadd.f32 %v4758, %v4380
          %v4760 = vadd.f32 %v4759, %v4382
          %v4761 = vadd.f32 %v4760, %v4384
          %v4762 = vadd.f32 %v4761, %v4386
          %v4763 = vadd.f32 %v4762, %v4388
          %v4764 = vadd.f32 %v4763, %v4390
          %v4765 = vadd.f32 %v4764, %v4392
          %v4766 = vadd.f32 %v4765, %v4394
          %v4767 = vadd.f32 %v4766, %v4396
          %v4768 = vadd.f32 %v4767, %v4398
          %v4769 = vadd.f32 %v4768, %v4400
          %v4770 = vadd.f32 %v4769, %v4402
          %v4771 = vadd.f32 %v4770, %v4404
          %v4772 = vadd.f32 %v4771, %v4406
          %v4773 = vadd.f32 %v4772, %v4408
          %v4774 = vadd.f32 %v4773, %v4410
          %v4775 = vadd.f32 %v4774, %v4412
          %v4776 = vadd.f32 %v4775, %v4414
          %v4777 = vadd.f32 %v4776, %v4416
          %v4778 = vadd.f32 %v4777, %v4418
          %v4779 = vadd.f32 %v4778, %v4420
          %v4780 = vadd.f32 %v4779, %v4422
          %v4781 = vadd.f32 %v4780, %v4424
          %v4782 = vadd.f32 %v4781, %v4426
          %v4783 = vadd.f32 %v4782, %v4428
          %v4784 = vadd.f32 %v4783, %v4430
          %v4785 = vadd.f32 %v4784, %v4432
          %v4786 = vadd.f32 %v4785, %v4434
          %v4787 = vadd.f32 %v4786, %v4436
          %v4788 = vadd.f32 %v4787, %v4438
          %v4789 = vadd.f32 %v4788, %v4440
          %v4790 = vadd.f32 %v4789, %v4442
          %v4791 = vadd.f32 %v4790, %v4444
          %v4792 = vadd.f32 %v4791, %v4446
          %v4793 = vadd.f32 %v4792, %v4448
          %v4794 = vadd.f32 %v4793, %v4450
          %v4795 = vadd.f32 %v4794, %v4452
          %v4796 = vadd.f32 %v4795, %v4454
          %v4797 = vadd.f32 %v4796, %v4456
          %v4798 = vadd.f32 %v4797, %v4458
          %v4799 = vadd.f32 %v4798, %v4460
          %v4800 = vadd.f32 %v4799, %v4462
          %v4801 = vadd.f32 %v4800, %v4464
          %v4802 = vadd.f32 %v4801, %v4466
          %v4803 = vadd.f32 %v4802, %v4468
          %v4804 = vadd.f32 %v4803, %v4470
          %v4805 = vadd.f32 %v4804, %v4472
          %v4806 = vadd.f32 %v4805, %v4474
          %v4807 = vadd.f32 %v4806, %v4476
          %v4808 = vadd.f32 %v4807, %v4478
          %v4809 = vadd.f32 %v4808, %v4480
          %v4810 = vadd.f32 %v4809, %v4482
          %v4811 = vadd.f32 %v4810, %v4484
          %v4812 = vadd.f32 %v4811, %v4486
          %v4813 = vadd.f32 %v4812, %v4488
          %v4814 = vadd.f32 %v4813, %v4490
          %v4815 = vadd.f32 %v4814, %v4492
          %v4816 = vadd.f32 %v4815, %v4494
          %v4817 = vadd.f32 %v4816, %v4496
          %v4818 = vadd.f32 %v4817, %v4498
          %v4819 = vadd.f32 %v4818, %v4500
          %v4820 = vadd.f32 %v4819, %v4502
          %v4821 = vadd.f32 %v4820, %v4504
          %v4822 = vadd.f32 %v4821, %v4506
          %v4823 = vadd.f32 %v4822, %v4508
          %v4824 = vadd.f32 %v4823, %v4510
          %v4825 = vadd.f32 %v4824, %v4512
          %v4826 = vadd.f32 %v4825, %v4514
          %v4827 = vadd.f32 %v4826, %v4516
          %v4828 = vadd.f32 %v4827, %v4518
          %v4829 = vadd.f32 %v4828, %v4520
          %v4830 = vadd.f32 %v4829, %v4522
          %v4831 = vadd.f32 %v4830, %v4524
          %v4832 = vadd.f32 %v4831, %v4526
          %v4833 = vadd.f32 %v4832, %v4528
          %v4834 = vadd.f32 %v4833, %v4530
          %v4835 = vadd.f32 %v4834, %v4532
          %v4836 = vadd.f32 %v4835, %v4534
          %v4837 = vadd.f32 %v4836, %v4536
          %v4838 = vadd.f32 %v4837, %v4538
          %v4839 = vadd.f32 %v4838, %v4540
          %v4840 = vadd.f32 %v4839, %v4542
          %v4841 = vadd.f32 %v4840, %v4544
          %v4842 = vadd.f32 %v4841, %v4546
          %v4843 = vadd.f32 %v4842, %v4548
          %v4844 = vadd.f32 %v4843, %v4550
          %v4845 = vadd.f32 %v4844, %v4552
          %v4846 = vadd.f32 %v4845, %v4554
          %v4847 = vadd.f32 %v4846, %v4556
          %v4848 = vadd.f32 %v4847, %v4558
          %v4849 = vadd.f32 %v4848, %v4560
          %v4850 = vadd.f32 %v4849, %v4562
          %v4851 = vadd.f32 %v4850, %v4564
          %v4852 = vadd.f32 %v4851, %v4566
          %v4853 = vadd.f32 %v4852, %v4568
          %v4854 = vadd.f32 %v4853, %v4570
          %v4855 = vadd.f32 %v4854, %v4572
          %v4856 = vadd.f32 %v4855, %v4574
          %v4857 = vadd.f32 %v4856, %v4576
          %v4858 = vadd.f32 %v4857, %v4578
          %v4859 = vadd.f32 %v4858, %v4580
          %v4860 = vadd.f32 %v4859, %v4582
          %v4861 = vadd.f32 %v4860, %v4584
          %v4862 = vadd.f32 %v4861, %v4586
          %v4863 = vadd.f32 %v4862, %v4588
          %v4864 = vadd.f32 %v4863, %v4590
          %v4865 = vadd.f32 %v4864, %v4592
          %v4866 = vadd.f32 %v4865, %v4594
          %v4867 = vadd.f32 %v4866, %v4596
          %v4868 = vadd.f32 %v4867, %v4598
          %v4869 = vadd.f32 %v4868, %v4600
          %v4870 = vadd.f32 %v4869, %v4602
          %v4871 = vadd.f32 %v4870, %v4604
          %v4872 = vadd.f32 %v4871, %v4606
          %v4873 = vadd.f32 %v4872, %v4608
          %v4874 = vadd.f32 %v4873, %v4610
          %v4875 = vadd.f32 %v4874, %v4612
          %v4876 = vadd.f32 %v4875, %v4614
          %v4877 = vadd.f32 %v4876, %v4616
          %v4878 = vadd.f32 %v4877, %v4618
          %v4879 = vadd.f32 %v4878, %v4620
          %v4880 = vadd.f32 %v4879, %v4622
          %v4881 = vadd.f32 %v4113, %v4115
          %v4882 = vadd.f32 %v4881, %v4117
          %v4883 = vadd.f32 %v4882, %v4119
          %v4884 = vadd.f32 %v4883, %v4121
          %v4885 = vadd.f32 %v4884, %v4123
          %v4886 = vadd.f32 %v4885, %v4125
          %v4887 = vadd.f32 %v4886, %v4127
          %v4888 = vadd.f32 %v4887, %v4129
          %v4889 = vadd.f32 %v4888, %v4131
          %v4890 = vadd.f32 %v4889, %v4133
          %v4891 = vadd.f32 %v4890, %v4135
          %v4892 = vadd.f32 %v4891, %v4137
          %v4893 = vadd.f32 %v4892, %v4139
          %v4894 = vadd.f32 %v4893, %v4141
          %v4895 = vadd.f32 %v4894, %v4143
          %v4896 = vadd.f32 %v4895, %v4145
          %v4897 = vadd.f32 %v4896, %v4147
          %v4898 = vadd.f32 %v4897, %v4149
          %v4899 = vadd.f32 %v4898, %v4151
          %v4900 = vadd.f32 %v4899, %v4153
          %v4901 = vadd.f32 %v4900, %v4155
          %v4902 = vadd.f32 %v4901, %v4157
          %v4903 = vadd.f32 %v4902, %v4159
          %v4904 = vadd.f32 %v4903, %v4161
          %v4905 = vadd.f32 %v4904, %v4163
          %v4906 = vadd.f32 %v4905, %v4165
          %v4907 = vadd.f32 %v4906, %v4167
          %v4908 = vadd.f32 %v4907, %v4169
          %v4909 = vadd.f32 %v4908, %v4171
          %v4910 = vadd.f32 %v4909, %v4173
          %v4911 = vadd.f32 %v4910, %v4175
          %v4912 = vadd.f32 %v4911, %v4177
          %v4913 = vadd.f32 %v4912, %v4179
          %v4914 = vadd.f32 %v4913, %v4181
          %v4915 = vadd.f32 %v4914, %v4183
          %v4916 = vadd.f32 %v4915, %v4185
          %v4917 = vadd.f32 %v4916, %v4187
          %v4918 = vadd.f32 %v4917, %v4189
          %v4919 = vadd.f32 %v4918, %v4191
          %v4920 = vadd.f32 %v4919, %v4193
          %v4921 = vadd.f32 %v4920, %v4195
          %v4922 = vadd.f32 %v4921, %v4197
          %v4923 = vadd.f32 %v4922, %v4199
          %v4924 = vadd.f32 %v4923, %v4201
          %v4925 = vadd.f32 %v4924, %v4203
          %v4926 = vadd.f32 %v4925, %v4205
          %v4927 = vadd.f32 %v4926, %v4207
          %v4928 = vadd.f32 %v4927, %v4209
          %v4929 = vadd.f32 %v4928, %v4211
          %v4930 = vadd.f32 %v4929, %v4213
          %v4931 = vadd.f32 %v4930, %v4215
          %v4932 = vadd.f32 %v4931, %v4217
          %v4933 = vadd.f32 %v4932, %v4219
          %v4934 = vadd.f32 %v4933, %v4221
          %v4935 = vadd.f32 %v4934, %v4223
          %v4936 = vadd.f32 %v4935, %v4225
          %v4937 = vadd.f32 %v4936, %v4227
          %v4938 = vadd.f32 %v4937, %v4229
          %v4939 = vadd.f32 %v4938, %v4231
          %v4940 = vadd.f32 %v4939, %v4233
          %v4941 = vadd.f32 %v4940, %v4235
          %v4942 = vadd.f32 %v4941, %v4237
          %v4943 = vadd.f32 %v4942, %v4239
          %v4944 = vadd.f32 %v4943, %v4241
          %v4945 = vadd.f32 %v4944, %v4243
          %v4946 = vadd.f32 %v4945, %v4245
          %v4947 = vadd.f32 %v4946, %v4247
          %v4948 = vadd.f32 %v4947, %v4249
          %v4949 = vadd.f32 %v4948, %v4251
          %v4950 = vadd.f32 %v4949, %v4253
          %v4951 = vadd.f32 %v4950, %v4255
          %v4952 = vadd.f32 %v4951, %v4257
          %v4953 = vadd.f32 %v4952, %v4259
          %v4954 = vadd.f32 %v4953, %v4261
          %v4955 = vadd.f32 %v4954, %v4263
          %v4956 = vadd.f32 %v4955, %v4265
          %v4957 = vadd.f32 %v4956, %v4267
          %v4958 = vadd.f32 %v4957, %v4269
          %v4959 = vadd.f32 %v4958, %v4271
          %v4960 = vadd.f32 %v4959, %v4273
          %v4961 = vadd.f32 %v4960, %v4275
          %v4962 = vadd.f32 %v4961, %v4277
          %v4963 = vadd.f32 %v4962, %v4279
          %v4964 = vadd.f32 %v4963, %v4281
          %v4965 = vadd.f32 %v4964, %v4283
          %v4966 = vadd.f32 %v4965, %v4285
          %v4967 = vadd.f32 %v4966, %v4287
          %v4968 = vadd.f32 %v4967, %v4289
          %v4969 = vadd.f32 %v4968, %v4291
          %v4970 = vadd.f32 %v4969, %v4293
          %v4971 = vadd.f32 %v4970, %v4295
          %v4972 = vadd.f32 %v4971, %v4297
          %v4973 = vadd.f32 %v4972, %v4299
          %v4974 = vadd.f32 %v4973, %v4301
          %v4975 = vadd.f32 %v4974, %v4303
          %v4976 = vadd.f32 %v4975, %v4305
          %v4977 = vadd.f32 %v4976, %v4307
          %v4978 = vadd.f32 %v4977, %v4309
          %v4979 = vadd.f32 %v4978, %v4311
          %v4980 = vadd.f32 %v4979, %v4313
          %v4981 = vadd.f32 %v4980, %v4315
          %v4982 = vadd.f32 %v4981, %v4317
          %v4983 = vadd.f32 %v4982, %v4319
          %v4984 = vadd.f32 %v4983, %v4321
          %v4985 = vadd.f32 %v4984, %v4323
          %v4986 = vadd.f32 %v4985, %v4325
          %v4987 = vadd.f32 %v4986, %v4327
          %v4988 = vadd.f32 %v4987, %v4329
          %v4989 = vadd.f32 %v4988, %v4331
          %v4990 = vadd.f32 %v4989, %v4333
          %v4991 = vadd.f32 %v4990, %v4335
          %v4992 = vadd.f32 %v4991, %v4337
          %v4993 = vadd.f32 %v4992, %v4339
          %v4994 = vadd.f32 %v4993, %v4341
          %v4995 = vadd.f32 %v4994, %v4343
          %v4996 = vadd.f32 %v4995, %v4345
          %v4997 = vadd.f32 %v4996, %v4347
          %v4998 = vadd.f32 %v4997, %v4349
          %v4999 = vadd.f32 %v4998, %v4351
          %v5000 = vadd.f32 %v4999, %v4353
          %v5001 = vadd.f32 %v5000, %v4355
          %v5002 = vadd.f32 %v5001, %v4357
          %v5003 = vadd.f32 %v5002, %v4359
          %v5004 = vadd.f32 %v5003, %v4361
          %v5005 = vadd.f32 %v5004, %v4363
          %v5006 = vadd.f32 %v5005, %v4365
          %v5007 = vadd.f32 %v5006, %v4367
          %v5008 = vadd.f32 %v5007, %v4369
          %v5009 = vadd.f32 %v5008, %v4371
          %v5010 = vadd.f32 %v5009, %v4373
          %v5011 = vadd.f32 %v5010, %v4375
          %v5012 = vadd.f32 %v5011, %v4377
          %v5013 = vadd.f32 %v5012, %v4379
          %v5014 = vadd.f32 %v5013, %v4381
          %v5015 = vadd.f32 %v5014, %v4383
          %v5016 = vadd.f32 %v5015, %v4385
          %v5017 = vadd.f32 %v5016, %v4387
          %v5018 = vadd.f32 %v5017, %v4389
          %v5019 = vadd.f32 %v5018, %v4391
          %v5020 = vadd.f32 %v5019, %v4393
          %v5021 = vadd.f32 %v5020, %v4395
          %v5022 = vadd.f32 %v5021, %v4397
          %v5023 = vadd.f32 %v5022, %v4399
          %v5024 = vadd.f32 %v5023, %v4401
          %v5025 = vadd.f32 %v5024, %v4403
          %v5026 = vadd.f32 %v5025, %v4405
          %v5027 = vadd.f32 %v5026, %v4407
          %v5028 = vadd.f32 %v5027, %v4409
          %v5029 = vadd.f32 %v5028, %v4411
          %v5030 = vadd.f32 %v5029, %v4413
          %v5031 = vadd.f32 %v5030, %v4415
          %v5032 = vadd.f32 %v5031, %v4417
          %v5033 = vadd.f32 %v5032, %v4419
          %v5034 = vadd.f32 %v5033, %v4421
          %v5035 = vadd.f32 %v5034, %v4423
          %v5036 = vadd.f32 %v5035, %v4425
          %v5037 = vadd.f32 %v5036, %v4427
          %v5038 = vadd.f32 %v5037, %v4429
          %v5039 = vadd.f32 %v5038, %v4431
          %v5040 = vadd.f32 %v5039, %v4433
          %v5041 = vadd.f32 %v5040, %v4435
          %v5042 = vadd.f32 %v5041, %v4437
          %v5043 = vadd.f32 %v5042, %v4439
          %v5044 = vadd.f32 %v5043, %v4441
          %v5045 = vadd.f32 %v5044, %v4443
          %v5046 = vadd.f32 %v5045, %v4445
          %v5047 = vadd.f32 %v5046, %v4447
          %v5048 = vadd.f32 %v5047, %v4449
          %v5049 = vadd.f32 %v5048, %v4451
          %v5050 = vadd.f32 %v5049, %v4453
          %v5051 = vadd.f32 %v5050, %v4455
          %v5052 = vadd.f32 %v5051, %v4457
          %v5053 = vadd.f32 %v5052, %v4459
          %v5054 = vadd.f32 %v5053, %v4461
          %v5055 = vadd.f32 %v5054, %v4463
          %v5056 = vadd.f32 %v5055, %v4465
          %v5057 = vadd.f32 %v5056, %v4467
          %v5058 = vadd.f32 %v5057, %v4469
          %v5059 = vadd.f32 %v5058, %v4471
          %v5060 = vadd.f32 %v5059, %v4473
          %v5061 = vadd.f32 %v5060, %v4475
          %v5062 = vadd.f32 %v5061, %v4477
          %v5063 = vadd.f32 %v5062, %v4479
          %v5064 = vadd.f32 %v5063, %v4481
          %v5065 = vadd.f32 %v5064, %v4483
          %v5066 = vadd.f32 %v5065, %v4485
          %v5067 = vadd.f32 %v5066, %v4487
          %v5068 = vadd.f32 %v5067, %v4489
          %v5069 = vadd.f32 %v5068, %v4491
          %v5070 = vadd.f32 %v5069, %v4493
          %v5071 = vadd.f32 %v5070, %v4495
          %v5072 = vadd.f32 %v5071, %v4497
          %v5073 = vadd.f32 %v5072, %v4499
          %v5074 = vadd.f32 %v5073, %v4501
          %v5075 = vadd.f32 %v5074, %v4503
          %v5076 = vadd.f32 %v5075, %v4505
          %v5077 = vadd.f32 %v5076, %v4507
          %v5078 = vadd.f32 %v5077, %v4509
          %v5079 = vadd.f32 %v5078, %v4511
          %v5080 = vadd.f32 %v5079, %v4513
          %v5081 = vadd.f32 %v5080, %v4515
          %v5082 = vadd.f32 %v5081, %v4517
          %v5083 = vadd.f32 %v5082, %v4519
          %v5084 = vadd.f32 %v5083, %v4521
          %v5085 = vadd.f32 %v5084, %v4523
          %v5086 = vadd.f32 %v5085, %v4525
          %v5087 = vadd.f32 %v5086, %v4527
          %v5088 = vadd.f32 %v5087, %v4529
          %v5089 = vadd.f32 %v5088, %v4531
          %v5090 = vadd.f32 %v5089, %v4533
          %v5091 = vadd.f32 %v5090, %v4535
          %v5092 = vadd.f32 %v5091, %v4537
          %v5093 = vadd.f32 %v5092, %v4539
          %v5094 = vadd.f32 %v5093, %v4541
          %v5095 = vadd.f32 %v5094, %v4543
          %v5096 = vadd.f32 %v5095, %v4545
          %v5097 = vadd.f32 %v5096, %v4547
          %v5098 = vadd.f32 %v5097, %v4549
          %v5099 = vadd.f32 %v5098, %v4551
          %v5100 = vadd.f32 %v5099, %v4553
          %v5101 = vadd.f32 %v5100, %v4555
          %v5102 = vadd.f32 %v5101, %v4557
          %v5103 = vadd.f32 %v5102, %v4559
          %v5104 = vadd.f32 %v5103, %v4561
          %v5105 = vadd.f32 %v5104, %v4563
          %v5106 = vadd.f32 %v5105, %v4565
          %v5107 = vadd.f32 %v5106, %v4567
          %v5108 = vadd.f32 %v5107, %v4569
          %v5109 = vadd.f32 %v5108, %v4571
          %v5110 = vadd.f32 %v5109, %v4573
          %v5111 = vadd.f32 %v5110, %v4575
          %v5112 = vadd.f32 %v5111, %v4577
          %v5113 = vadd.f32 %v5112, %v4579
          %v5114 = vadd.f32 %v5113, %v4581
          %v5115 = vadd.f32 %v5114, %v4583
          %v5116 = vadd.f32 %v5115, %v4585
          %v5117 = vadd.f32 %v5116, %v4587
          %v5118 = vadd.f32 %v5117, %v4589
          %v5119 = vadd.f32 %v5118, %v4591
          %v5120 = vadd.f32 %v5119, %v4593
          %v5121 = vadd.f32 %v5120, %v4595
          %v5122 = vadd.f32 %v5121, %v4597
          %v5123 = vadd.f32 %v5122, %v4599
          %v5124 = vadd.f32 %v5123, %v4601
          %v5125 = vadd.f32 %v5124, %v4603
          %v5126 = vadd.f32 %v5125, %v4605
          %v5127 = vadd.f32 %v5126, %v4607
          %v5128 = vadd.f32 %v5127, %v4609
          %v5129 = vadd.f32 %v5128, %v4611
          %v5130 = vadd.f32 %v5129, %v4613
          %v5131 = vadd.f32 %v5130, %v4615
          %v5132 = vadd.f32 %v5131, %v4617
          %v5133 = vadd.f32 %v5132, %v4619
          %v5134 = vadd.f32 %v5133, %v4621
          %v5135 = vadd.f32 %v5134, %v4623
          %v5136 = vadd.f32 %v4624, %v4880
          %v5137 = vadd.f32 %v4625, %v5135
          %5138 = vst [vmem:[#allocation2] sm:$0xff] %v5136
          %5139 = vst [vmem:[#allocation2 + $0x8] sm:$0xff] %v5137
        $region48: #{tpu_custom_call.1} parent=27 // pred_fallthru
          _
        %p5140 = scmp.eq.s32.totalorder %s25, 2
        // Predicated region
        $region49: #{tpu_custom_call.1} parent=27 // pred_check
          %p5141 = pneg %p5140
        $region50: #{tpu_custom_call.1} parent=27 // pred_check_branch
          %5143 = sbr.rel (%p5141) target = $region52
        $region51: #{tpu_custom_call.1} parent=27 // pred_region
          %v5144 = vld [vmem:[#allocation2] sm:$0xff]
          %v5145 = vld [vmem:[#allocation2 + $0x8] sm:$0xff]
          %v5146 = vadd.f32 %v5144, %v5145
          %5147 = vadd.xlane.f32.xlu0 %v5146
          %v5148 = vpop.xlane.xlu0 %5147
          %v5149 = vrot.slane %v5148, 4
          %v5150 = vadd.f32 %v5148, %v5149
          %v5151 = vrot.slane %v5150, 2
          %v5152 = vadd.f32 %v5150, %v5151
          %v5153 = vrot.slane %v5152, 1
          %v5154 = vadd.f32 %v5152, %v5153
          %s5155 = vtos %v5154
          %v5156 = vstv %s5155
          %5157 = vst [vmem:[#allocation8] sm:$0xff] %v5156
        $region52: #{tpu_custom_call.1} parent=27 // pred_fallthru
          _
        // Predicated region
        $region53: #{tpu_custom_call.1} parent=27 // pred_check
          %p5158 = pneg %p110
        $region54: #{tpu_custom_call.1} parent=27 // pred_check_branch
          %5160 = sbr.rel (%p5158) target = $region56
        $region55: #{tpu_custom_call.1} parent=27 // pred_region
          %s5162 = ssub.s32 128, 128
          %5163 = vsyncadd [#allocation5], %s5162
          %s5164 = smul.addr %s24, 128
          %s5165 = scalar_lea.hbm %s2, %s5164
          %s5167 = sshll.u32 [#allocation8], 4
          %s5168 = int_to_ptr.vmem [resolvable:$true] %s5167
          %5170 = dma.vmem_to_hbm [thread:$0]  %s5168, 128, %s5165, [#allocation5]
        $region56: #{tpu_custom_call.1} parent=27 // pred_fallthru
          _
        // Predicated region
        $region57: #{tpu_custom_call.1} parent=27 // pred_check
          %p5171 = pneg %p110
        $region58: #{tpu_custom_call.1} parent=27 // pred_check_branch
          %5173 = sbr.rel (%p5171) target = $region60
        $region59: #{tpu_custom_call.1} parent=27 // pred_region
          %5174 = dma.done [#allocation5], 128
        $region60: #{tpu_custom_call.1} parent=27 // pred_fallthru
          _
      $region28: #{tpu_custom_call.1} parent=5 // pred_fallthru
        _
      %p5175 = scmp.le.s32.totalorder 2, %s15
      // Predicated region
      $region61: #{tpu_custom_call.1} parent=5 // pred_check
        %p5176 = pneg %p5175
      $region62: #{tpu_custom_call.1} parent=5 // pred_check_branch
        %5178 = sbr.rel (%p5176) target = $region64
      $region63: #{tpu_custom_call.1} parent=5 // pred_region
        %s5179 = ssub.s32 %s15, 2
      $region64: #{tpu_custom_call.1} parent=5 // pred_fallthru
        _
    $region6: #{tpu_custom_call.1} parent=1 // loop_footer
      %s19 = sadd.s32 1, %s15
    $region7: #{tpu_custom_call.1} parent=1 // loop_footer_branch
      %14 = sbr.rel target = $region3
    $region8: #{tpu_custom_call.1} parent=1 // loop_exit
      _
    %5180 = vsyncpa [#allocation4], 1
    %s5181 = scalar_lea.sflag [#allocation4], 1
    %5182 = vsyncpa %s5181, 1
    %5183 = vsyncpa [#allocation7], 1
    %s5184 = scalar_lea.sflag [#allocation7], 1
    %5185 = vsyncpa %s5184, 1
    %5186 = vsyncpa [#allocation5], 1
    %s5187 = scalar_lea.sflag [#allocation5], 1
    %5188 = vsyncpa %s5187, 1

</llo_original>
